<compile_context>
chip_gen: v5e
topology: v5e:2x2
jax: 0.10.0
libtpu: 0.0.40
codegen_flags: <defaults>
</compile_context>

<pallas_src>
import functools

import jax
import jax.numpy as jnp
from jax import lax
from jax.experimental import pallas as pl
from jax.experimental.pallas import tpu as pltpu


# ---------------------------------------------------------------------------
# In-kernel building blocks (operate on VMEM refs / values)
# ---------------------------------------------------------------------------

def _lstm_layer(x_val, h0, c0, wih_ref, whh_ref, b_ref, out_ref):
    """One LSTM layer over the whole sequence (time-major flattened layout).

    x_val:   (T*B, D_in) value, row r = t*B + b.
    h0, c0:  (B, H) values.
    wih_ref: (D_in, 4H), whh_ref: (H, 4H), b_ref: (1, 4H)  [b_ih + b_hh fused].
    out_ref: (T*B, H) VMEM ref receiving the per-step hidden states.
    Returns (h_T, c_T) values.  PyTorch gate order i, f, g, o.
    """
    B, H = h0.shape
    T = x_val.shape[0] // B

    # Hoisted input projection: one (T*B, D) @ (D, 4H) MXU matmul + bias covers
    # all timesteps; only the (B, H) @ (H, 4H) h-recurrence stays serial.
    gx = jnp.dot(x_val, wih_ref[...], preferred_element_type=jnp.float32) + b_ref[...]
    whh = whh_ref[...]

    h, c = h0, c0
    # T is small & static -> fully unrolled straight-line loop: no per-step
    # grid/pipeline overhead and all VMEM offsets are static (equivalent to
    # lax.fori_loop(..., unroll=True) minus the index arithmetic).  For long
    # sequences switch to lax.fori_loop with a carried index.
    for t in range(T):
        r = t * B
        gates = gx[r:r + B, :] + jnp.dot(h, whh, preferred_element_type=jnp.float32)
        i = jax.nn.sigmoid(gates[:, 0 * H:1 * H])
        f = jax.nn.sigmoid(gates[:, 1 * H:2 * H])
        g = jnp.tanh(gates[:, 2 * H:3 * H])
        o = jax.nn.sigmoid(gates[:, 3 * H:4 * H])
        c = f * c + i * g
        h = o * jnp.tanh(c)
        out_ref[r:r + B, :] = h
    return h, c


def _make_fused_kernel(n_layers):
    """Builds the fused forward kernel for a fixed layer count."""
    L = n_layers

    def kernel(*refs):
        idx = 0
        x_ref = refs[idx]; idx += 1
        h10_ref, c10_ref, h20_ref, c20_ref = refs[idx:idx + 4]; idx += 4
        lstm1_w = [refs[idx + 3 * l: idx + 3 * l + 3] for l in range(L)]; idx += 3 * L
        w1_ref, b1_ref, w2_ref, b2_ref = refs[idx:idx + 4]; idx += 4
        lstm2_w = [refs[idx + 3 * l: idx + 3 * l + 3] for l in range(L)]; idx += 3 * L
        y_ref, h1T_ref, c1T_ref, h2T_ref, c2T_ref = refs[idx:idx + 5]; idx += 5
        seq1_scr, seq2_scr = refs[idx:idx + 2]

        # ----- lstm1 stack (inter-layer dropout is identity in eval mode) -----
        cur = x_ref[...]                                   # (T*B, input_dim)
        for l in range(L):
            wih_ref, whh_ref, b_ref = lstm1_w[l]
            hT, cT = _lstm_layer(cur, h10_ref[l], c10_ref[l],
                                 wih_ref, whh_ref, b_ref, seq1_scr)
            h1T_ref[l] = hT                                # written once per layer
            c1T_ref[l] = cT
            cur = seq1_scr[...]                            # (T*B, hidden_dim)

        # ----- dropout(eval) -> fc1 -> relu -> fc2 -> relu -> dropout(eval) -----
        hid = jnp.maximum(
            jnp.dot(cur, w1_ref[...], preferred_element_type=jnp.float32)
            + b1_ref[...], 0.0)
        enc = jnp.maximum(
            jnp.dot(hid, w2_ref[...], preferred_element_type=jnp.float32)
            + b2_ref[...], 0.0)

        # ----- lstm2 stack -----
        cur = enc                                          # (T*B, hidden_dim)
        for l in range(L):
            wih_ref, whh_ref, b_ref = lstm2_w[l]
            dst = y_ref if l == L - 1 else seq2_scr        # last layer -> output
            hT, cT = _lstm_layer(cur, h20_ref[l], c20_ref[l],
                                 wih_ref, whh_ref, b_ref, dst)
            h2T_ref[l] = hT
            c2T_ref[l] = cT
            if l < L - 1:
                cur = seq2_scr[...]

    return kernel


# ---------------------------------------------------------------------------
# Wrapper: single pallas_call for the whole RNNModel forward
# ---------------------------------------------------------------------------

def rnn_model_forward(params, x, hidden1, hidden2, hidden_dim):
    B, T, Din = x.shape
    H = hidden_dim
    h1, c1 = hidden1                      # (L, B, H)
    h2, c2 = hidden2                      # (L, B, Din)
    L = h1.shape[0]

    w1, b1 = params["fc1"]                # (H, E), (1, E)
    w2, b2 = params["fc2"]                # (E, H), (1, H)

    # Time-major flattened input: row r = t*B + b.  (Two tiny XLA transposes
    # total; all intermediates stay inside the fused kernel.)
    x2d = jnp.transpose(x, (1, 0, 2)).reshape(T * B, Din)

    lstm1_flat = [a for layer in params["lstm1"] for a in layer]
    lstm2_flat = [a for layer in params["lstm2"] for a in layer]
    n_in = 1 + 4 + len(lstm1_flat) + 4 + len(lstm2_flat)

    out_shape = (
        jax.ShapeDtypeStruct((T * B, Din), jnp.float32),   # y (time-major flat)
        jax.ShapeDtypeStruct((L, B, H), jnp.float32),      # h1_T
        jax.ShapeDtypeStruct((L, B, H), jnp.float32),      # c1_T
        jax.ShapeDtypeStruct((L, B, Din), jnp.float32),    # h2_T
        jax.ShapeDtypeStruct((L, B, Din), jnp.float32),    # c2_T
    )

    vmem = pltpu.MemorySpace.VMEM
    y2d, h1T, c1T, h2T, c2T = pl.pallas_call(
        _make_fused_kernel(L),
        out_shape=out_shape,
        in_specs=[pl.BlockSpec(memory_space=vmem) for _ in range(n_in)],
        out_specs=tuple(pl.BlockSpec(memory_space=vmem) for _ in range(5)),
        scratch_shapes=[
            pltpu.VMEM((T * B, H), jnp.float32),    # lstm1 inter-layer sequence
            pltpu.VMEM((T * B, Din), jnp.float32),  # lstm2 inter-layer sequence
        ],
    )(x2d, h1, c1, h2, c2, *lstm1_flat, w1, b1, w2, b2, *lstm2_flat)

    y = jnp.transpose(y2d.reshape(T, B, Din), (1, 0, 2))   # back to (B, T, Din)
    return y, (h1T, c1T), (h2T, c2T)


# ---------------------------------------------------------------------------
# Parameter construction (deterministic, PyTorch-style uniform init)
# ---------------------------------------------------------------------------

def make_lstm_params(key, input_size, hidden_size, n_layers):
    """Returns list of (W_ih^T, W_hh^T, bias) per layer (already transposed)."""
    params = []
    k = 1.0 / jnp.sqrt(hidden_size)
    for l in range(n_layers):
        in_sz = input_size if l == 0 else hidden_size
        k0, k1, k2, k3, key = jax.random.split(key, 5)
        w_ih = jax.random.uniform(k0, (4 * hidden_size, in_sz), jnp.float32, -k, k)
        w_hh = jax.random.uniform(k1, (4 * hidden_size, hidden_size), jnp.float32, -k, k)
        b_ih = jax.random.uniform(k2, (4 * hidden_size,), jnp.float32, -k, k)
        b_hh = jax.random.uniform(k3, (4 * hidden_size,), jnp.float32, -k, k)
        params.append((w_ih.T, w_hh.T, (b_ih + b_hh).reshape(1, -1)))
    return params, key


def make_linear_params(key, in_f, out_f):
    k = 1.0 / jnp.sqrt(in_f)
    k0, k1, key = jax.random.split(key, 3)
    w = jax.random.uniform(k0, (out_f, in_f), jnp.float32, -k, k)
    b = jax.random.uniform(k1, (out_f,), jnp.float32, -k, k)
    return (w.T, b.reshape(1, -1)), key


# ---------------------------------------------------------------------------
# Pure-JAX reference (built-in correctness check)
# ---------------------------------------------------------------------------

def _lstm_layer_ref(x, h0, c0, wih, whh, b):
    H = h0.shape[-1]

    def step(carry, x_t):
        h, c = carry
        gates = x_t @ wih + h @ whh + b[0]
        i = jax.nn.sigmoid(gates[:, :H])
        f = jax.nn.sigmoid(gates[:, H:2 * H])
        g = jnp.tanh(gates[:, 2 * H:3 * H])
        o = jax.nn.sigmoid(gates[:, 3 * H:])
        c = f * c + i * g
        h = o * jnp.tanh(c)
        return (h, c), h

    (hT, cT), ys = jax.lax.scan(step, (h0, c0), jnp.transpose(x, (1, 0, 2)))
    return jnp.transpose(ys, (1, 0, 2)), hT, cT


def _forward_ref(params, x, hidden1, hidden2, hidden_dim):
    B = x.shape[0]
    h1, c1 = hidden1
    h2, c2 = hidden2
    y = x
    h1o, c1o = [], []
    for l, (wih, whh, b) in enumerate(params["lstm1"]):
        y, hT, cT = _lstm_layer_ref(y, h1[l], c1[l], wih, whh, b)
        h1o.append(hT); c1o.append(cT)
    d = y.reshape(-1, hidden_dim)
    w1, b1 = params["fc1"]; w2, b2 = params["fc2"]
    d = jnp.maximum(d @ w1 + b1[0], 0.0)
    d = jnp.maximum(d @ w2 + b2[0], 0.0)
    y = d.reshape(B, -1, hidden_dim)
    h2o, c2o = [], []
    for l, (wih, whh, b) in enumerate(params["lstm2"]):
        y, hT, cT = _lstm_layer_ref(y, h2[l], c2[l], wih, whh, b)
        h2o.append(hT); c2o.append(cT)
    return y, (jnp.stack(h1o), jnp.stack(c1o)), (jnp.stack(h2o), jnp.stack(c2o))


# ---------------------------------------------------------------------------
# Main
# ---------------------------------------------------------------------------

if __name__ == "__main__":
    INPUT_DIM = 8
    HIDDEN_DIM = 32
    ENCODER_DIM = 16
    N_LAYERS = 2
    B, T = 2, 8

    key = jax.random.PRNGKey(0)

    lstm1_params, key = make_lstm_params(key, INPUT_DIM, HIDDEN_DIM, N_LAYERS)
    lstm2_params, key = make_lstm_params(key, HIDDEN_DIM, INPUT_DIM, N_LAYERS)
    fc1_params, key = make_linear_params(key, HIDDEN_DIM, ENCODER_DIM)
    fc2_params, key = make_linear_params(key, ENCODER_DIM, HIDDEN_DIM)
    params = {"lstm1": lstm1_params, "lstm2": lstm2_params,
              "fc1": fc1_params, "fc2": fc2_params}

    kx, key = jax.random.split(key)
    x = jax.random.normal(kx, (B, T, INPUT_DIM), jnp.float32)

    # init_hidden: zeros
    hidden1 = (jnp.zeros((N_LAYERS, B, HIDDEN_DIM), jnp.float32),
               jnp.zeros((N_LAYERS, B, HIDDEN_DIM), jnp.float32))
    hidden2 = (jnp.zeros((N_LAYERS, B, INPUT_DIM), jnp.float32),
               jnp.zeros((N_LAYERS, B, INPUT_DIM), jnp.float32))

    fwd = jax.jit(functools.partial(rnn_model_forward, hidden_dim=HIDDEN_DIM))
    lstm_enc, hid1, hid2 = fwd(params, x, hidden1, hidden2)
    jax.block_until_ready((lstm_enc, hid1, hid2))

    # Sanity check against pure-JAX reference.
    ref_enc, ref_h1, ref_h2 = _forward_ref(params, x, hidden1, hidden2, HIDDEN_DIM)
    assert lstm_enc.shape == (B, T, INPUT_DIM)
    assert hid1[0].shape == (N_LAYERS, B, HIDDEN_DIM)
    assert hid2[0].shape == (N_LAYERS, B, INPUT_DIM)
    for got, want in [(lstm_enc, ref_enc), (hid1[0], ref_h1[0]), (hid1[1], ref_h1[1]),
                      (hid2[0], ref_h2[0]), (hid2[1], ref_h2[1])]:
        if not jnp.allclose(got, want, atol=1e-4, rtol=1e-4):
            raise AssertionError("Pallas output mismatch vs reference")

    print("KERNEL_OK")
</pallas_src>

<mosaic_0001>
module attributes {stable_mosaic.version = 11 : i64} {
  func.func @kernel(%arg0: memref<16x8xf32, #tpu.memory_space<vmem>>, %arg1: memref<2x2x32xf32, #tpu.memory_space<vmem>>, %arg2: memref<2x2x32xf32, #tpu.memory_space<vmem>>, %arg3: memref<2x2x8xf32, #tpu.memory_space<vmem>>, %arg4: memref<2x2x8xf32, #tpu.memory_space<vmem>>, %arg5: memref<8x128xf32, #tpu.memory_space<vmem>>, %arg6: memref<32x128xf32, #tpu.memory_space<vmem>>, %arg7: memref<1x128xf32, #tpu.memory_space<vmem>>, %arg8: memref<32x128xf32, #tpu.memory_space<vmem>>, %arg9: memref<32x128xf32, #tpu.memory_space<vmem>>, %arg10: memref<1x128xf32, #tpu.memory_space<vmem>>, %arg11: memref<32x16xf32, #tpu.memory_space<vmem>>, %arg12: memref<1x16xf32, #tpu.memory_space<vmem>>, %arg13: memref<16x32xf32, #tpu.memory_space<vmem>>, %arg14: memref<1x32xf32, #tpu.memory_space<vmem>>, %arg15: memref<32x32xf32, #tpu.memory_space<vmem>>, %arg16: memref<8x32xf32, #tpu.memory_space<vmem>>, %arg17: memref<1x32xf32, #tpu.memory_space<vmem>>, %arg18: memref<8x32xf32, #tpu.memory_space<vmem>>, %arg19: memref<8x32xf32, #tpu.memory_space<vmem>>, %arg20: memref<1x32xf32, #tpu.memory_space<vmem>>, %arg21: memref<16x8xf32, #tpu.memory_space<vmem>>, %arg22: memref<2x2x32xf32, #tpu.memory_space<vmem>>, %arg23: memref<2x2x32xf32, #tpu.memory_space<vmem>>, %arg24: memref<2x2x8xf32, #tpu.memory_space<vmem>>, %arg25: memref<2x2x8xf32, #tpu.memory_space<vmem>>, %arg26: memref<16x32xf32, #tpu.memory_space<vmem>>, %arg27: memref<16x8xf32, #tpu.memory_space<vmem>>) attributes {dimension_semantics = [], scalar_prefetch = 0 : i64, scratch_operands = 2 : i64, tpu.core_type = #tpu.core_type<tc>} {
    %c0 = arith.constant 0 : index
    %c0_0 = arith.constant 0 : index
    %0 = vector.load %arg0[%c0, %c0_0] : memref<16x8xf32, #tpu.memory_space<vmem>>, vector<16x8xf32>
    %c0_1 = arith.constant 0 : index
    %c0_2 = arith.constant 0 : index
    %c0_3 = arith.constant 0 : index
    %1 = vector.load %arg1[%c0_1, %c0_2, %c0_3] : memref<2x2x32xf32, #tpu.memory_space<vmem>>, vector<1x2x32xf32>
    %2 = vector.shape_cast %1 : vector<1x2x32xf32> to vector<2x32xf32>
    %c0_4 = arith.constant 0 : index
    %c0_5 = arith.constant 0 : index
    %c0_6 = arith.constant 0 : index
    %3 = vector.load %arg2[%c0_4, %c0_5, %c0_6] : memref<2x2x32xf32, #tpu.memory_space<vmem>>, vector<1x2x32xf32>
    %4 = vector.shape_cast %3 : vector<1x2x32xf32> to vector<2x32xf32>
    %c0_7 = arith.constant 0 : index
    %c0_8 = arith.constant 0 : index
    %5 = vector.load %arg5[%c0_7, %c0_8] : memref<8x128xf32, #tpu.memory_space<vmem>>, vector<8x128xf32>
    %cst = arith.constant dense<0.000000e+00> : vector<16x128xf32>
    %6 = tpu.matmul %0, %5, %cst {dimension_numbers = #tpu.dot_dimension_numbers<[1], [0], [0], [1], [0, 0, 1, 1], [], []>} : vector<16x8xf32>, vector<8x128xf32>, vector<16x128xf32> -> vector<16x128xf32>
    %c0_9 = arith.constant 0 : index
    %c0_10 = arith.constant 0 : index
    %7 = vector.load %arg7[%c0_9, %c0_10] : memref<1x128xf32, #tpu.memory_space<vmem>>, vector<1x128xf32>
    %8 = vector.broadcast %7 : vector<1x128xf32> to vector<16x128xf32>
    %9 = arith.addf %6, %8 : vector<16x128xf32>
    %c0_11 = arith.constant 0 : index
    %c0_12 = arith.constant 0 : index
    %10 = vector.load %arg6[%c0_11, %c0_12] : memref<32x128xf32, #tpu.memory_space<vmem>>, vector<32x128xf32>
    %11 = vector.extract_strided_slice %9 {offsets = [0, 0], sizes = [2, 128], strides = [1, 1]} : vector<16x128xf32> to vector<2x128xf32>
    %cst_13 = arith.constant dense<0.000000e+00> : vector<2x128xf32>
    %12 = tpu.matmul %2, %10, %cst_13 {dimension_numbers = #tpu.dot_dimension_numbers<[1], [0], [0], [1], [0, 0, 1, 1], [], []>} : vector<2x32xf32>, vector<32x128xf32>, vector<2x128xf32> -> vector<2x128xf32>
    %13 = arith.addf %11, %12 : vector<2x128xf32>
    %14 = vector.extract_strided_slice %13 {offsets = [0, 0], sizes = [2, 32], strides = [1, 1]} : vector<2x128xf32> to vector<2x32xf32>
    %15 = arith.negf %14 : vector<2x32xf32>
    %16 = math.exp %15 : vector<2x32xf32>
    %cst_14 = arith.constant 1.000000e+00 : f32
    %17 = vector.broadcast %cst_14 : f32 to vector<2x32xf32>
    %18 = arith.addf %17, %16 : vector<2x32xf32>
    %19 = arith.divf %17, %18 : vector<2x32xf32>
    %20 = vector.extract_strided_slice %13 {offsets = [0, 32], sizes = [2, 32], strides = [1, 1]} : vector<2x128xf32> to vector<2x32xf32>
    %21 = arith.negf %20 : vector<2x32xf32>
    %22 = math.exp %21 : vector<2x32xf32>
    %cst_15 = arith.constant 1.000000e+00 : f32
    %23 = vector.broadcast %cst_15 : f32 to vector<2x32xf32>
    %24 = arith.addf %23, %22 : vector<2x32xf32>
    %25 = arith.divf %23, %24 : vector<2x32xf32>
    %26 = vector.extract_strided_slice %13 {offsets = [0, 64], sizes = [2, 32], strides = [1, 1]} : vector<2x128xf32> to vector<2x32xf32>
    %27 = math.tanh %26 : vector<2x32xf32>
    %28 = vector.extract_strided_slice %13 {offsets = [0, 96], sizes = [2, 32], strides = [1, 1]} : vector<2x128xf32> to vector<2x32xf32>
    %29 = arith.negf %28 : vector<2x32xf32>
    %30 = math.exp %29 : vector<2x32xf32>
    %cst_16 = arith.constant 1.000000e+00 : f32
    %31 = vector.broadcast %cst_16 : f32 to vector<2x32xf32>
    %32 = arith.addf %31, %30 : vector<2x32xf32>
    %33 = arith.divf %31, %32 : vector<2x32xf32>
    %34 = arith.mulf %25, %4 : vector<2x32xf32>
    %35 = arith.mulf %19, %27 : vector<2x32xf32>
    %36 = arith.addf %34, %35 : vector<2x32xf32>
    %37 = math.tanh %36 : vector<2x32xf32>
    %38 = arith.mulf %33, %37 : vector<2x32xf32>
    %c0_17 = arith.constant 0 : index
    %c0_18 = arith.constant 0 : index
    %39 = vector.load %arg26[%c0_17, %c0_18] : memref<16x32xf32, #tpu.memory_space<vmem>>, vector<2x32xf32>
    tpu.vector_store %arg26[%c0_17, %c0_18], %38 {strides = array<i32>} : memref<16x32xf32, #tpu.memory_space<vmem>>, vector<2x32xf32>,
    %40 = vector.extract_strided_slice %9 {offsets = [2, 0], sizes = [2, 128], strides = [1, 1]} : vector<16x128xf32> to vector<2x128xf32>
    %cst_19 = arith.constant dense<0.000000e+00> : vector<2x128xf32>
    %41 = tpu.matmul %38, %10, %cst_19 {dimension_numbers = #tpu.dot_dimension_numbers<[1], [0], [0], [1], [0, 0, 1, 1], [], []>} : vector<2x32xf32>, vector<32x128xf32>, vector<2x128xf32> -> vector<2x128xf32>
    %42 = arith.addf %40, %41 : vector<2x128xf32>
    %43 = vector.extract_strided_slice %42 {offsets = [0, 0], sizes = [2, 32], strides = [1, 1]} : vector<2x128xf32> to vector<2x32xf32>
    %44 = arith.negf %43 : vector<2x32xf32>
    %45 = math.exp %44 : vector<2x32xf32>
    %cst_20 = arith.constant 1.000000e+00 : f32
    %46 = vector.broadcast %cst_20 : f32 to vector<2x32xf32>
    %47 = arith.addf %46, %45 : vector<2x32xf32>
    %48 = arith.divf %46, %47 : vector<2x32xf32>
    %49 = vector.extract_strided_slice %42 {offsets = [0, 32], sizes = [2, 32], strides = [1, 1]} : vector<2x128xf32> to vector<2x32xf32>
    %50 = arith.negf %49 : vector<2x32xf32>
    %51 = math.exp %50 : vector<2x32xf32>
    %cst_21 = arith.constant 1.000000e+00 : f32
    %52 = vector.broadcast %cst_21 : f32 to vector<2x32xf32>
    %53 = arith.addf %52, %51 : vector<2x32xf32>
    %54 = arith.divf %52, %53 : vector<2x32xf32>
    %55 = vector.extract_strided_slice %42 {offsets = [0, 64], sizes = [2, 32], strides = [1, 1]} : vector<2x128xf32> to vector<2x32xf32>
    %56 = math.tanh %55 : vector<2x32xf32>
    %57 = vector.extract_strided_slice %42 {offsets = [0, 96], sizes = [2, 32], strides = [1, 1]} : vector<2x128xf32> to vector<2x32xf32>
    %58 = arith.negf %57 : vector<2x32xf32>
    %59 = math.exp %58 : vector<2x32xf32>
    %cst_22 = arith.constant 1.000000e+00 : f32
    %60 = vector.broadcast %cst_22 : f32 to vector<2x32xf32>
    %61 = arith.addf %60, %59 : vector<2x32xf32>
    %62 = arith.divf %60, %61 : vector<2x32xf32>
    %63 = arith.mulf %54, %36 : vector<2x32xf32>
    %64 = arith.mulf %48, %56 : vector<2x32xf32>
    %65 = arith.addf %63, %64 : vector<2x32xf32>
    %66 = math.tanh %65 : vector<2x32xf32>
    %67 = arith.mulf %62, %66 : vector<2x32xf32>
    %c2 = arith.constant 2 : index
    %c0_23 = arith.constant 0 : index
    %68 = vector.load %arg26[%c2, %c0_23] : memref<16x32xf32, #tpu.memory_space<vmem>>, vector<2x32xf32>
    tpu.vector_store %arg26[%c2, %c0_23], %67 {strides = array<i32>} : memref<16x32xf32, #tpu.memory_space<vmem>>, vector<2x32xf32>,
    %69 = vector.extract_strided_slice %9 {offsets = [4, 0], sizes = [2, 128], strides = [1, 1]} : vector<16x128xf32> to vector<2x128xf32>
    %cst_24 = arith.constant dense<0.000000e+00> : vector<2x128xf32>
    %70 = tpu.matmul %67, %10, %cst_24 {dimension_numbers = #tpu.dot_dimension_numbers<[1], [0], [0], [1], [0, 0, 1, 1], [], []>} : vector<2x32xf32>, vector<32x128xf32>, vector<2x128xf32> -> vector<2x128xf32>
    %71 = arith.addf %69, %70 : vector<2x128xf32>
    %72 = vector.extract_strided_slice %71 {offsets = [0, 0], sizes = [2, 32], strides = [1, 1]} : vector<2x128xf32> to vector<2x32xf32>
    %73 = arith.negf %72 : vector<2x32xf32>
    %74 = math.exp %73 : vector<2x32xf32>
    %cst_25 = arith.constant 1.000000e+00 : f32
    %75 = vector.broadcast %cst_25 : f32 to vector<2x32xf32>
    %76 = arith.addf %75, %74 : vector<2x32xf32>
    %77 = arith.divf %75, %76 : vector<2x32xf32>
    %78 = vector.extract_strided_slice %71 {offsets = [0, 32], sizes = [2, 32], strides = [1, 1]} : vector<2x128xf32> to vector<2x32xf32>
    %79 = arith.negf %78 : vector<2x32xf32>
    %80 = math.exp %79 : vector<2x32xf32>
    %cst_26 = arith.constant 1.000000e+00 : f32
    %81 = vector.broadcast %cst_26 : f32 to vector<2x32xf32>
    %82 = arith.addf %81, %80 : vector<2x32xf32>
    %83 = arith.divf %81, %82 : vector<2x32xf32>
    %84 = vector.extract_strided_slice %71 {offsets = [0, 64], sizes = [2, 32], strides = [1, 1]} : vector<2x128xf32> to vector<2x32xf32>
    %85 = math.tanh %84 : vector<2x32xf32>
    %86 = vector.extract_strided_slice %71 {offsets = [0, 96], sizes = [2, 32], strides = [1, 1]} : vector<2x128xf32> to vector<2x32xf32>
    %87 = arith.negf %86 : vector<2x32xf32>
    %88 = math.exp %87 : vector<2x32xf32>
    %cst_27 = arith.constant 1.000000e+00 : f32
    %89 = vector.broadcast %cst_27 : f32 to vector<2x32xf32>
    %90 = arith.addf %89, %88 : vector<2x32xf32>
    %91 = arith.divf %89, %90 : vector<2x32xf32>
    %92 = arith.mulf %83, %65 : vector<2x32xf32>
    %93 = arith.mulf %77, %85 : vector<2x32xf32>
    %94 = arith.addf %92, %93 : vector<2x32xf32>
    %95 = math.tanh %94 : vector<2x32xf32>
    %96 = arith.mulf %91, %95 : vector<2x32xf32>
    %c4 = arith.constant 4 : index
    %c0_28 = arith.constant 0 : index
    %97 = vector.load %arg26[%c4, %c0_28] : memref<16x32xf32, #tpu.memory_space<vmem>>, vector<2x32xf32>
    tpu.vector_store %arg26[%c4, %c0_28], %96 {strides = array<i32>} : memref<16x32xf32, #tpu.memory_space<vmem>>, vector<2x32xf32>,
    %98 = vector.extract_strided_slice %9 {offsets = [6, 0], sizes = [2, 128], strides = [1, 1]} : vector<16x128xf32> to vector<2x128xf32>
    %cst_29 = arith.constant dense<0.000000e+00> : vector<2x128xf32>
    %99 = tpu.matmul %96, %10, %cst_29 {dimension_numbers = #tpu.dot_dimension_numbers<[1], [0], [0], [1], [0, 0, 1, 1], [], []>} : vector<2x32xf32>, vector<32x128xf32>, vector<2x128xf32> -> vector<2x128xf32>
    %100 = arith.addf %98, %99 : vector<2x128xf32>
    %101 = vector.extract_strided_slice %100 {offsets = [0, 0], sizes = [2, 32], strides = [1, 1]} : vector<2x128xf32> to vector<2x32xf32>
    %102 = arith.negf %101 : vector<2x32xf32>
    %103 = math.exp %102 : vector<2x32xf32>
    %cst_30 = arith.constant 1.000000e+00 : f32
    %104 = vector.broadcast %cst_30 : f32 to vector<2x32xf32>
    %105 = arith.addf %104, %103 : vector<2x32xf32>
    %106 = arith.divf %104, %105 : vector<2x32xf32>
    %107 = vector.extract_strided_slice %100 {offsets = [0, 32], sizes = [2, 32], strides = [1, 1]} : vector<2x128xf32> to vector<2x32xf32>
    %108 = arith.negf %107 : vector<2x32xf32>
    %109 = math.exp %108 : vector<2x32xf32>
    %cst_31 = arith.constant 1.000000e+00 : f32
    %110 = vector.broadcast %cst_31 : f32 to vector<2x32xf32>
    %111 = arith.addf %110, %109 : vector<2x32xf32>
    %112 = arith.divf %110, %111 : vector<2x32xf32>
    %113 = vector.extract_strided_slice %100 {offsets = [0, 64], sizes = [2, 32], strides = [1, 1]} : vector<2x128xf32> to vector<2x32xf32>
    %114 = math.tanh %113 : vector<2x32xf32>
    %115 = vector.extract_strided_slice %100 {offsets = [0, 96], sizes = [2, 32], strides = [1, 1]} : vector<2x128xf32> to vector<2x32xf32>
    %116 = arith.negf %115 : vector<2x32xf32>
    %117 = math.exp %116 : vector<2x32xf32>
    %cst_32 = arith.constant 1.000000e+00 : f32
    %118 = vector.broadcast %cst_32 : f32 to vector<2x32xf32>
    %119 = arith.addf %118, %117 : vector<2x32xf32>
    %120 = arith.divf %118, %119 : vector<2x32xf32>
    %121 = arith.mulf %112, %94 : vector<2x32xf32>
    %122 = arith.mulf %106, %114 : vector<2x32xf32>
    %123 = arith.addf %121, %122 : vector<2x32xf32>
    %124 = math.tanh %123 : vector<2x32xf32>
    %125 = arith.mulf %120, %124 : vector<2x32xf32>
    %c6 = arith.constant 6 : index
    %c0_33 = arith.constant 0 : index
    %126 = vector.load %arg26[%c6, %c0_33] : memref<16x32xf32, #tpu.memory_space<vmem>>, vector<2x32xf32>
    tpu.vector_store %arg26[%c6, %c0_33], %125 {strides = array<i32>} : memref<16x32xf32, #tpu.memory_space<vmem>>, vector<2x32xf32>,
    %127 = vector.extract_strided_slice %9 {offsets = [8, 0], sizes = [2, 128], strides = [1, 1]} : vector<16x128xf32> to vector<2x128xf32>
    %cst_34 = arith.constant dense<0.000000e+00> : vector<2x128xf32>
    %128 = tpu.matmul %125, %10, %cst_34 {dimension_numbers = #tpu.dot_dimension_numbers<[1], [0], [0], [1], [0, 0, 1, 1], [], []>} : vector<2x32xf32>, vector<32x128xf32>, vector<2x128xf32> -> vector<2x128xf32>
    %129 = arith.addf %127, %128 : vector<2x128xf32>
    %130 = vector.extract_strided_slice %129 {offsets = [0, 0], sizes = [2, 32], strides = [1, 1]} : vector<2x128xf32> to vector<2x32xf32>
    %131 = arith.negf %130 : vector<2x32xf32>
    %132 = math.exp %131 : vector<2x32xf32>
    %cst_35 = arith.constant 1.000000e+00 : f32
    %133 = vector.broadcast %cst_35 : f32 to vector<2x32xf32>
    %134 = arith.addf %133, %132 : vector<2x32xf32>
    %135 = arith.divf %133, %134 : vector<2x32xf32>
    %136 = vector.extract_strided_slice %129 {offsets = [0, 32], sizes = [2, 32], strides = [1, 1]} : vector<2x128xf32> to vector<2x32xf32>
    %137 = arith.negf %136 : vector<2x32xf32>
    %138 = math.exp %137 : vector<2x32xf32>
    %cst_36 = arith.constant 1.000000e+00 : f32
    %139 = vector.broadcast %cst_36 : f32 to vector<2x32xf32>
    %140 = arith.addf %139, %138 : vector<2x32xf32>
    %141 = arith.divf %139, %140 : vector<2x32xf32>
    %142 = vector.extract_strided_slice %129 {offsets = [0, 64], sizes = [2, 32], strides = [1, 1]} : vector<2x128xf32> to vector<2x32xf32>
    %143 = math.tanh %142 : vector<2x32xf32>
    %144 = vector.extract_strided_slice %129 {offsets = [0, 96], sizes = [2, 32], strides = [1, 1]} : vector<2x128xf32> to vector<2x32xf32>
    %145 = arith.negf %144 : vector<2x32xf32>
    %146 = math.exp %145 : vector<2x32xf32>
    %cst_37 = arith.constant 1.000000e+00 : f32
    %147 = vector.broadcast %cst_37 : f32 to vector<2x32xf32>
    %148 = arith.addf %147, %146 : vector<2x32xf32>
    %149 = arith.divf %147, %148 : vector<2x32xf32>
    %150 = arith.mulf %141, %123 : vector<2x32xf32>
    %151 = arith.mulf %135, %143 : vector<2x32xf32>
    %152 = arith.addf %150, %151 : vector<2x32xf32>
    %153 = math.tanh %152 : vector<2x32xf32>
    %154 = arith.mulf %149, %153 : vector<2x32xf32>
    %c8 = arith.constant 8 : index
    %c0_38 = arith.constant 0 : index
    %155 = vector.load %arg26[%c8, %c0_38] : memref<16x32xf32, #tpu.memory_space<vmem>>, vector<2x32xf32>
    tpu.vector_store %arg26[%c8, %c0_38], %154 {strides = array<i32>} : memref<16x32xf32, #tpu.memory_space<vmem>>, vector<2x32xf32>,
    %156 = vector.extract_strided_slice %9 {offsets = [10, 0], sizes = [2, 128], strides = [1, 1]} : vector<16x128xf32> to vector<2x128xf32>
    %cst_39 = arith.constant dense<0.000000e+00> : vector<2x128xf32>
    %157 = tpu.matmul %154, %10, %cst_39 {dimension_numbers = #tpu.dot_dimension_numbers<[1], [0], [0], [1], [0, 0, 1, 1], [], []>} : vector<2x32xf32>, vector<32x128xf32>, vector<2x128xf32> -> vector<2x128xf32>
    %158 = arith.addf %156, %157 : vector<2x128xf32>
    %159 = vector.extract_strided_slice %158 {offsets = [0, 0], sizes = [2, 32], strides = [1, 1]} : vector<2x128xf32> to vector<2x32xf32>
    %160 = arith.negf %159 : vector<2x32xf32>
    %161 = math.exp %160 : vector<2x32xf32>
    %cst_40 = arith.constant 1.000000e+00 : f32
    %162 = vector.broadcast %cst_40 : f32 to vector<2x32xf32>
    %163 = arith.addf %162, %161 : vector<2x32xf32>
    %164 = arith.divf %162, %163 : vector<2x32xf32>
    %165 = vector.extract_strided_slice %158 {offsets = [0, 32], sizes = [2, 32], strides = [1, 1]} : vector<2x128xf32> to vector<2x32xf32>
    %166 = arith.negf %165 : vector<2x32xf32>
    %167 = math.exp %166 : vector<2x32xf32>
    %cst_41 = arith.constant 1.000000e+00 : f32
    %168 = vector.broadcast %cst_41 : f32 to vector<2x32xf32>
    %169 = arith.addf %168, %167 : vector<2x32xf32>
    %170 = arith.divf %168, %169 : vector<2x32xf32>
    %171 = vector.extract_strided_slice %158 {offsets = [0, 64], sizes = [2, 32], strides = [1, 1]} : vector<2x128xf32> to vector<2x32xf32>
    %172 = math.tanh %171 : vector<2x32xf32>
    %173 = vector.extract_strided_slice %158 {offsets = [0, 96], sizes = [2, 32], strides = [1, 1]} : vector<2x128xf32> to vector<2x32xf32>
    %174 = arith.negf %173 : vector<2x32xf32>
    %175 = math.exp %174 : vector<2x32xf32>
    %cst_42 = arith.constant 1.000000e+00 : f32
    %176 = vector.broadcast %cst_42 : f32 to vector<2x32xf32>
    %177 = arith.addf %176, %175 : vector<2x32xf32>
    %178 = arith.divf %176, %177 : vector<2x32xf32>
    %179 = arith.mulf %170, %152 : vector<2x32xf32>
    %180 = arith.mulf %164, %172 : vector<2x32xf32>
    %181 = arith.addf %179, %180 : vector<2x32xf32>
    %182 = math.tanh %181 : vector<2x32xf32>
    %183 = arith.mulf %178, %182 : vector<2x32xf32>
    %c10 = arith.constant 10 : index
    %c0_43 = arith.constant 0 : index
    %184 = vector.load %arg26[%c10, %c0_43] : memref<16x32xf32, #tpu.memory_space<vmem>>, vector<2x32xf32>
    tpu.vector_store %arg26[%c10, %c0_43], %183 {strides = array<i32>} : memref<16x32xf32, #tpu.memory_space<vmem>>, vector<2x32xf32>,
    %185 = vector.extract_strided_slice %9 {offsets = [12, 0], sizes = [2, 128], strides = [1, 1]} : vector<16x128xf32> to vector<2x128xf32>
    %cst_44 = arith.constant dense<0.000000e+00> : vector<2x128xf32>
    %186 = tpu.matmul %183, %10, %cst_44 {dimension_numbers = #tpu.dot_dimension_numbers<[1], [0], [0], [1], [0, 0, 1, 1], [], []>} : vector<2x32xf32>, vector<32x128xf32>, vector<2x128xf32> -> vector<2x128xf32>
    %187 = arith.addf %185, %186 : vector<2x128xf32>
    %188 = vector.extract_strided_slice %187 {offsets = [0, 0], sizes = [2, 32], strides = [1, 1]} : vector<2x128xf32> to vector<2x32xf32>
    %189 = arith.negf %188 : vector<2x32xf32>
    %190 = math.exp %189 : vector<2x32xf32>
    %cst_45 = arith.constant 1.000000e+00 : f32
    %191 = vector.broadcast %cst_45 : f32 to vector<2x32xf32>
    %192 = arith.addf %191, %190 : vector<2x32xf32>
    %193 = arith.divf %191, %192 : vector<2x32xf32>
    %194 = vector.extract_strided_slice %187 {offsets = [0, 32], sizes = [2, 32], strides = [1, 1]} : vector<2x128xf32> to vector<2x32xf32>
    %195 = arith.negf %194 : vector<2x32xf32>
    %196 = math.exp %195 : vector<2x32xf32>
    %cst_46 = arith.constant 1.000000e+00 : f32
    %197 = vector.broadcast %cst_46 : f32 to vector<2x32xf32>
    %198 = arith.addf %197, %196 : vector<2x32xf32>
    %199 = arith.divf %197, %198 : vector<2x32xf32>
    %200 = vector.extract_strided_slice %187 {offsets = [0, 64], sizes = [2, 32], strides = [1, 1]} : vector<2x128xf32> to vector<2x32xf32>
    %201 = math.tanh %200 : vector<2x32xf32>
    %202 = vector.extract_strided_slice %187 {offsets = [0, 96], sizes = [2, 32], strides = [1, 1]} : vector<2x128xf32> to vector<2x32xf32>
    %203 = arith.negf %202 : vector<2x32xf32>
    %204 = math.exp %203 : vector<2x32xf32>
    %cst_47 = arith.constant 1.000000e+00 : f32
    %205 = vector.broadcast %cst_47 : f32 to vector<2x32xf32>
    %206 = arith.addf %205, %204 : vector<2x32xf32>
    %207 = arith.divf %205, %206 : vector<2x32xf32>
    %208 = arith.mulf %199, %181 : vector<2x32xf32>
    %209 = arith.mulf %193, %201 : vector<2x32xf32>
    %210 = arith.addf %208, %209 : vector<2x32xf32>
    %211 = math.tanh %210 : vector<2x32xf32>
    %212 = arith.mulf %207, %211 : vector<2x32xf32>
    %c12 = arith.constant 12 : index
    %c0_48 = arith.constant 0 : index
    %213 = vector.load %arg26[%c12, %c0_48] : memref<16x32xf32, #tpu.memory_space<vmem>>, vector<2x32xf32>
    tpu.vector_store %arg26[%c12, %c0_48], %212 {strides = array<i32>} : memref<16x32xf32, #tpu.memory_space<vmem>>, vector<2x32xf32>,
    %214 = vector.extract_strided_slice %9 {offsets = [14, 0], sizes = [2, 128], strides = [1, 1]} : vector<16x128xf32> to vector<2x128xf32>
    %cst_49 = arith.constant dense<0.000000e+00> : vector<2x128xf32>
    %215 = tpu.matmul %212, %10, %cst_49 {dimension_numbers = #tpu.dot_dimension_numbers<[1], [0], [0], [1], [0, 0, 1, 1], [], []>} : vector<2x32xf32>, vector<32x128xf32>, vector<2x128xf32> -> vector<2x128xf32>
    %216 = arith.addf %214, %215 : vector<2x128xf32>
    %217 = vector.extract_strided_slice %216 {offsets = [0, 0], sizes = [2, 32], strides = [1, 1]} : vector<2x128xf32> to vector<2x32xf32>
    %218 = arith.negf %217 : vector<2x32xf32>
    %219 = math.exp %218 : vector<2x32xf32>
    %cst_50 = arith.constant 1.000000e+00 : f32
    %220 = vector.broadcast %cst_50 : f32 to vector<2x32xf32>
    %221 = arith.addf %220, %219 : vector<2x32xf32>
    %222 = arith.divf %220, %221 : vector<2x32xf32>
    %223 = vector.extract_strided_slice %216 {offsets = [0, 32], sizes = [2, 32], strides = [1, 1]} : vector<2x128xf32> to vector<2x32xf32>
    %224 = arith.negf %223 : vector<2x32xf32>
    %225 = math.exp %224 : vector<2x32xf32>
    %cst_51 = arith.constant 1.000000e+00 : f32
    %226 = vector.broadcast %cst_51 : f32 to vector<2x32xf32>
    %227 = arith.addf %226, %225 : vector<2x32xf32>
    %228 = arith.divf %226, %227 : vector<2x32xf32>
    %229 = vector.extract_strided_slice %216 {offsets = [0, 64], sizes = [2, 32], strides = [1, 1]} : vector<2x128xf32> to vector<2x32xf32>
    %230 = math.tanh %229 : vector<2x32xf32>
    %231 = vector.extract_strided_slice %216 {offsets = [0, 96], sizes = [2, 32], strides = [1, 1]} : vector<2x128xf32> to vector<2x32xf32>
    %232 = arith.negf %231 : vector<2x32xf32>
    %233 = math.exp %232 : vector<2x32xf32>
    %cst_52 = arith.constant 1.000000e+00 : f32
    %234 = vector.broadcast %cst_52 : f32 to vector<2x32xf32>
    %235 = arith.addf %234, %233 : vector<2x32xf32>
    %236 = arith.divf %234, %235 : vector<2x32xf32>
    %237 = arith.mulf %228, %210 : vector<2x32xf32>
    %238 = arith.mulf %222, %230 : vector<2x32xf32>
    %239 = arith.addf %237, %238 : vector<2x32xf32>
    %240 = math.tanh %239 : vector<2x32xf32>
    %241 = arith.mulf %236, %240 : vector<2x32xf32>
    %c14 = arith.constant 14 : index
    %c0_53 = arith.constant 0 : index
    %242 = vector.load %arg26[%c14, %c0_53] : memref<16x32xf32, #tpu.memory_space<vmem>>, vector<2x32xf32>
    tpu.vector_store %arg26[%c14, %c0_53], %241 {strides = array<i32>} : memref<16x32xf32, #tpu.memory_space<vmem>>, vector<2x32xf32>,
    %c0_54 = arith.constant 0 : index
    %c0_55 = arith.constant 0 : index
    %c0_56 = arith.constant 0 : index
    %243 = vector.load %arg22[%c0_54, %c0_55, %c0_56] : memref<2x2x32xf32, #tpu.memory_space<vmem>>, vector<1x2x32xf32>
    %244 = vector.shape_cast %243 : vector<1x2x32xf32> to vector<2x32xf32>
    %245 = vector.shape_cast %241 : vector<2x32xf32> to vector<1x2x32xf32>
    tpu.vector_store %arg22[%c0_54, %c0_55, %c0_56], %245 {strides = array<i32>} : memref<2x2x32xf32, #tpu.memory_space<vmem>>, vector<1x2x32xf32>,
    %c0_57 = arith.constant 0 : index
    %c0_58 = arith.constant 0 : index
    %c0_59 = arith.constant 0 : index
    %246 = vector.load %arg23[%c0_57, %c0_58, %c0_59] : memref<2x2x32xf32, #tpu.memory_space<vmem>>, vector<1x2x32xf32>
    %247 = vector.shape_cast %246 : vector<1x2x32xf32> to vector<2x32xf32>
    %248 = vector.shape_cast %239 : vector<2x32xf32> to vector<1x2x32xf32>
    tpu.vector_store %arg23[%c0_57, %c0_58, %c0_59], %248 {strides = array<i32>} : memref<2x2x32xf32, #tpu.memory_space<vmem>>, vector<1x2x32xf32>,
    %c0_60 = arith.constant 0 : index
    %c0_61 = arith.constant 0 : index
    %249 = vector.load %arg26[%c0_60, %c0_61] : memref<16x32xf32, #tpu.memory_space<vmem>>, vector<16x32xf32>
    %c1 = arith.constant 1 : index
    %c0_62 = arith.constant 0 : index
    %c0_63 = arith.constant 0 : index
    %250 = vector.load %arg1[%c1, %c0_62, %c0_63] : memref<2x2x32xf32, #tpu.memory_space<vmem>>, vector<1x2x32xf32>
    %251 = vector.shape_cast %250 : vector<1x2x32xf32> to vector<2x32xf32>
    %c1_64 = arith.constant 1 : index
    %c0_65 = arith.constant 0 : index
    %c0_66 = arith.constant 0 : index
    %252 = vector.load %arg2[%c1_64, %c0_65, %c0_66] : memref<2x2x32xf32, #tpu.memory_space<vmem>>, vector<1x2x32xf32>
    %253 = vector.shape_cast %252 : vector<1x2x32xf32> to vector<2x32xf32>
    %c0_67 = arith.constant 0 : index
    %c0_68 = arith.constant 0 : index
    %254 = vector.load %arg8[%c0_67, %c0_68] : memref<32x128xf32, #tpu.memory_space<vmem>>, vector<32x128xf32>
    %cst_69 = arith.constant dense<0.000000e+00> : vector<16x128xf32>
    %255 = tpu.matmul %249, %254, %cst_69 {dimension_numbers = #tpu.dot_dimension_numbers<[1], [0], [0], [1], [0, 0, 1, 1], [], []>} : vector<16x32xf32>, vector<32x128xf32>, vector<16x128xf32> -> vector<16x128xf32>
    %c0_70 = arith.constant 0 : index
    %c0_71 = arith.constant 0 : index
    %256 = vector.load %arg10[%c0_70, %c0_71] : memref<1x128xf32, #tpu.memory_space<vmem>>, vector<1x128xf32>
    %257 = vector.broadcast %256 : vector<1x128xf32> to vector<16x128xf32>
    %258 = arith.addf %255, %257 : vector<16x128xf32>
    %c0_72 = arith.constant 0 : index
    %c0_73 = arith.constant 0 : index
    %259 = vector.load %arg9[%c0_72, %c0_73] : memref<32x128xf32, #tpu.memory_space<vmem>>, vector<32x128xf32>
    %260 = vector.extract_strided_slice %258 {offsets = [0, 0], sizes = [2, 128], strides = [1, 1]} : vector<16x128xf32> to vector<2x128xf32>
    %cst_74 = arith.constant dense<0.000000e+00> : vector<2x128xf32>
    %261 = tpu.matmul %251, %259, %cst_74 {dimension_numbers = #tpu.dot_dimension_numbers<[1], [0], [0], [1], [0, 0, 1, 1], [], []>} : vector<2x32xf32>, vector<32x128xf32>, vector<2x128xf32> -> vector<2x128xf32>
    %262 = arith.addf %260, %261 : vector<2x128xf32>
    %263 = vector.extract_strided_slice %262 {offsets = [0, 0], sizes = [2, 32], strides = [1, 1]} : vector<2x128xf32> to vector<2x32xf32>
    %264 = arith.negf %263 : vector<2x32xf32>
    %265 = math.exp %264 : vector<2x32xf32>
    %cst_75 = arith.constant 1.000000e+00 : f32
    %266 = vector.broadcast %cst_75 : f32 to vector<2x32xf32>
    %267 = arith.addf %266, %265 : vector<2x32xf32>
    %268 = arith.divf %266, %267 : vector<2x32xf32>
    %269 = vector.extract_strided_slice %262 {offsets = [0, 32], sizes = [2, 32], strides = [1, 1]} : vector<2x128xf32> to vector<2x32xf32>
    %270 = arith.negf %269 : vector<2x32xf32>
    %271 = math.exp %270 : vector<2x32xf32>
    %cst_76 = arith.constant 1.000000e+00 : f32
    %272 = vector.broadcast %cst_76 : f32 to vector<2x32xf32>
    %273 = arith.addf %272, %271 : vector<2x32xf32>
    %274 = arith.divf %272, %273 : vector<2x32xf32>
    %275 = vector.extract_strided_slice %262 {offsets = [0, 64], sizes = [2, 32], strides = [1, 1]} : vector<2x128xf32> to vector<2x32xf32>
    %276 = math.tanh %275 : vector<2x32xf32>
    %277 = vector.extract_strided_slice %262 {offsets = [0, 96], sizes = [2, 32], strides = [1, 1]} : vector<2x128xf32> to vector<2x32xf32>
    %278 = arith.negf %277 : vector<2x32xf32>
    %279 = math.exp %278 : vector<2x32xf32>
    %cst_77 = arith.constant 1.000000e+00 : f32
    %280 = vector.broadcast %cst_77 : f32 to vector<2x32xf32>
    %281 = arith.addf %280, %279 : vector<2x32xf32>
    %282 = arith.divf %280, %281 : vector<2x32xf32>
    %283 = arith.mulf %274, %253 : vector<2x32xf32>
    %284 = arith.mulf %268, %276 : vector<2x32xf32>
    %285 = arith.addf %283, %284 : vector<2x32xf32>
    %286 = math.tanh %285 : vector<2x32xf32>
    %287 = arith.mulf %282, %286 : vector<2x32xf32>
    %c0_78 = arith.constant 0 : index
    %c0_79 = arith.constant 0 : index
    %288 = vector.load %arg26[%c0_78, %c0_79] : memref<16x32xf32, #tpu.memory_space<vmem>>, vector<2x32xf32>
    tpu.vector_store %arg26[%c0_78, %c0_79], %287 {strides = array<i32>} : memref<16x32xf32, #tpu.memory_space<vmem>>, vector<2x32xf32>,
    %289 = vector.extract_strided_slice %258 {offsets = [2, 0], sizes = [2, 128], strides = [1, 1]} : vector<16x128xf32> to vector<2x128xf32>
    %cst_80 = arith.constant dense<0.000000e+00> : vector<2x128xf32>
    %290 = tpu.matmul %287, %259, %cst_80 {dimension_numbers = #tpu.dot_dimension_numbers<[1], [0], [0], [1], [0, 0, 1, 1], [], []>} : vector<2x32xf32>, vector<32x128xf32>, vector<2x128xf32> -> vector<2x128xf32>
    %291 = arith.addf %289, %290 : vector<2x128xf32>
    %292 = vector.extract_strided_slice %291 {offsets = [0, 0], sizes = [2, 32], strides = [1, 1]} : vector<2x128xf32> to vector<2x32xf32>
    %293 = arith.negf %292 : vector<2x32xf32>
    %294 = math.exp %293 : vector<2x32xf32>
    %cst_81 = arith.constant 1.000000e+00 : f32
    %295 = vector.broadcast %cst_81 : f32 to vector<2x32xf32>
    %296 = arith.addf %295, %294 : vector<2x32xf32>
    %297 = arith.divf %295, %296 : vector<2x32xf32>
    %298 = vector.extract_strided_slice %291 {offsets = [0, 32], sizes = [2, 32], strides = [1, 1]} : vector<2x128xf32> to vector<2x32xf32>
    %299 = arith.negf %298 : vector<2x32xf32>
    %300 = math.exp %299 : vector<2x32xf32>
    %cst_82 = arith.constant 1.000000e+00 : f32
    %301 = vector.broadcast %cst_82 : f32 to vector<2x32xf32>
    %302 = arith.addf %301, %300 : vector<2x32xf32>
    %303 = arith.divf %301, %302 : vector<2x32xf32>
    %304 = vector.extract_strided_slice %291 {offsets = [0, 64], sizes = [2, 32], strides = [1, 1]} : vector<2x128xf32> to vector<2x32xf32>
    %305 = math.tanh %304 : vector<2x32xf32>
    %306 = vector.extract_strided_slice %291 {offsets = [0, 96], sizes = [2, 32], strides = [1, 1]} : vector<2x128xf32> to vector<2x32xf32>
    %307 = arith.negf %306 : vector<2x32xf32>
    %308 = math.exp %307 : vector<2x32xf32>
    %cst_83 = arith.constant 1.000000e+00 : f32
    %309 = vector.broadcast %cst_83 : f32 to vector<2x32xf32>
    %310 = arith.addf %309, %308 : vector<2x32xf32>
    %311 = arith.divf %309, %310 : vector<2x32xf32>
    %312 = arith.mulf %303, %285 : vector<2x32xf32>
    %313 = arith.mulf %297, %305 : vector<2x32xf32>
    %314 = arith.addf %312, %313 : vector<2x32xf32>
    %315 = math.tanh %314 : vector<2x32xf32>
    %316 = arith.mulf %311, %315 : vector<2x32xf32>
    %c2_84 = arith.constant 2 : index
    %c0_85 = arith.constant 0 : index
    %317 = vector.load %arg26[%c2_84, %c0_85] : memref<16x32xf32, #tpu.memory_space<vmem>>, vector<2x32xf32>
    tpu.vector_store %arg26[%c2_84, %c0_85], %316 {strides = array<i32>} : memref<16x32xf32, #tpu.memory_space<vmem>>, vector<2x32xf32>,
    %318 = vector.extract_strided_slice %258 {offsets = [4, 0], sizes = [2, 128], strides = [1, 1]} : vector<16x128xf32> to vector<2x128xf32>
    %cst_86 = arith.constant dense<0.000000e+00> : vector<2x128xf32>
    %319 = tpu.matmul %316, %259, %cst_86 {dimension_numbers = #tpu.dot_dimension_numbers<[1], [0], [0], [1], [0, 0, 1, 1], [], []>} : vector<2x32xf32>, vector<32x128xf32>, vector<2x128xf32> -> vector<2x128xf32>
    %320 = arith.addf %318, %319 : vector<2x128xf32>
    %321 = vector.extract_strided_slice %320 {offsets = [0, 0], sizes = [2, 32], strides = [1, 1]} : vector<2x128xf32> to vector<2x32xf32>
    %322 = arith.negf %321 : vector<2x32xf32>
    %323 = math.exp %322 : vector<2x32xf32>
    %cst_87 = arith.constant 1.000000e+00 : f32
    %324 = vector.broadcast %cst_87 : f32 to vector<2x32xf32>
    %325 = arith.addf %324, %323 : vector<2x32xf32>
    %326 = arith.divf %324, %325 : vector<2x32xf32>
    %327 = vector.extract_strided_slice %320 {offsets = [0, 32], sizes = [2, 32], strides = [1, 1]} : vector<2x128xf32> to vector<2x32xf32>
    %328 = arith.negf %327 : vector<2x32xf32>
    %329 = math.exp %328 : vector<2x32xf32>
    %cst_88 = arith.constant 1.000000e+00 : f32
    %330 = vector.broadcast %cst_88 : f32 to vector<2x32xf32>
    %331 = arith.addf %330, %329 : vector<2x32xf32>
    %332 = arith.divf %330, %331 : vector<2x32xf32>
    %333 = vector.extract_strided_slice %320 {offsets = [0, 64], sizes = [2, 32], strides = [1, 1]} : vector<2x128xf32> to vector<2x32xf32>
    %334 = math.tanh %333 : vector<2x32xf32>
    %335 = vector.extract_strided_slice %320 {offsets = [0, 96], sizes = [2, 32], strides = [1, 1]} : vector<2x128xf32> to vector<2x32xf32>
    %336 = arith.negf %335 : vector<2x32xf32>
    %337 = math.exp %336 : vector<2x32xf32>
    %cst_89 = arith.constant 1.000000e+00 : f32
    %338 = vector.broadcast %cst_89 : f32 to vector<2x32xf32>
    %339 = arith.addf %338, %337 : vector<2x32xf32>
    %340 = arith.divf %338, %339 : vector<2x32xf32>
    %341 = arith.mulf %332, %314 : vector<2x32xf32>
    %342 = arith.mulf %326, %334 : vector<2x32xf32>
    %343 = arith.addf %341, %342 : vector<2x32xf32>
    %344 = math.tanh %343 : vector<2x32xf32>
    %345 = arith.mulf %340, %344 : vector<2x32xf32>
    %c4_90 = arith.constant 4 : index
    %c0_91 = arith.constant 0 : index
    %346 = vector.load %arg26[%c4_90, %c0_91] : memref<16x32xf32, #tpu.memory_space<vmem>>, vector<2x32xf32>
    tpu.vector_store %arg26[%c4_90, %c0_91], %345 {strides = array<i32>} : memref<16x32xf32, #tpu.memory_space<vmem>>, vector<2x32xf32>,
    %347 = vector.extract_strided_slice %258 {offsets = [6, 0], sizes = [2, 128], strides = [1, 1]} : vector<16x128xf32> to vector<2x128xf32>
    %cst_92 = arith.constant dense<0.000000e+00> : vector<2x128xf32>
    %348 = tpu.matmul %345, %259, %cst_92 {dimension_numbers = #tpu.dot_dimension_numbers<[1], [0], [0], [1], [0, 0, 1, 1], [], []>} : vector<2x32xf32>, vector<32x128xf32>, vector<2x128xf32> -> vector<2x128xf32>
    %349 = arith.addf %347, %348 : vector<2x128xf32>
    %350 = vector.extract_strided_slice %349 {offsets = [0, 0], sizes = [2, 32], strides = [1, 1]} : vector<2x128xf32> to vector<2x32xf32>
    %351 = arith.negf %350 : vector<2x32xf32>
    %352 = math.exp %351 : vector<2x32xf32>
    %cst_93 = arith.constant 1.000000e+00 : f32
    %353 = vector.broadcast %cst_93 : f32 to vector<2x32xf32>
    %354 = arith.addf %353, %352 : vector<2x32xf32>
    %355 = arith.divf %353, %354 : vector<2x32xf32>
    %356 = vector.extract_strided_slice %349 {offsets = [0, 32], sizes = [2, 32], strides = [1, 1]} : vector<2x128xf32> to vector<2x32xf32>
    %357 = arith.negf %356 : vector<2x32xf32>
    %358 = math.exp %357 : vector<2x32xf32>
    %cst_94 = arith.constant 1.000000e+00 : f32
    %359 = vector.broadcast %cst_94 : f32 to vector<2x32xf32>
    %360 = arith.addf %359, %358 : vector<2x32xf32>
    %361 = arith.divf %359, %360 : vector<2x32xf32>
    %362 = vector.extract_strided_slice %349 {offsets = [0, 64], sizes = [2, 32], strides = [1, 1]} : vector<2x128xf32> to vector<2x32xf32>
    %363 = math.tanh %362 : vector<2x32xf32>
    %364 = vector.extract_strided_slice %349 {offsets = [0, 96], sizes = [2, 32], strides = [1, 1]} : vector<2x128xf32> to vector<2x32xf32>
    %365 = arith.negf %364 : vector<2x32xf32>
    %366 = math.exp %365 : vector<2x32xf32>
    %cst_95 = arith.constant 1.000000e+00 : f32
    %367 = vector.broadcast %cst_95 : f32 to vector<2x32xf32>
    %368 = arith.addf %367, %366 : vector<2x32xf32>
    %369 = arith.divf %367, %368 : vector<2x32xf32>
    %370 = arith.mulf %361, %343 : vector<2x32xf32>
    %371 = arith.mulf %355, %363 : vector<2x32xf32>
    %372 = arith.addf %370, %371 : vector<2x32xf32>
    %373 = math.tanh %372 : vector<2x32xf32>
    %374 = arith.mulf %369, %373 : vector<2x32xf32>
    %c6_96 = arith.constant 6 : index
    %c0_97 = arith.constant 0 : index
    %375 = vector.load %arg26[%c6_96, %c0_97] : memref<16x32xf32, #tpu.memory_space<vmem>>, vector<2x32xf32>
    tpu.vector_store %arg26[%c6_96, %c0_97], %374 {strides = array<i32>} : memref<16x32xf32, #tpu.memory_space<vmem>>, vector<2x32xf32>,
    %376 = vector.extract_strided_slice %258 {offsets = [8, 0], sizes = [2, 128], strides = [1, 1]} : vector<16x128xf32> to vector<2x128xf32>
    %cst_98 = arith.constant dense<0.000000e+00> : vector<2x128xf32>
    %377 = tpu.matmul %374, %259, %cst_98 {dimension_numbers = #tpu.dot_dimension_numbers<[1], [0], [0], [1], [0, 0, 1, 1], [], []>} : vector<2x32xf32>, vector<32x128xf32>, vector<2x128xf32> -> vector<2x128xf32>
    %378 = arith.addf %376, %377 : vector<2x128xf32>
    %379 = vector.extract_strided_slice %378 {offsets = [0, 0], sizes = [2, 32], strides = [1, 1]} : vector<2x128xf32> to vector<2x32xf32>
    %380 = arith.negf %379 : vector<2x32xf32>
    %381 = math.exp %380 : vector<2x32xf32>
    %cst_99 = arith.constant 1.000000e+00 : f32
    %382 = vector.broadcast %cst_99 : f32 to vector<2x32xf32>
    %383 = arith.addf %382, %381 : vector<2x32xf32>
    %384 = arith.divf %382, %383 : vector<2x32xf32>
    %385 = vector.extract_strided_slice %378 {offsets = [0, 32], sizes = [2, 32], strides = [1, 1]} : vector<2x128xf32> to vector<2x32xf32>
    %386 = arith.negf %385 : vector<2x32xf32>
    %387 = math.exp %386 : vector<2x32xf32>
    %cst_100 = arith.constant 1.000000e+00 : f32
    %388 = vector.broadcast %cst_100 : f32 to vector<2x32xf32>
    %389 = arith.addf %388, %387 : vector<2x32xf32>
    %390 = arith.divf %388, %389 : vector<2x32xf32>
    %391 = vector.extract_strided_slice %378 {offsets = [0, 64], sizes = [2, 32], strides = [1, 1]} : vector<2x128xf32> to vector<2x32xf32>
    %392 = math.tanh %391 : vector<2x32xf32>
    %393 = vector.extract_strided_slice %378 {offsets = [0, 96], sizes = [2, 32], strides = [1, 1]} : vector<2x128xf32> to vector<2x32xf32>
    %394 = arith.negf %393 : vector<2x32xf32>
    %395 = math.exp %394 : vector<2x32xf32>
    %cst_101 = arith.constant 1.000000e+00 : f32
    %396 = vector.broadcast %cst_101 : f32 to vector<2x32xf32>
    %397 = arith.addf %396, %395 : vector<2x32xf32>
    %398 = arith.divf %396, %397 : vector<2x32xf32>
    %399 = arith.mulf %390, %372 : vector<2x32xf32>
    %400 = arith.mulf %384, %392 : vector<2x32xf32>
    %401 = arith.addf %399, %400 : vector<2x32xf32>
    %402 = math.tanh %401 : vector<2x32xf32>
    %403 = arith.mulf %398, %402 : vector<2x32xf32>
    %c8_102 = arith.constant 8 : index
    %c0_103 = arith.constant 0 : index
    %404 = vector.load %arg26[%c8_102, %c0_103] : memref<16x32xf32, #tpu.memory_space<vmem>>, vector<2x32xf32>
    tpu.vector_store %arg26[%c8_102, %c0_103], %403 {strides = array<i32>} : memref<16x32xf32, #tpu.memory_space<vmem>>, vector<2x32xf32>,
    %405 = vector.extract_strided_slice %258 {offsets = [10, 0], sizes = [2, 128], strides = [1, 1]} : vector<16x128xf32> to vector<2x128xf32>
    %cst_104 = arith.constant dense<0.000000e+00> : vector<2x128xf32>
    %406 = tpu.matmul %403, %259, %cst_104 {dimension_numbers = #tpu.dot_dimension_numbers<[1], [0], [0], [1], [0, 0, 1, 1], [], []>} : vector<2x32xf32>, vector<32x128xf32>, vector<2x128xf32> -> vector<2x128xf32>
    %407 = arith.addf %405, %406 : vector<2x128xf32>
    %408 = vector.extract_strided_slice %407 {offsets = [0, 0], sizes = [2, 32], strides = [1, 1]} : vector<2x128xf32> to vector<2x32xf32>
    %409 = arith.negf %408 : vector<2x32xf32>
    %410 = math.exp %409 : vector<2x32xf32>
    %cst_105 = arith.constant 1.000000e+00 : f32
    %411 = vector.broadcast %cst_105 : f32 to vector<2x32xf32>
    %412 = arith.addf %411, %410 : vector<2x32xf32>
    %413 = arith.divf %411, %412 : vector<2x32xf32>
    %414 = vector.extract_strided_slice %407 {offsets = [0, 32], sizes = [2, 32], strides = [1, 1]} : vector<2x128xf32> to vector<2x32xf32>
    %415 = arith.negf %414 : vector<2x32xf32>
    %416 = math.exp %415 : vector<2x32xf32>
    %cst_106 = arith.constant 1.000000e+00 : f32
    %417 = vector.broadcast %cst_106 : f32 to vector<2x32xf32>
    %418 = arith.addf %417, %416 : vector<2x32xf32>
    %419 = arith.divf %417, %418 : vector<2x32xf32>
    %420 = vector.extract_strided_slice %407 {offsets = [0, 64], sizes = [2, 32], strides = [1, 1]} : vector<2x128xf32> to vector<2x32xf32>
    %421 = math.tanh %420 : vector<2x32xf32>
    %422 = vector.extract_strided_slice %407 {offsets = [0, 96], sizes = [2, 32], strides = [1, 1]} : vector<2x128xf32> to vector<2x32xf32>
    %423 = arith.negf %422 : vector<2x32xf32>
    %424 = math.exp %423 : vector<2x32xf32>
    %cst_107 = arith.constant 1.000000e+00 : f32
    %425 = vector.broadcast %cst_107 : f32 to vector<2x32xf32>
    %426 = arith.addf %425, %424 : vector<2x32xf32>
    %427 = arith.divf %425, %426 : vector<2x32xf32>
    %428 = arith.mulf %419, %401 : vector<2x32xf32>
    %429 = arith.mulf %413, %421 : vector<2x32xf32>
    %430 = arith.addf %428, %429 : vector<2x32xf32>
    %431 = math.tanh %430 : vector<2x32xf32>
    %432 = arith.mulf %427, %431 : vector<2x32xf32>
    %c10_108 = arith.constant 10 : index
    %c0_109 = arith.constant 0 : index
    %433 = vector.load %arg26[%c10_108, %c0_109] : memref<16x32xf32, #tpu.memory_space<vmem>>, vector<2x32xf32>
    tpu.vector_store %arg26[%c10_108, %c0_109], %432 {strides = array<i32>} : memref<16x32xf32, #tpu.memory_space<vmem>>, vector<2x32xf32>,
    %434 = vector.extract_strided_slice %258 {offsets = [12, 0], sizes = [2, 128], strides = [1, 1]} : vector<16x128xf32> to vector<2x128xf32>
    %cst_110 = arith.constant dense<0.000000e+00> : vector<2x128xf32>
    %435 = tpu.matmul %432, %259, %cst_110 {dimension_numbers = #tpu.dot_dimension_numbers<[1], [0], [0], [1], [0, 0, 1, 1], [], []>} : vector<2x32xf32>, vector<32x128xf32>, vector<2x128xf32> -> vector<2x128xf32>
    %436 = arith.addf %434, %435 : vector<2x128xf32>
    %437 = vector.extract_strided_slice %436 {offsets = [0, 0], sizes = [2, 32], strides = [1, 1]} : vector<2x128xf32> to vector<2x32xf32>
    %438 = arith.negf %437 : vector<2x32xf32>
    %439 = math.exp %438 : vector<2x32xf32>
    %cst_111 = arith.constant 1.000000e+00 : f32
    %440 = vector.broadcast %cst_111 : f32 to vector<2x32xf32>
    %441 = arith.addf %440, %439 : vector<2x32xf32>
    %442 = arith.divf %440, %441 : vector<2x32xf32>
    %443 = vector.extract_strided_slice %436 {offsets = [0, 32], sizes = [2, 32], strides = [1, 1]} : vector<2x128xf32> to vector<2x32xf32>
    %444 = arith.negf %443 : vector<2x32xf32>
    %445 = math.exp %444 : vector<2x32xf32>
    %cst_112 = arith.constant 1.000000e+00 : f32
    %446 = vector.broadcast %cst_112 : f32 to vector<2x32xf32>
    %447 = arith.addf %446, %445 : vector<2x32xf32>
    %448 = arith.divf %446, %447 : vector<2x32xf32>
    %449 = vector.extract_strided_slice %436 {offsets = [0, 64], sizes = [2, 32], strides = [1, 1]} : vector<2x128xf32> to vector<2x32xf32>
    %450 = math.tanh %449 : vector<2x32xf32>
    %451 = vector.extract_strided_slice %436 {offsets = [0, 96], sizes = [2, 32], strides = [1, 1]} : vector<2x128xf32> to vector<2x32xf32>
    %452 = arith.negf %451 : vector<2x32xf32>
    %453 = math.exp %452 : vector<2x32xf32>
    %cst_113 = arith.constant 1.000000e+00 : f32
    %454 = vector.broadcast %cst_113 : f32 to vector<2x32xf32>
    %455 = arith.addf %454, %453 : vector<2x32xf32>
    %456 = arith.divf %454, %455 : vector<2x32xf32>
    %457 = arith.mulf %448, %430 : vector<2x32xf32>
    %458 = arith.mulf %442, %450 : vector<2x32xf32>
    %459 = arith.addf %457, %458 : vector<2x32xf32>
    %460 = math.tanh %459 : vector<2x32xf32>
    %461 = arith.mulf %456, %460 : vector<2x32xf32>
    %c12_114 = arith.constant 12 : index
    %c0_115 = arith.constant 0 : index
    %462 = vector.load %arg26[%c12_114, %c0_115] : memref<16x32xf32, #tpu.memory_space<vmem>>, vector<2x32xf32>
    tpu.vector_store %arg26[%c12_114, %c0_115], %461 {strides = array<i32>} : memref<16x32xf32, #tpu.memory_space<vmem>>, vector<2x32xf32>,
    %463 = vector.extract_strided_slice %258 {offsets = [14, 0], sizes = [2, 128], strides = [1, 1]} : vector<16x128xf32> to vector<2x128xf32>
    %cst_116 = arith.constant dense<0.000000e+00> : vector<2x128xf32>
    %464 = tpu.matmul %461, %259, %cst_116 {dimension_numbers = #tpu.dot_dimension_numbers<[1], [0], [0], [1], [0, 0, 1, 1], [], []>} : vector<2x32xf32>, vector<32x128xf32>, vector<2x128xf32> -> vector<2x128xf32>
    %465 = arith.addf %463, %464 : vector<2x128xf32>
    %466 = vector.extract_strided_slice %465 {offsets = [0, 0], sizes = [2, 32], strides = [1, 1]} : vector<2x128xf32> to vector<2x32xf32>
    %467 = arith.negf %466 : vector<2x32xf32>
    %468 = math.exp %467 : vector<2x32xf32>
    %cst_117 = arith.constant 1.000000e+00 : f32
    %469 = vector.broadcast %cst_117 : f32 to vector<2x32xf32>
    %470 = arith.addf %469, %468 : vector<2x32xf32>
    %471 = arith.divf %469, %470 : vector<2x32xf32>
    %472 = vector.extract_strided_slice %465 {offsets = [0, 32], sizes = [2, 32], strides = [1, 1]} : vector<2x128xf32> to vector<2x32xf32>
    %473 = arith.negf %472 : vector<2x32xf32>
    %474 = math.exp %473 : vector<2x32xf32>
    %cst_118 = arith.constant 1.000000e+00 : f32
    %475 = vector.broadcast %cst_118 : f32 to vector<2x32xf32>
    %476 = arith.addf %475, %474 : vector<2x32xf32>
    %477 = arith.divf %475, %476 : vector<2x32xf32>
    %478 = vector.extract_strided_slice %465 {offsets = [0, 64], sizes = [2, 32], strides = [1, 1]} : vector<2x128xf32> to vector<2x32xf32>
    %479 = math.tanh %478 : vector<2x32xf32>
    %480 = vector.extract_strided_slice %465 {offsets = [0, 96], sizes = [2, 32], strides = [1, 1]} : vector<2x128xf32> to vector<2x32xf32>
    %481 = arith.negf %480 : vector<2x32xf32>
    %482 = math.exp %481 : vector<2x32xf32>
    %cst_119 = arith.constant 1.000000e+00 : f32
    %483 = vector.broadcast %cst_119 : f32 to vector<2x32xf32>
    %484 = arith.addf %483, %482 : vector<2x32xf32>
    %485 = arith.divf %483, %484 : vector<2x32xf32>
    %486 = arith.mulf %477, %459 : vector<2x32xf32>
    %487 = arith.mulf %471, %479 : vector<2x32xf32>
    %488 = arith.addf %486, %487 : vector<2x32xf32>
    %489 = math.tanh %488 : vector<2x32xf32>
    %490 = arith.mulf %485, %489 : vector<2x32xf32>
    %c14_120 = arith.constant 14 : index
    %c0_121 = arith.constant 0 : index
    %491 = vector.load %arg26[%c14_120, %c0_121] : memref<16x32xf32, #tpu.memory_space<vmem>>, vector<2x32xf32>
    tpu.vector_store %arg26[%c14_120, %c0_121], %490 {strides = array<i32>} : memref<16x32xf32, #tpu.memory_space<vmem>>, vector<2x32xf32>,
    %c1_122 = arith.constant 1 : index
    %c0_123 = arith.constant 0 : index
    %c0_124 = arith.constant 0 : index
    %492 = vector.load %arg22[%c1_122, %c0_123, %c0_124] : memref<2x2x32xf32, #tpu.memory_space<vmem>>, vector<1x2x32xf32>
    %493 = vector.shape_cast %492 : vector<1x2x32xf32> to vector<2x32xf32>
    %494 = vector.shape_cast %490 : vector<2x32xf32> to vector<1x2x32xf32>
    tpu.vector_store %arg22[%c1_122, %c0_123, %c0_124], %494 {strides = array<i32>} : memref<2x2x32xf32, #tpu.memory_space<vmem>>, vector<1x2x32xf32>,
    %c1_125 = arith.constant 1 : index
    %c0_126 = arith.constant 0 : index
    %c0_127 = arith.constant 0 : index
    %495 = vector.load %arg23[%c1_125, %c0_126, %c0_127] : memref<2x2x32xf32, #tpu.memory_space<vmem>>, vector<1x2x32xf32>
    %496 = vector.shape_cast %495 : vector<1x2x32xf32> to vector<2x32xf32>
    %497 = vector.shape_cast %488 : vector<2x32xf32> to vector<1x2x32xf32>
    tpu.vector_store %arg23[%c1_125, %c0_126, %c0_127], %497 {strides = array<i32>} : memref<2x2x32xf32, #tpu.memory_space<vmem>>, vector<1x2x32xf32>,
    %c0_128 = arith.constant 0 : index
    %c0_129 = arith.constant 0 : index
    %498 = vector.load %arg26[%c0_128, %c0_129] : memref<16x32xf32, #tpu.memory_space<vmem>>, vector<16x32xf32>
    %c0_130 = arith.constant 0 : index
    %c0_131 = arith.constant 0 : index
    %499 = vector.load %arg11[%c0_130, %c0_131] : memref<32x16xf32, #tpu.memory_space<vmem>>, vector<32x16xf32>
    %cst_132 = arith.constant dense<0.000000e+00> : vector<16x16xf32>
    %500 = tpu.matmul %498, %499, %cst_132 {dimension_numbers = #tpu.dot_dimension_numbers<[1], [0], [0], [1], [0, 0, 1, 1], [], []>} : vector<16x32xf32>, vector<32x16xf32>, vector<16x16xf32> -> vector<16x16xf32>
    %c0_133 = arith.constant 0 : index
    %c0_134 = arith.constant 0 : index
    %501 = vector.load %arg12[%c0_133, %c0_134] : memref<1x16xf32, #tpu.memory_space<vmem>>, vector<1x16xf32>
    %502 = vector.broadcast %501 : vector<1x16xf32> to vector<16x16xf32>
    %503 = arith.addf %500, %502 : vector<16x16xf32>
    %cst_135 = arith.constant 0.000000e+00 : f32
    %504 = vector.broadcast %cst_135 : f32 to vector<16x16xf32>
    %505 = arith.maximumf %503, %504 : vector<16x16xf32>
    %c0_136 = arith.constant 0 : index
    %c0_137 = arith.constant 0 : index
    %506 = vector.load %arg13[%c0_136, %c0_137] : memref<16x32xf32, #tpu.memory_space<vmem>>, vector<16x32xf32>
    %cst_138 = arith.constant dense<0.000000e+00> : vector<16x32xf32>
    %507 = tpu.matmul %505, %506, %cst_138 {dimension_numbers = #tpu.dot_dimension_numbers<[1], [0], [0], [1], [0, 0, 1, 1], [], []>} : vector<16x16xf32>, vector<16x32xf32>, vector<16x32xf32> -> vector<16x32xf32>
    %c0_139 = arith.constant 0 : index
    %c0_140 = arith.constant 0 : index
    %508 = vector.load %arg14[%c0_139, %c0_140] : memref<1x32xf32, #tpu.memory_space<vmem>>, vector<1x32xf32>
    %509 = vector.broadcast %508 : vector<1x32xf32> to vector<16x32xf32>
    %510 = arith.addf %507, %509 : vector<16x32xf32>
    %cst_141 = arith.constant 0.000000e+00 : f32
    %511 = vector.broadcast %cst_141 : f32 to vector<16x32xf32>
    %512 = arith.maximumf %510, %511 : vector<16x32xf32>
    %c0_142 = arith.constant 0 : index
    %c0_143 = arith.constant 0 : index
    %c0_144 = arith.constant 0 : index
    %513 = vector.load %arg3[%c0_142, %c0_143, %c0_144] : memref<2x2x8xf32, #tpu.memory_space<vmem>>, vector<1x2x8xf32>
    %514 = vector.shape_cast %513 : vector<1x2x8xf32> to vector<2x8xf32>
    %c0_145 = arith.constant 0 : index
    %c0_146 = arith.constant 0 : index
    %c0_147 = arith.constant 0 : index
    %515 = vector.load %arg4[%c0_145, %c0_146, %c0_147] : memref<2x2x8xf32, #tpu.memory_space<vmem>>, vector<1x2x8xf32>
    %516 = vector.shape_cast %515 : vector<1x2x8xf32> to vector<2x8xf32>
    %c0_148 = arith.constant 0 : index
    %c0_149 = arith.constant 0 : index
    %517 = vector.load %arg15[%c0_148, %c0_149] : memref<32x32xf32, #tpu.memory_space<vmem>>, vector<32x32xf32>
    %cst_150 = arith.constant dense<0.000000e+00> : vector<16x32xf32>
    %518 = tpu.matmul %512, %517, %cst_150 {dimension_numbers = #tpu.dot_dimension_numbers<[1], [0], [0], [1], [0, 0, 1, 1], [], []>} : vector<16x32xf32>, vector<32x32xf32>, vector<16x32xf32> -> vector<16x32xf32>
    %c0_151 = arith.constant 0 : index
    %c0_152 = arith.constant 0 : index
    %519 = vector.load %arg17[%c0_151, %c0_152] : memref<1x32xf32, #tpu.memory_space<vmem>>, vector<1x32xf32>
    %520 = vector.broadcast %519 : vector<1x32xf32> to vector<16x32xf32>
    %521 = arith.addf %518, %520 : vector<16x32xf32>
    %c0_153 = arith.constant 0 : index
    %c0_154 = arith.constant 0 : index
    %522 = vector.load %arg16[%c0_153, %c0_154] : memref<8x32xf32, #tpu.memory_space<vmem>>, vector<8x32xf32>
    %523 = vector.extract_strided_slice %521 {offsets = [0, 0], sizes = [2, 32], strides = [1, 1]} : vector<16x32xf32> to vector<2x32xf32>
    %cst_155 = arith.constant dense<0.000000e+00> : vector<2x32xf32>
    %524 = tpu.matmul %514, %522, %cst_155 {dimension_numbers = #tpu.dot_dimension_numbers<[1], [0], [0], [1], [0, 0, 1, 1], [], []>} : vector<2x8xf32>, vector<8x32xf32>, vector<2x32xf32> -> vector<2x32xf32>
    %525 = arith.addf %523, %524 : vector<2x32xf32>
    %526 = vector.extract_strided_slice %525 {offsets = [0, 0], sizes = [2, 8], strides = [1, 1]} : vector<2x32xf32> to vector<2x8xf32>
    %527 = arith.negf %526 : vector<2x8xf32>
    %528 = math.exp %527 : vector<2x8xf32>
    %cst_156 = arith.constant 1.000000e+00 : f32
    %529 = vector.broadcast %cst_156 : f32 to vector<2x8xf32>
    %530 = arith.addf %529, %528 : vector<2x8xf32>
    %531 = arith.divf %529, %530 : vector<2x8xf32>
    %532 = vector.extract_strided_slice %525 {offsets = [0, 8], sizes = [2, 8], strides = [1, 1]} : vector<2x32xf32> to vector<2x8xf32>
    %533 = arith.negf %532 : vector<2x8xf32>
    %534 = math.exp %533 : vector<2x8xf32>
    %cst_157 = arith.constant 1.000000e+00 : f32
    %535 = vector.broadcast %cst_157 : f32 to vector<2x8xf32>
    %536 = arith.addf %535, %534 : vector<2x8xf32>
    %537 = arith.divf %535, %536 : vector<2x8xf32>
    %538 = vector.extract_strided_slice %525 {offsets = [0, 16], sizes = [2, 8], strides = [1, 1]} : vector<2x32xf32> to vector<2x8xf32>
    %539 = math.tanh %538 : vector<2x8xf32>
    %540 = vector.extract_strided_slice %525 {offsets = [0, 24], sizes = [2, 8], strides = [1, 1]} : vector<2x32xf32> to vector<2x8xf32>
    %541 = arith.negf %540 : vector<2x8xf32>
    %542 = math.exp %541 : vector<2x8xf32>
    %cst_158 = arith.constant 1.000000e+00 : f32
    %543 = vector.broadcast %cst_158 : f32 to vector<2x8xf32>
    %544 = arith.addf %543, %542 : vector<2x8xf32>
    %545 = arith.divf %543, %544 : vector<2x8xf32>
    %546 = arith.mulf %537, %516 : vector<2x8xf32>
    %547 = arith.mulf %531, %539 : vector<2x8xf32>
    %548 = arith.addf %546, %547 : vector<2x8xf32>
    %549 = math.tanh %548 : vector<2x8xf32>
    %550 = arith.mulf %545, %549 : vector<2x8xf32>
    %c0_159 = arith.constant 0 : index
    %c0_160 = arith.constant 0 : index
    %551 = vector.load %arg27[%c0_159, %c0_160] : memref<16x8xf32, #tpu.memory_space<vmem>>, vector<2x8xf32>
    tpu.vector_store %arg27[%c0_159, %c0_160], %550 {strides = array<i32>} : memref<16x8xf32, #tpu.memory_space<vmem>>, vector<2x8xf32>,
    %552 = vector.extract_strided_slice %521 {offsets = [2, 0], sizes = [2, 32], strides = [1, 1]} : vector<16x32xf32> to vector<2x32xf32>
    %cst_161 = arith.constant dense<0.000000e+00> : vector<2x32xf32>
    %553 = tpu.matmul %550, %522, %cst_161 {dimension_numbers = #tpu.dot_dimension_numbers<[1], [0], [0], [1], [0, 0, 1, 1], [], []>} : vector<2x8xf32>, vector<8x32xf32>, vector<2x32xf32> -> vector<2x32xf32>
    %554 = arith.addf %552, %553 : vector<2x32xf32>
    %555 = vector.extract_strided_slice %554 {offsets = [0, 0], sizes = [2, 8], strides = [1, 1]} : vector<2x32xf32> to vector<2x8xf32>
    %556 = arith.negf %555 : vector<2x8xf32>
    %557 = math.exp %556 : vector<2x8xf32>
    %cst_162 = arith.constant 1.000000e+00 : f32
    %558 = vector.broadcast %cst_162 : f32 to vector<2x8xf32>
    %559 = arith.addf %558, %557 : vector<2x8xf32>
    %560 = arith.divf %558, %559 : vector<2x8xf32>
    %561 = vector.extract_strided_slice %554 {offsets = [0, 8], sizes = [2, 8], strides = [1, 1]} : vector<2x32xf32> to vector<2x8xf32>
    %562 = arith.negf %561 : vector<2x8xf32>
    %563 = math.exp %562 : vector<2x8xf32>
    %cst_163 = arith.constant 1.000000e+00 : f32
    %564 = vector.broadcast %cst_163 : f32 to vector<2x8xf32>
    %565 = arith.addf %564, %563 : vector<2x8xf32>
    %566 = arith.divf %564, %565 : vector<2x8xf32>
    %567 = vector.extract_strided_slice %554 {offsets = [0, 16], sizes = [2, 8], strides = [1, 1]} : vector<2x32xf32> to vector<2x8xf32>
    %568 = math.tanh %567 : vector<2x8xf32>
    %569 = vector.extract_strided_slice %554 {offsets = [0, 24], sizes = [2, 8], strides = [1, 1]} : vector<2x32xf32> to vector<2x8xf32>
    %570 = arith.negf %569 : vector<2x8xf32>
    %571 = math.exp %570 : vector<2x8xf32>
    %cst_164 = arith.constant 1.000000e+00 : f32
    %572 = vector.broadcast %cst_164 : f32 to vector<2x8xf32>
    %573 = arith.addf %572, %571 : vector<2x8xf32>
    %574 = arith.divf %572, %573 : vector<2x8xf32>
    %575 = arith.mulf %566, %548 : vector<2x8xf32>
    %576 = arith.mulf %560, %568 : vector<2x8xf32>
    %577 = arith.addf %575, %576 : vector<2x8xf32>
    %578 = math.tanh %577 : vector<2x8xf32>
    %579 = arith.mulf %574, %578 : vector<2x8xf32>
    %c2_165 = arith.constant 2 : index
    %c0_166 = arith.constant 0 : index
    %580 = vector.load %arg27[%c2_165, %c0_166] : memref<16x8xf32, #tpu.memory_space<vmem>>, vector<2x8xf32>
    tpu.vector_store %arg27[%c2_165, %c0_166], %579 {strides = array<i32>} : memref<16x8xf32, #tpu.memory_space<vmem>>, vector<2x8xf32>,
    %581 = vector.extract_strided_slice %521 {offsets = [4, 0], sizes = [2, 32], strides = [1, 1]} : vector<16x32xf32> to vector<2x32xf32>
    %cst_167 = arith.constant dense<0.000000e+00> : vector<2x32xf32>
    %582 = tpu.matmul %579, %522, %cst_167 {dimension_numbers = #tpu.dot_dimension_numbers<[1], [0], [0], [1], [0, 0, 1, 1], [], []>} : vector<2x8xf32>, vector<8x32xf32>, vector<2x32xf32> -> vector<2x32xf32>
    %583 = arith.addf %581, %582 : vector<2x32xf32>
    %584 = vector.extract_strided_slice %583 {offsets = [0, 0], sizes = [2, 8], strides = [1, 1]} : vector<2x32xf32> to vector<2x8xf32>
    %585 = arith.negf %584 : vector<2x8xf32>
    %586 = math.exp %585 : vector<2x8xf32>
    %cst_168 = arith.constant 1.000000e+00 : f32
    %587 = vector.broadcast %cst_168 : f32 to vector<2x8xf32>
    %588 = arith.addf %587, %586 : vector<2x8xf32>
    %589 = arith.divf %587, %588 : vector<2x8xf32>
    %590 = vector.extract_strided_slice %583 {offsets = [0, 8], sizes = [2, 8], strides = [1, 1]} : vector<2x32xf32> to vector<2x8xf32>
    %591 = arith.negf %590 : vector<2x8xf32>
    %592 = math.exp %591 : vector<2x8xf32>
    %cst_169 = arith.constant 1.000000e+00 : f32
    %593 = vector.broadcast %cst_169 : f32 to vector<2x8xf32>
    %594 = arith.addf %593, %592 : vector<2x8xf32>
    %595 = arith.divf %593, %594 : vector<2x8xf32>
    %596 = vector.extract_strided_slice %583 {offsets = [0, 16], sizes = [2, 8], strides = [1, 1]} : vector<2x32xf32> to vector<2x8xf32>
    %597 = math.tanh %596 : vector<2x8xf32>
    %598 = vector.extract_strided_slice %583 {offsets = [0, 24], sizes = [2, 8], strides = [1, 1]} : vector<2x32xf32> to vector<2x8xf32>
    %599 = arith.negf %598 : vector<2x8xf32>
    %600 = math.exp %599 : vector<2x8xf32>
    %cst_170 = arith.constant 1.000000e+00 : f32
    %601 = vector.broadcast %cst_170 : f32 to vector<2x8xf32>
    %602 = arith.addf %601, %600 : vector<2x8xf32>
    %603 = arith.divf %601, %602 : vector<2x8xf32>
    %604 = arith.mulf %595, %577 : vector<2x8xf32>
    %605 = arith.mulf %589, %597 : vector<2x8xf32>
    %606 = arith.addf %604, %605 : vector<2x8xf32>
    %607 = math.tanh %606 : vector<2x8xf32>
    %608 = arith.mulf %603, %607 : vector<2x8xf32>
    %c4_171 = arith.constant 4 : index
    %c0_172 = arith.constant 0 : index
    %609 = vector.load %arg27[%c4_171, %c0_172] : memref<16x8xf32, #tpu.memory_space<vmem>>, vector<2x8xf32>
    tpu.vector_store %arg27[%c4_171, %c0_172], %608 {strides = array<i32>} : memref<16x8xf32, #tpu.memory_space<vmem>>, vector<2x8xf32>,
    %610 = vector.extract_strided_slice %521 {offsets = [6, 0], sizes = [2, 32], strides = [1, 1]} : vector<16x32xf32> to vector<2x32xf32>
    %cst_173 = arith.constant dense<0.000000e+00> : vector<2x32xf32>
    %611 = tpu.matmul %608, %522, %cst_173 {dimension_numbers = #tpu.dot_dimension_numbers<[1], [0], [0], [1], [0, 0, 1, 1], [], []>} : vector<2x8xf32>, vector<8x32xf32>, vector<2x32xf32> -> vector<2x32xf32>
    %612 = arith.addf %610, %611 : vector<2x32xf32>
    %613 = vector.extract_strided_slice %612 {offsets = [0, 0], sizes = [2, 8], strides = [1, 1]} : vector<2x32xf32> to vector<2x8xf32>
    %614 = arith.negf %613 : vector<2x8xf32>
    %615 = math.exp %614 : vector<2x8xf32>
    %cst_174 = arith.constant 1.000000e+00 : f32
    %616 = vector.broadcast %cst_174 : f32 to vector<2x8xf32>
    %617 = arith.addf %616, %615 : vector<2x8xf32>
    %618 = arith.divf %616, %617 : vector<2x8xf32>
    %619 = vector.extract_strided_slice %612 {offsets = [0, 8], sizes = [2, 8], strides = [1, 1]} : vector<2x32xf32> to vector<2x8xf32>
    %620 = arith.negf %619 : vector<2x8xf32>
    %621 = math.exp %620 : vector<2x8xf32>
    %cst_175 = arith.constant 1.000000e+00 : f32
    %622 = vector.broadcast %cst_175 : f32 to vector<2x8xf32>
    %623 = arith.addf %622, %621 : vector<2x8xf32>
    %624 = arith.divf %622, %623 : vector<2x8xf32>
    %625 = vector.extract_strided_slice %612 {offsets = [0, 16], sizes = [2, 8], strides = [1, 1]} : vector<2x32xf32> to vector<2x8xf32>
    %626 = math.tanh %625 : vector<2x8xf32>
    %627 = vector.extract_strided_slice %612 {offsets = [0, 24], sizes = [2, 8], strides = [1, 1]} : vector<2x32xf32> to vector<2x8xf32>
    %628 = arith.negf %627 : vector<2x8xf32>
    %629 = math.exp %628 : vector<2x8xf32>
    %cst_176 = arith.constant 1.000000e+00 : f32
    %630 = vector.broadcast %cst_176 : f32 to vector<2x8xf32>
    %631 = arith.addf %630, %629 : vector<2x8xf32>
    %632 = arith.divf %630, %631 : vector<2x8xf32>
    %633 = arith.mulf %624, %606 : vector<2x8xf32>
    %634 = arith.mulf %618, %626 : vector<2x8xf32>
    %635 = arith.addf %633, %634 : vector<2x8xf32>
    %636 = math.tanh %635 : vector<2x8xf32>
    %637 = arith.mulf %632, %636 : vector<2x8xf32>
    %c6_177 = arith.constant 6 : index
    %c0_178 = arith.constant 0 : index
    %638 = vector.load %arg27[%c6_177, %c0_178] : memref<16x8xf32, #tpu.memory_space<vmem>>, vector<2x8xf32>
    tpu.vector_store %arg27[%c6_177, %c0_178], %637 {strides = array<i32>} : memref<16x8xf32, #tpu.memory_space<vmem>>, vector<2x8xf32>,
    %639 = vector.extract_strided_slice %521 {offsets = [8, 0], sizes = [2, 32], strides = [1, 1]} : vector<16x32xf32> to vector<2x32xf32>
    %cst_179 = arith.constant dense<0.000000e+00> : vector<2x32xf32>
    %640 = tpu.matmul %637, %522, %cst_179 {dimension_numbers = #tpu.dot_dimension_numbers<[1], [0], [0], [1], [0, 0, 1, 1], [], []>} : vector<2x8xf32>, vector<8x32xf32>, vector<2x32xf32> -> vector<2x32xf32>
    %641 = arith.addf %639, %640 : vector<2x32xf32>
    %642 = vector.extract_strided_slice %641 {offsets = [0, 0], sizes = [2, 8], strides = [1, 1]} : vector<2x32xf32> to vector<2x8xf32>
    %643 = arith.negf %642 : vector<2x8xf32>
    %644 = math.exp %643 : vector<2x8xf32>
    %cst_180 = arith.constant 1.000000e+00 : f32
    %645 = vector.broadcast %cst_180 : f32 to vector<2x8xf32>
    %646 = arith.addf %645, %644 : vector<2x8xf32>
    %647 = arith.divf %645, %646 : vector<2x8xf32>
    %648 = vector.extract_strided_slice %641 {offsets = [0, 8], sizes = [2, 8], strides = [1, 1]} : vector<2x32xf32> to vector<2x8xf32>
    %649 = arith.negf %648 : vector<2x8xf32>
    %650 = math.exp %649 : vector<2x8xf32>
    %cst_181 = arith.constant 1.000000e+00 : f32
    %651 = vector.broadcast %cst_181 : f32 to vector<2x8xf32>
    %652 = arith.addf %651, %650 : vector<2x8xf32>
    %653 = arith.divf %651, %652 : vector<2x8xf32>
    %654 = vector.extract_strided_slice %641 {offsets = [0, 16], sizes = [2, 8], strides = [1, 1]} : vector<2x32xf32> to vector<2x8xf32>
    %655 = math.tanh %654 : vector<2x8xf32>
    %656 = vector.extract_strided_slice %641 {offsets = [0, 24], sizes = [2, 8], strides = [1, 1]} : vector<2x32xf32> to vector<2x8xf32>
    %657 = arith.negf %656 : vector<2x8xf32>
    %658 = math.exp %657 : vector<2x8xf32>
    %cst_182 = arith.constant 1.000000e+00 : f32
    %659 = vector.broadcast %cst_182 : f32 to vector<2x8xf32>
    %660 = arith.addf %659, %658 : vector<2x8xf32>
    %661 = arith.divf %659, %660 : vector<2x8xf32>
    %662 = arith.mulf %653, %635 : vector<2x8xf32>
    %663 = arith.mulf %647, %655 : vector<2x8xf32>
    %664 = arith.addf %662, %663 : vector<2x8xf32>
    %665 = math.tanh %664 : vector<2x8xf32>
    %666 = arith.mulf %661, %665 : vector<2x8xf32>
    %c8_183 = arith.constant 8 : index
    %c0_184 = arith.constant 0 : index
    %667 = vector.load %arg27[%c8_183, %c0_184] : memref<16x8xf32, #tpu.memory_space<vmem>>, vector<2x8xf32>
    tpu.vector_store %arg27[%c8_183, %c0_184], %666 {strides = array<i32>} : memref<16x8xf32, #tpu.memory_space<vmem>>, vector<2x8xf32>,
    %668 = vector.extract_strided_slice %521 {offsets = [10, 0], sizes = [2, 32], strides = [1, 1]} : vector<16x32xf32> to vector<2x32xf32>
    %cst_185 = arith.constant dense<0.000000e+00> : vector<2x32xf32>
    %669 = tpu.matmul %666, %522, %cst_185 {dimension_numbers = #tpu.dot_dimension_numbers<[1], [0], [0], [1], [0, 0, 1, 1], [], []>} : vector<2x8xf32>, vector<8x32xf32>, vector<2x32xf32> -> vector<2x32xf32>
    %670 = arith.addf %668, %669 : vector<2x32xf32>
    %671 = vector.extract_strided_slice %670 {offsets = [0, 0], sizes = [2, 8], strides = [1, 1]} : vector<2x32xf32> to vector<2x8xf32>
    %672 = arith.negf %671 : vector<2x8xf32>
    %673 = math.exp %672 : vector<2x8xf32>
    %cst_186 = arith.constant 1.000000e+00 : f32
    %674 = vector.broadcast %cst_186 : f32 to vector<2x8xf32>
    %675 = arith.addf %674, %673 : vector<2x8xf32>
    %676 = arith.divf %674, %675 : vector<2x8xf32>
    %677 = vector.extract_strided_slice %670 {offsets = [0, 8], sizes = [2, 8], strides = [1, 1]} : vector<2x32xf32> to vector<2x8xf32>
    %678 = arith.negf %677 : vector<2x8xf32>
    %679 = math.exp %678 : vector<2x8xf32>
    %cst_187 = arith.constant 1.000000e+00 : f32
    %680 = vector.broadcast %cst_187 : f32 to vector<2x8xf32>
    %681 = arith.addf %680, %679 : vector<2x8xf32>
    %682 = arith.divf %680, %681 : vector<2x8xf32>
    %683 = vector.extract_strided_slice %670 {offsets = [0, 16], sizes = [2, 8], strides = [1, 1]} : vector<2x32xf32> to vector<2x8xf32>
    %684 = math.tanh %683 : vector<2x8xf32>
    %685 = vector.extract_strided_slice %670 {offsets = [0, 24], sizes = [2, 8], strides = [1, 1]} : vector<2x32xf32> to vector<2x8xf32>
    %686 = arith.negf %685 : vector<2x8xf32>
    %687 = math.exp %686 : vector<2x8xf32>
    %cst_188 = arith.constant 1.000000e+00 : f32
    %688 = vector.broadcast %cst_188 : f32 to vector<2x8xf32>
    %689 = arith.addf %688, %687 : vector<2x8xf32>
    %690 = arith.divf %688, %689 : vector<2x8xf32>
    %691 = arith.mulf %682, %664 : vector<2x8xf32>
    %692 = arith.mulf %676, %684 : vector<2x8xf32>
    %693 = arith.addf %691, %692 : vector<2x8xf32>
    %694 = math.tanh %693 : vector<2x8xf32>
    %695 = arith.mulf %690, %694 : vector<2x8xf32>
    %c10_189 = arith.constant 10 : index
    %c0_190 = arith.constant 0 : index
    %696 = vector.load %arg27[%c10_189, %c0_190] : memref<16x8xf32, #tpu.memory_space<vmem>>, vector<2x8xf32>
    tpu.vector_store %arg27[%c10_189, %c0_190], %695 {strides = array<i32>} : memref<16x8xf32, #tpu.memory_space<vmem>>, vector<2x8xf32>,
    %697 = vector.extract_strided_slice %521 {offsets = [12, 0], sizes = [2, 32], strides = [1, 1]} : vector<16x32xf32> to vector<2x32xf32>
    %cst_191 = arith.constant dense<0.000000e+00> : vector<2x32xf32>
    %698 = tpu.matmul %695, %522, %cst_191 {dimension_numbers = #tpu.dot_dimension_numbers<[1], [0], [0], [1], [0, 0, 1, 1], [], []>} : vector<2x8xf32>, vector<8x32xf32>, vector<2x32xf32> -> vector<2x32xf32>
    %699 = arith.addf %697, %698 : vector<2x32xf32>
    %700 = vector.extract_strided_slice %699 {offsets = [0, 0], sizes = [2, 8], strides = [1, 1]} : vector<2x32xf32> to vector<2x8xf32>
    %701 = arith.negf %700 : vector<2x8xf32>
    %702 = math.exp %701 : vector<2x8xf32>
    %cst_192 = arith.constant 1.000000e+00 : f32
    %703 = vector.broadcast %cst_192 : f32 to vector<2x8xf32>
    %704 = arith.addf %703, %702 : vector<2x8xf32>
    %705 = arith.divf %703, %704 : vector<2x8xf32>
    %706 = vector.extract_strided_slice %699 {offsets = [0, 8], sizes = [2, 8], strides = [1, 1]} : vector<2x32xf32> to vector<2x8xf32>
    %707 = arith.negf %706 : vector<2x8xf32>
    %708 = math.exp %707 : vector<2x8xf32>
    %cst_193 = arith.constant 1.000000e+00 : f32
    %709 = vector.broadcast %cst_193 : f32 to vector<2x8xf32>
    %710 = arith.addf %709, %708 : vector<2x8xf32>
    %711 = arith.divf %709, %710 : vector<2x8xf32>
    %712 = vector.extract_strided_slice %699 {offsets = [0, 16], sizes = [2, 8], strides = [1, 1]} : vector<2x32xf32> to vector<2x8xf32>
    %713 = math.tanh %712 : vector<2x8xf32>
    %714 = vector.extract_strided_slice %699 {offsets = [0, 24], sizes = [2, 8], strides = [1, 1]} : vector<2x32xf32> to vector<2x8xf32>
    %715 = arith.negf %714 : vector<2x8xf32>
    %716 = math.exp %715 : vector<2x8xf32>
    %cst_194 = arith.constant 1.000000e+00 : f32
    %717 = vector.broadcast %cst_194 : f32 to vector<2x8xf32>
    %718 = arith.addf %717, %716 : vector<2x8xf32>
    %719 = arith.divf %717, %718 : vector<2x8xf32>
    %720 = arith.mulf %711, %693 : vector<2x8xf32>
    %721 = arith.mulf %705, %713 : vector<2x8xf32>
    %722 = arith.addf %720, %721 : vector<2x8xf32>
    %723 = math.tanh %722 : vector<2x8xf32>
    %724 = arith.mulf %719, %723 : vector<2x8xf32>
    %c12_195 = arith.constant 12 : index
    %c0_196 = arith.constant 0 : index
    %725 = vector.load %arg27[%c12_195, %c0_196] : memref<16x8xf32, #tpu.memory_space<vmem>>, vector<2x8xf32>
    tpu.vector_store %arg27[%c12_195, %c0_196], %724 {strides = array<i32>} : memref<16x8xf32, #tpu.memory_space<vmem>>, vector<2x8xf32>,
    %726 = vector.extract_strided_slice %521 {offsets = [14, 0], sizes = [2, 32], strides = [1, 1]} : vector<16x32xf32> to vector<2x32xf32>
    %cst_197 = arith.constant dense<0.000000e+00> : vector<2x32xf32>
    %727 = tpu.matmul %724, %522, %cst_197 {dimension_numbers = #tpu.dot_dimension_numbers<[1], [0], [0], [1], [0, 0, 1, 1], [], []>} : vector<2x8xf32>, vector<8x32xf32>, vector<2x32xf32> -> vector<2x32xf32>
    %728 = arith.addf %726, %727 : vector<2x32xf32>
    %729 = vector.extract_strided_slice %728 {offsets = [0, 0], sizes = [2, 8], strides = [1, 1]} : vector<2x32xf32> to vector<2x8xf32>
    %730 = arith.negf %729 : vector<2x8xf32>
    %731 = math.exp %730 : vector<2x8xf32>
    %cst_198 = arith.constant 1.000000e+00 : f32
    %732 = vector.broadcast %cst_198 : f32 to vector<2x8xf32>
    %733 = arith.addf %732, %731 : vector<2x8xf32>
    %734 = arith.divf %732, %733 : vector<2x8xf32>
    %735 = vector.extract_strided_slice %728 {offsets = [0, 8], sizes = [2, 8], strides = [1, 1]} : vector<2x32xf32> to vector<2x8xf32>
    %736 = arith.negf %735 : vector<2x8xf32>
    %737 = math.exp %736 : vector<2x8xf32>
    %cst_199 = arith.constant 1.000000e+00 : f32
    %738 = vector.broadcast %cst_199 : f32 to vector<2x8xf32>
    %739 = arith.addf %738, %737 : vector<2x8xf32>
    %740 = arith.divf %738, %739 : vector<2x8xf32>
    %741 = vector.extract_strided_slice %728 {offsets = [0, 16], sizes = [2, 8], strides = [1, 1]} : vector<2x32xf32> to vector<2x8xf32>
    %742 = math.tanh %741 : vector<2x8xf32>
    %743 = vector.extract_strided_slice %728 {offsets = [0, 24], sizes = [2, 8], strides = [1, 1]} : vector<2x32xf32> to vector<2x8xf32>
    %744 = arith.negf %743 : vector<2x8xf32>
    %745 = math.exp %744 : vector<2x8xf32>
    %cst_200 = arith.constant 1.000000e+00 : f32
    %746 = vector.broadcast %cst_200 : f32 to vector<2x8xf32>
    %747 = arith.addf %746, %745 : vector<2x8xf32>
    %748 = arith.divf %746, %747 : vector<2x8xf32>
    %749 = arith.mulf %740, %722 : vector<2x8xf32>
    %750 = arith.mulf %734, %742 : vector<2x8xf32>
    %751 = arith.addf %749, %750 : vector<2x8xf32>
    %752 = math.tanh %751 : vector<2x8xf32>
    %753 = arith.mulf %748, %752 : vector<2x8xf32>
    %c14_201 = arith.constant 14 : index
    %c0_202 = arith.constant 0 : index
    %754 = vector.load %arg27[%c14_201, %c0_202] : memref<16x8xf32, #tpu.memory_space<vmem>>, vector<2x8xf32>
    tpu.vector_store %arg27[%c14_201, %c0_202], %753 {strides = array<i32>} : memref<16x8xf32, #tpu.memory_space<vmem>>, vector<2x8xf32>,
    %c0_203 = arith.constant 0 : index
    %c0_204 = arith.constant 0 : index
    %c0_205 = arith.constant 0 : index
    %755 = vector.load %arg24[%c0_203, %c0_204, %c0_205] : memref<2x2x8xf32, #tpu.memory_space<vmem>>, vector<1x2x8xf32>
    %756 = vector.shape_cast %755 : vector<1x2x8xf32> to vector<2x8xf32>
    %757 = vector.shape_cast %753 : vector<2x8xf32> to vector<1x2x8xf32>
    tpu.vector_store %arg24[%c0_203, %c0_204, %c0_205], %757 {strides = array<i32>} : memref<2x2x8xf32, #tpu.memory_space<vmem>>, vector<1x2x8xf32>,
    %c0_206 = arith.constant 0 : index
    %c0_207 = arith.constant 0 : index
    %c0_208 = arith.constant 0 : index
    %758 = vector.load %arg25[%c0_206, %c0_207, %c0_208] : memref<2x2x8xf32, #tpu.memory_space<vmem>>, vector<1x2x8xf32>
    %759 = vector.shape_cast %758 : vector<1x2x8xf32> to vector<2x8xf32>
    %760 = vector.shape_cast %751 : vector<2x8xf32> to vector<1x2x8xf32>
    tpu.vector_store %arg25[%c0_206, %c0_207, %c0_208], %760 {strides = array<i32>} : memref<2x2x8xf32, #tpu.memory_space<vmem>>, vector<1x2x8xf32>,
    %c0_209 = arith.constant 0 : index
    %c0_210 = arith.constant 0 : index
    %761 = vector.load %arg27[%c0_209, %c0_210] : memref<16x8xf32, #tpu.memory_space<vmem>>, vector<16x8xf32>
    %c1_211 = arith.constant 1 : index
    %c0_212 = arith.constant 0 : index
    %c0_213 = arith.constant 0 : index
    %762 = vector.load %arg3[%c1_211, %c0_212, %c0_213] : memref<2x2x8xf32, #tpu.memory_space<vmem>>, vector<1x2x8xf32>
    %763 = vector.shape_cast %762 : vector<1x2x8xf32> to vector<2x8xf32>
    %c1_214 = arith.constant 1 : index
    %c0_215 = arith.constant 0 : index
    %c0_216 = arith.constant 0 : index
    %764 = vector.load %arg4[%c1_214, %c0_215, %c0_216] : memref<2x2x8xf32, #tpu.memory_space<vmem>>, vector<1x2x8xf32>
    %765 = vector.shape_cast %764 : vector<1x2x8xf32> to vector<2x8xf32>
    %c0_217 = arith.constant 0 : index
    %c0_218 = arith.constant 0 : index
    %766 = vector.load %arg18[%c0_217, %c0_218] : memref<8x32xf32, #tpu.memory_space<vmem>>, vector<8x32xf32>
    %cst_219 = arith.constant dense<0.000000e+00> : vector<16x32xf32>
    %767 = tpu.matmul %761, %766, %cst_219 {dimension_numbers = #tpu.dot_dimension_numbers<[1], [0], [0], [1], [0, 0, 1, 1], [], []>} : vector<16x8xf32>, vector<8x32xf32>, vector<16x32xf32> -> vector<16x32xf32>
    %c0_220 = arith.constant 0 : index
    %c0_221 = arith.constant 0 : index
    %768 = vector.load %arg20[%c0_220, %c0_221] : memref<1x32xf32, #tpu.memory_space<vmem>>, vector<1x32xf32>
    %769 = vector.broadcast %768 : vector<1x32xf32> to vector<16x32xf32>
    %770 = arith.addf %767, %769 : vector<16x32xf32>
    %c0_222 = arith.constant 0 : index
    %c0_223 = arith.constant 0 : index
    %771 = vector.load %arg19[%c0_222, %c0_223] : memref<8x32xf32, #tpu.memory_space<vmem>>, vector<8x32xf32>
    %772 = vector.extract_strided_slice %770 {offsets = [0, 0], sizes = [2, 32], strides = [1, 1]} : vector<16x32xf32> to vector<2x32xf32>
    %cst_224 = arith.constant dense<0.000000e+00> : vector<2x32xf32>
    %773 = tpu.matmul %763, %771, %cst_224 {dimension_numbers = #tpu.dot_dimension_numbers<[1], [0], [0], [1], [0, 0, 1, 1], [], []>} : vector<2x8xf32>, vector<8x32xf32>, vector<2x32xf32> -> vector<2x32xf32>
    %774 = arith.addf %772, %773 : vector<2x32xf32>
    %775 = vector.extract_strided_slice %774 {offsets = [0, 0], sizes = [2, 8], strides = [1, 1]} : vector<2x32xf32> to vector<2x8xf32>
    %776 = arith.negf %775 : vector<2x8xf32>
    %777 = math.exp %776 : vector<2x8xf32>
    %cst_225 = arith.constant 1.000000e+00 : f32
    %778 = vector.broadcast %cst_225 : f32 to vector<2x8xf32>
    %779 = arith.addf %778, %777 : vector<2x8xf32>
    %780 = arith.divf %778, %779 : vector<2x8xf32>
    %781 = vector.extract_strided_slice %774 {offsets = [0, 8], sizes = [2, 8], strides = [1, 1]} : vector<2x32xf32> to vector<2x8xf32>
    %782 = arith.negf %781 : vector<2x8xf32>
    %783 = math.exp %782 : vector<2x8xf32>
    %cst_226 = arith.constant 1.000000e+00 : f32
    %784 = vector.broadcast %cst_226 : f32 to vector<2x8xf32>
    %785 = arith.addf %784, %783 : vector<2x8xf32>
    %786 = arith.divf %784, %785 : vector<2x8xf32>
    %787 = vector.extract_strided_slice %774 {offsets = [0, 16], sizes = [2, 8], strides = [1, 1]} : vector<2x32xf32> to vector<2x8xf32>
    %788 = math.tanh %787 : vector<2x8xf32>
    %789 = vector.extract_strided_slice %774 {offsets = [0, 24], sizes = [2, 8], strides = [1, 1]} : vector<2x32xf32> to vector<2x8xf32>
    %790 = arith.negf %789 : vector<2x8xf32>
    %791 = math.exp %790 : vector<2x8xf32>
    %cst_227 = arith.constant 1.000000e+00 : f32
    %792 = vector.broadcast %cst_227 : f32 to vector<2x8xf32>
    %793 = arith.addf %792, %791 : vector<2x8xf32>
    %794 = arith.divf %792, %793 : vector<2x8xf32>
    %795 = arith.mulf %786, %765 : vector<2x8xf32>
    %796 = arith.mulf %780, %788 : vector<2x8xf32>
    %797 = arith.addf %795, %796 : vector<2x8xf32>
    %798 = math.tanh %797 : vector<2x8xf32>
    %799 = arith.mulf %794, %798 : vector<2x8xf32>
    %c0_228 = arith.constant 0 : index
    %c0_229 = arith.constant 0 : index
    %800 = vector.load %arg21[%c0_228, %c0_229] : memref<16x8xf32, #tpu.memory_space<vmem>>, vector<2x8xf32>
    tpu.vector_store %arg21[%c0_228, %c0_229], %799 {strides = array<i32>} : memref<16x8xf32, #tpu.memory_space<vmem>>, vector<2x8xf32>,
    %801 = vector.extract_strided_slice %770 {offsets = [2, 0], sizes = [2, 32], strides = [1, 1]} : vector<16x32xf32> to vector<2x32xf32>
    %cst_230 = arith.constant dense<0.000000e+00> : vector<2x32xf32>
    %802 = tpu.matmul %799, %771, %cst_230 {dimension_numbers = #tpu.dot_dimension_numbers<[1], [0], [0], [1], [0, 0, 1, 1], [], []>} : vector<2x8xf32>, vector<8x32xf32>, vector<2x32xf32> -> vector<2x32xf32>
    %803 = arith.addf %801, %802 : vector<2x32xf32>
    %804 = vector.extract_strided_slice %803 {offsets = [0, 0], sizes = [2, 8], strides = [1, 1]} : vector<2x32xf32> to vector<2x8xf32>
    %805 = arith.negf %804 : vector<2x8xf32>
    %806 = math.exp %805 : vector<2x8xf32>
    %cst_231 = arith.constant 1.000000e+00 : f32
    %807 = vector.broadcast %cst_231 : f32 to vector<2x8xf32>
    %808 = arith.addf %807, %806 : vector<2x8xf32>
    %809 = arith.divf %807, %808 : vector<2x8xf32>
    %810 = vector.extract_strided_slice %803 {offsets = [0, 8], sizes = [2, 8], strides = [1, 1]} : vector<2x32xf32> to vector<2x8xf32>
    %811 = arith.negf %810 : vector<2x8xf32>
    %812 = math.exp %811 : vector<2x8xf32>
    %cst_232 = arith.constant 1.000000e+00 : f32
    %813 = vector.broadcast %cst_232 : f32 to vector<2x8xf32>
    %814 = arith.addf %813, %812 : vector<2x8xf32>
    %815 = arith.divf %813, %814 : vector<2x8xf32>
    %816 = vector.extract_strided_slice %803 {offsets = [0, 16], sizes = [2, 8], strides = [1, 1]} : vector<2x32xf32> to vector<2x8xf32>
    %817 = math.tanh %816 : vector<2x8xf32>
    %818 = vector.extract_strided_slice %803 {offsets = [0, 24], sizes = [2, 8], strides = [1, 1]} : vector<2x32xf32> to vector<2x8xf32>
    %819 = arith.negf %818 : vector<2x8xf32>
    %820 = math.exp %819 : vector<2x8xf32>
    %cst_233 = arith.constant 1.000000e+00 : f32
    %821 = vector.broadcast %cst_233 : f32 to vector<2x8xf32>
    %822 = arith.addf %821, %820 : vector<2x8xf32>
    %823 = arith.divf %821, %822 : vector<2x8xf32>
    %824 = arith.mulf %815, %797 : vector<2x8xf32>
    %825 = arith.mulf %809, %817 : vector<2x8xf32>
    %826 = arith.addf %824, %825 : vector<2x8xf32>
    %827 = math.tanh %826 : vector<2x8xf32>
    %828 = arith.mulf %823, %827 : vector<2x8xf32>
    %c2_234 = arith.constant 2 : index
    %c0_235 = arith.constant 0 : index
    %829 = vector.load %arg21[%c2_234, %c0_235] : memref<16x8xf32, #tpu.memory_space<vmem>>, vector<2x8xf32>
    tpu.vector_store %arg21[%c2_234, %c0_235], %828 {strides = array<i32>} : memref<16x8xf32, #tpu.memory_space<vmem>>, vector<2x8xf32>,
    %830 = vector.extract_strided_slice %770 {offsets = [4, 0], sizes = [2, 32], strides = [1, 1]} : vector<16x32xf32> to vector<2x32xf32>
    %cst_236 = arith.constant dense<0.000000e+00> : vector<2x32xf32>
    %831 = tpu.matmul %828, %771, %cst_236 {dimension_numbers = #tpu.dot_dimension_numbers<[1], [0], [0], [1], [0, 0, 1, 1], [], []>} : vector<2x8xf32>, vector<8x32xf32>, vector<2x32xf32> -> vector<2x32xf32>
    %832 = arith.addf %830, %831 : vector<2x32xf32>
    %833 = vector.extract_strided_slice %832 {offsets = [0, 0], sizes = [2, 8], strides = [1, 1]} : vector<2x32xf32> to vector<2x8xf32>
    %834 = arith.negf %833 : vector<2x8xf32>
    %835 = math.exp %834 : vector<2x8xf32>
    %cst_237 = arith.constant 1.000000e+00 : f32
    %836 = vector.broadcast %cst_237 : f32 to vector<2x8xf32>
    %837 = arith.addf %836, %835 : vector<2x8xf32>
    %838 = arith.divf %836, %837 : vector<2x8xf32>
    %839 = vector.extract_strided_slice %832 {offsets = [0, 8], sizes = [2, 8], strides = [1, 1]} : vector<2x32xf32> to vector<2x8xf32>
    %840 = arith.negf %839 : vector<2x8xf32>
    %841 = math.exp %840 : vector<2x8xf32>
    %cst_238 = arith.constant 1.000000e+00 : f32
    %842 = vector.broadcast %cst_238 : f32 to vector<2x8xf32>
    %843 = arith.addf %842, %841 : vector<2x8xf32>
    %844 = arith.divf %842, %843 : vector<2x8xf32>
    %845 = vector.extract_strided_slice %832 {offsets = [0, 16], sizes = [2, 8], strides = [1, 1]} : vector<2x32xf32> to vector<2x8xf32>
    %846 = math.tanh %845 : vector<2x8xf32>
    %847 = vector.extract_strided_slice %832 {offsets = [0, 24], sizes = [2, 8], strides = [1, 1]} : vector<2x32xf32> to vector<2x8xf32>
    %848 = arith.negf %847 : vector<2x8xf32>
    %849 = math.exp %848 : vector<2x8xf32>
    %cst_239 = arith.constant 1.000000e+00 : f32
    %850 = vector.broadcast %cst_239 : f32 to vector<2x8xf32>
    %851 = arith.addf %850, %849 : vector<2x8xf32>
    %852 = arith.divf %850, %851 : vector<2x8xf32>
    %853 = arith.mulf %844, %826 : vector<2x8xf32>
    %854 = arith.mulf %838, %846 : vector<2x8xf32>
    %855 = arith.addf %853, %854 : vector<2x8xf32>
    %856 = math.tanh %855 : vector<2x8xf32>
    %857 = arith.mulf %852, %856 : vector<2x8xf32>
    %c4_240 = arith.constant 4 : index
    %c0_241 = arith.constant 0 : index
    %858 = vector.load %arg21[%c4_240, %c0_241] : memref<16x8xf32, #tpu.memory_space<vmem>>, vector<2x8xf32>
    tpu.vector_store %arg21[%c4_240, %c0_241], %857 {strides = array<i32>} : memref<16x8xf32, #tpu.memory_space<vmem>>, vector<2x8xf32>,
    %859 = vector.extract_strided_slice %770 {offsets = [6, 0], sizes = [2, 32], strides = [1, 1]} : vector<16x32xf32> to vector<2x32xf32>
    %cst_242 = arith.constant dense<0.000000e+00> : vector<2x32xf32>
    %860 = tpu.matmul %857, %771, %cst_242 {dimension_numbers = #tpu.dot_dimension_numbers<[1], [0], [0], [1], [0, 0, 1, 1], [], []>} : vector<2x8xf32>, vector<8x32xf32>, vector<2x32xf32> -> vector<2x32xf32>
    %861 = arith.addf %859, %860 : vector<2x32xf32>
    %862 = vector.extract_strided_slice %861 {offsets = [0, 0], sizes = [2, 8], strides = [1, 1]} : vector<2x32xf32> to vector<2x8xf32>
    %863 = arith.negf %862 : vector<2x8xf32>
    %864 = math.exp %863 : vector<2x8xf32>
    %cst_243 = arith.constant 1.000000e+00 : f32
    %865 = vector.broadcast %cst_243 : f32 to vector<2x8xf32>
    %866 = arith.addf %865, %864 : vector<2x8xf32>
    %867 = arith.divf %865, %866 : vector<2x8xf32>
    %868 = vector.extract_strided_slice %861 {offsets = [0, 8], sizes = [2, 8], strides = [1, 1]} : vector<2x32xf32> to vector<2x8xf32>
    %869 = arith.negf %868 : vector<2x8xf32>
    %870 = math.exp %869 : vector<2x8xf32>
    %cst_244 = arith.constant 1.000000e+00 : f32
    %871 = vector.broadcast %cst_244 : f32 to vector<2x8xf32>
    %872 = arith.addf %871, %870 : vector<2x8xf32>
    %873 = arith.divf %871, %872 : vector<2x8xf32>
    %874 = vector.extract_strided_slice %861 {offsets = [0, 16], sizes = [2, 8], strides = [1, 1]} : vector<2x32xf32> to vector<2x8xf32>
    %875 = math.tanh %874 : vector<2x8xf32>
    %876 = vector.extract_strided_slice %861 {offsets = [0, 24], sizes = [2, 8], strides = [1, 1]} : vector<2x32xf32> to vector<2x8xf32>
    %877 = arith.negf %876 : vector<2x8xf32>
    %878 = math.exp %877 : vector<2x8xf32>
    %cst_245 = arith.constant 1.000000e+00 : f32
    %879 = vector.broadcast %cst_245 : f32 to vector<2x8xf32>
    %880 = arith.addf %879, %878 : vector<2x8xf32>
    %881 = arith.divf %879, %880 : vector<2x8xf32>
    %882 = arith.mulf %873, %855 : vector<2x8xf32>
    %883 = arith.mulf %867, %875 : vector<2x8xf32>
    %884 = arith.addf %882, %883 : vector<2x8xf32>
    %885 = math.tanh %884 : vector<2x8xf32>
    %886 = arith.mulf %881, %885 : vector<2x8xf32>
    %c6_246 = arith.constant 6 : index
    %c0_247 = arith.constant 0 : index
    %887 = vector.load %arg21[%c6_246, %c0_247] : memref<16x8xf32, #tpu.memory_space<vmem>>, vector<2x8xf32>
    tpu.vector_store %arg21[%c6_246, %c0_247], %886 {strides = array<i32>} : memref<16x8xf32, #tpu.memory_space<vmem>>, vector<2x8xf32>,
    %888 = vector.extract_strided_slice %770 {offsets = [8, 0], sizes = [2, 32], strides = [1, 1]} : vector<16x32xf32> to vector<2x32xf32>
    %cst_248 = arith.constant dense<0.000000e+00> : vector<2x32xf32>
    %889 = tpu.matmul %886, %771, %cst_248 {dimension_numbers = #tpu.dot_dimension_numbers<[1], [0], [0], [1], [0, 0, 1, 1], [], []>} : vector<2x8xf32>, vector<8x32xf32>, vector<2x32xf32> -> vector<2x32xf32>
    %890 = arith.addf %888, %889 : vector<2x32xf32>
    %891 = vector.extract_strided_slice %890 {offsets = [0, 0], sizes = [2, 8], strides = [1, 1]} : vector<2x32xf32> to vector<2x8xf32>
    %892 = arith.negf %891 : vector<2x8xf32>
    %893 = math.exp %892 : vector<2x8xf32>
    %cst_249 = arith.constant 1.000000e+00 : f32
    %894 = vector.broadcast %cst_249 : f32 to vector<2x8xf32>
    %895 = arith.addf %894, %893 : vector<2x8xf32>
    %896 = arith.divf %894, %895 : vector<2x8xf32>
    %897 = vector.extract_strided_slice %890 {offsets = [0, 8], sizes = [2, 8], strides = [1, 1]} : vector<2x32xf32> to vector<2x8xf32>
    %898 = arith.negf %897 : vector<2x8xf32>
    %899 = math.exp %898 : vector<2x8xf32>
    %cst_250 = arith.constant 1.000000e+00 : f32
    %900 = vector.broadcast %cst_250 : f32 to vector<2x8xf32>
    %901 = arith.addf %900, %899 : vector<2x8xf32>
    %902 = arith.divf %900, %901 : vector<2x8xf32>
    %903 = vector.extract_strided_slice %890 {offsets = [0, 16], sizes = [2, 8], strides = [1, 1]} : vector<2x32xf32> to vector<2x8xf32>
    %904 = math.tanh %903 : vector<2x8xf32>
    %905 = vector.extract_strided_slice %890 {offsets = [0, 24], sizes = [2, 8], strides = [1, 1]} : vector<2x32xf32> to vector<2x8xf32>
    %906 = arith.negf %905 : vector<2x8xf32>
    %907 = math.exp %906 : vector<2x8xf32>
    %cst_251 = arith.constant 1.000000e+00 : f32
    %908 = vector.broadcast %cst_251 : f32 to vector<2x8xf32>
    %909 = arith.addf %908, %907 : vector<2x8xf32>
    %910 = arith.divf %908, %909 : vector<2x8xf32>
    %911 = arith.mulf %902, %884 : vector<2x8xf32>
    %912 = arith.mulf %896, %904 : vector<2x8xf32>
    %913 = arith.addf %911, %912 : vector<2x8xf32>
    %914 = math.tanh %913 : vector<2x8xf32>
    %915 = arith.mulf %910, %914 : vector<2x8xf32>
    %c8_252 = arith.constant 8 : index
    %c0_253 = arith.constant 0 : index
    %916 = vector.load %arg21[%c8_252, %c0_253] : memref<16x8xf32, #tpu.memory_space<vmem>>, vector<2x8xf32>
    tpu.vector_store %arg21[%c8_252, %c0_253], %915 {strides = array<i32>} : memref<16x8xf32, #tpu.memory_space<vmem>>, vector<2x8xf32>,
    %917 = vector.extract_strided_slice %770 {offsets = [10, 0], sizes = [2, 32], strides = [1, 1]} : vector<16x32xf32> to vector<2x32xf32>
    %cst_254 = arith.constant dense<0.000000e+00> : vector<2x32xf32>
    %918 = tpu.matmul %915, %771, %cst_254 {dimension_numbers = #tpu.dot_dimension_numbers<[1], [0], [0], [1], [0, 0, 1, 1], [], []>} : vector<2x8xf32>, vector<8x32xf32>, vector<2x32xf32> -> vector<2x32xf32>
    %919 = arith.addf %917, %918 : vector<2x32xf32>
    %920 = vector.extract_strided_slice %919 {offsets = [0, 0], sizes = [2, 8], strides = [1, 1]} : vector<2x32xf32> to vector<2x8xf32>
    %921 = arith.negf %920 : vector<2x8xf32>
    %922 = math.exp %921 : vector<2x8xf32>
    %cst_255 = arith.constant 1.000000e+00 : f32
    %923 = vector.broadcast %cst_255 : f32 to vector<2x8xf32>
    %924 = arith.addf %923, %922 : vector<2x8xf32>
    %925 = arith.divf %923, %924 : vector<2x8xf32>
    %926 = vector.extract_strided_slice %919 {offsets = [0, 8], sizes = [2, 8], strides = [1, 1]} : vector<2x32xf32> to vector<2x8xf32>
    %927 = arith.negf %926 : vector<2x8xf32>
    %928 = math.exp %927 : vector<2x8xf32>
    %cst_256 = arith.constant 1.000000e+00 : f32
    %929 = vector.broadcast %cst_256 : f32 to vector<2x8xf32>
    %930 = arith.addf %929, %928 : vector<2x8xf32>
    %931 = arith.divf %929, %930 : vector<2x8xf32>
    %932 = vector.extract_strided_slice %919 {offsets = [0, 16], sizes = [2, 8], strides = [1, 1]} : vector<2x32xf32> to vector<2x8xf32>
    %933 = math.tanh %932 : vector<2x8xf32>
    %934 = vector.extract_strided_slice %919 {offsets = [0, 24], sizes = [2, 8], strides = [1, 1]} : vector<2x32xf32> to vector<2x8xf32>
    %935 = arith.negf %934 : vector<2x8xf32>
    %936 = math.exp %935 : vector<2x8xf32>
    %cst_257 = arith.constant 1.000000e+00 : f32
    %937 = vector.broadcast %cst_257 : f32 to vector<2x8xf32>
    %938 = arith.addf %937, %936 : vector<2x8xf32>
    %939 = arith.divf %937, %938 : vector<2x8xf32>
    %940 = arith.mulf %931, %913 : vector<2x8xf32>
    %941 = arith.mulf %925, %933 : vector<2x8xf32>
    %942 = arith.addf %940, %941 : vector<2x8xf32>
    %943 = math.tanh %942 : vector<2x8xf32>
    %944 = arith.mulf %939, %943 : vector<2x8xf32>
    %c10_258 = arith.constant 10 : index
    %c0_259 = arith.constant 0 : index
    %945 = vector.load %arg21[%c10_258, %c0_259] : memref<16x8xf32, #tpu.memory_space<vmem>>, vector<2x8xf32>
    tpu.vector_store %arg21[%c10_258, %c0_259], %944 {strides = array<i32>} : memref<16x8xf32, #tpu.memory_space<vmem>>, vector<2x8xf32>,
    %946 = vector.extract_strided_slice %770 {offsets = [12, 0], sizes = [2, 32], strides = [1, 1]} : vector<16x32xf32> to vector<2x32xf32>
    %cst_260 = arith.constant dense<0.000000e+00> : vector<2x32xf32>
    %947 = tpu.matmul %944, %771, %cst_260 {dimension_numbers = #tpu.dot_dimension_numbers<[1], [0], [0], [1], [0, 0, 1, 1], [], []>} : vector<2x8xf32>, vector<8x32xf32>, vector<2x32xf32> -> vector<2x32xf32>
    %948 = arith.addf %946, %947 : vector<2x32xf32>
    %949 = vector.extract_strided_slice %948 {offsets = [0, 0], sizes = [2, 8], strides = [1, 1]} : vector<2x32xf32> to vector<2x8xf32>
    %950 = arith.negf %949 : vector<2x8xf32>
    %951 = math.exp %950 : vector<2x8xf32>
    %cst_261 = arith.constant 1.000000e+00 : f32
    %952 = vector.broadcast %cst_261 : f32 to vector<2x8xf32>
    %953 = arith.addf %952, %951 : vector<2x8xf32>
    %954 = arith.divf %952, %953 : vector<2x8xf32>
    %955 = vector.extract_strided_slice %948 {offsets = [0, 8], sizes = [2, 8], strides = [1, 1]} : vector<2x32xf32> to vector<2x8xf32>
    %956 = arith.negf %955 : vector<2x8xf32>
    %957 = math.exp %956 : vector<2x8xf32>
    %cst_262 = arith.constant 1.000000e+00 : f32
    %958 = vector.broadcast %cst_262 : f32 to vector<2x8xf32>
    %959 = arith.addf %958, %957 : vector<2x8xf32>
    %960 = arith.divf %958, %959 : vector<2x8xf32>
    %961 = vector.extract_strided_slice %948 {offsets = [0, 16], sizes = [2, 8], strides = [1, 1]} : vector<2x32xf32> to vector<2x8xf32>
    %962 = math.tanh %961 : vector<2x8xf32>
    %963 = vector.extract_strided_slice %948 {offsets = [0, 24], sizes = [2, 8], strides = [1, 1]} : vector<2x32xf32> to vector<2x8xf32>
    %964 = arith.negf %963 : vector<2x8xf32>
    %965 = math.exp %964 : vector<2x8xf32>
    %cst_263 = arith.constant 1.000000e+00 : f32
    %966 = vector.broadcast %cst_263 : f32 to vector<2x8xf32>
    %967 = arith.addf %966, %965 : vector<2x8xf32>
    %968 = arith.divf %966, %967 : vector<2x8xf32>
    %969 = arith.mulf %960, %942 : vector<2x8xf32>
    %970 = arith.mulf %954, %962 : vector<2x8xf32>
    %971 = arith.addf %969, %970 : vector<2x8xf32>
    %972 = math.tanh %971 : vector<2x8xf32>
    %973 = arith.mulf %968, %972 : vector<2x8xf32>
    %c12_264 = arith.constant 12 : index
    %c0_265 = arith.constant 0 : index
    %974 = vector.load %arg21[%c12_264, %c0_265] : memref<16x8xf32, #tpu.memory_space<vmem>>, vector<2x8xf32>
    tpu.vector_store %arg21[%c12_264, %c0_265], %973 {strides = array<i32>} : memref<16x8xf32, #tpu.memory_space<vmem>>, vector<2x8xf32>,
    %975 = vector.extract_strided_slice %770 {offsets = [14, 0], sizes = [2, 32], strides = [1, 1]} : vector<16x32xf32> to vector<2x32xf32>
    %cst_266 = arith.constant dense<0.000000e+00> : vector<2x32xf32>
    %976 = tpu.matmul %973, %771, %cst_266 {dimension_numbers = #tpu.dot_dimension_numbers<[1], [0], [0], [1], [0, 0, 1, 1], [], []>} : vector<2x8xf32>, vector<8x32xf32>, vector<2x32xf32> -> vector<2x32xf32>
    %977 = arith.addf %975, %976 : vector<2x32xf32>
    %978 = vector.extract_strided_slice %977 {offsets = [0, 0], sizes = [2, 8], strides = [1, 1]} : vector<2x32xf32> to vector<2x8xf32>
    %979 = arith.negf %978 : vector<2x8xf32>
    %980 = math.exp %979 : vector<2x8xf32>
    %cst_267 = arith.constant 1.000000e+00 : f32
    %981 = vector.broadcast %cst_267 : f32 to vector<2x8xf32>
    %982 = arith.addf %981, %980 : vector<2x8xf32>
    %983 = arith.divf %981, %982 : vector<2x8xf32>
    %984 = vector.extract_strided_slice %977 {offsets = [0, 8], sizes = [2, 8], strides = [1, 1]} : vector<2x32xf32> to vector<2x8xf32>
    %985 = arith.negf %984 : vector<2x8xf32>
    %986 = math.exp %985 : vector<2x8xf32>
    %cst_268 = arith.constant 1.000000e+00 : f32
    %987 = vector.broadcast %cst_268 : f32 to vector<2x8xf32>
    %988 = arith.addf %987, %986 : vector<2x8xf32>
    %989 = arith.divf %987, %988 : vector<2x8xf32>
    %990 = vector.extract_strided_slice %977 {offsets = [0, 16], sizes = [2, 8], strides = [1, 1]} : vector<2x32xf32> to vector<2x8xf32>
    %991 = math.tanh %990 : vector<2x8xf32>
    %992 = vector.extract_strided_slice %977 {offsets = [0, 24], sizes = [2, 8], strides = [1, 1]} : vector<2x32xf32> to vector<2x8xf32>
    %993 = arith.negf %992 : vector<2x8xf32>
    %994 = math.exp %993 : vector<2x8xf32>
    %cst_269 = arith.constant 1.000000e+00 : f32
    %995 = vector.broadcast %cst_269 : f32 to vector<2x8xf32>
    %996 = arith.addf %995, %994 : vector<2x8xf32>
    %997 = arith.divf %995, %996 : vector<2x8xf32>
    %998 = arith.mulf %989, %971 : vector<2x8xf32>
    %999 = arith.mulf %983, %991 : vector<2x8xf32>
    %1000 = arith.addf %998, %999 : vector<2x8xf32>
    %1001 = math.tanh %1000 : vector<2x8xf32>
    %1002 = arith.mulf %997, %1001 : vector<2x8xf32>
    %c14_270 = arith.constant 14 : index
    %c0_271 = arith.constant 0 : index
    %1003 = vector.load %arg21[%c14_270, %c0_271] : memref<16x8xf32, #tpu.memory_space<vmem>>, vector<2x8xf32>
    tpu.vector_store %arg21[%c14_270, %c0_271], %1002 {strides = array<i32>} : memref<16x8xf32, #tpu.memory_space<vmem>>, vector<2x8xf32>,
    %c1_272 = arith.constant 1 : index
    %c0_273 = arith.constant 0 : index
    %c0_274 = arith.constant 0 : index
    %1004 = vector.load %arg24[%c1_272, %c0_273, %c0_274] : memref<2x2x8xf32, #tpu.memory_space<vmem>>, vector<1x2x8xf32>
    %1005 = vector.shape_cast %1004 : vector<1x2x8xf32> to vector<2x8xf32>
    %1006 = vector.shape_cast %1002 : vector<2x8xf32> to vector<1x2x8xf32>
    tpu.vector_store %arg24[%c1_272, %c0_273, %c0_274], %1006 {strides = array<i32>} : memref<2x2x8xf32, #tpu.memory_space<vmem>>, vector<1x2x8xf32>,
    %c1_275 = arith.constant 1 : index
    %c0_276 = arith.constant 0 : index
    %c0_277 = arith.constant 0 : index
    %1007 = vector.load %arg25[%c1_275, %c0_276, %c0_277] : memref<2x2x8xf32, #tpu.memory_space<vmem>>, vector<1x2x8xf32>
    %1008 = vector.shape_cast %1007 : vector<1x2x8xf32> to vector<2x8xf32>
    %1009 = vector.shape_cast %1000 : vector<2x8xf32> to vector<1x2x8xf32>
    tpu.vector_store %arg25[%c1_275, %c0_276, %c0_277], %1009 {strides = array<i32>} : memref<2x2x8xf32, #tpu.memory_space<vmem>>, vector<1x2x8xf32>,
    return
  }
}

</mosaic_0001>

<llo_original>
// kernel: rnn_model_forward.1
$region0: #{rnn_model_forward.1}
  #allocation0 [shape = 'u32[]', space=smem, size = 0x4, offset = 0x4, fixed_abs, tag = 'smem constant byte address 0x4 - core index']
  #allocation1 [shape = 'u32[72,128]{1,0:T(1,128)}', space=vmem, size = 0x9000, scoped, tag = 'internal scratch']
  #allocation2 [shape = 'f32[16,32]{1,0:T(8,128)}', space=vmem, size = 0x2000, scoped, tag = 'scratch operand']
  #allocation3 [shape = 'f32[16,8]{1,0:T(8,128)}', space=vmem, size = 0x2000, scoped, tag = 'scratch operand']
  %s0 = inlined_call_operand.vmem [shape: f32[16,8], index: 0, kind: input, shape index: {}]
  %s1 = inlined_call_operand.hbm [shape: f32[2,2,32], index: 1, kind: input, shape index: {}]
  %s2 = inlined_call_operand.hbm [shape: f32[2,2,32], index: 2, kind: input, shape index: {}]
  %s3 = inlined_call_operand.hbm [shape: f32[2,2,8], index: 3, kind: input, shape index: {}]
  %s4 = inlined_call_operand.hbm [shape: f32[2,2,8], index: 4, kind: input, shape index: {}]
  %s5 = inlined_call_operand.hbm [shape: f32[8,128], index: 5, kind: input, shape index: {}]
  %s6 = inlined_call_operand.vmem [shape: f32[32,128], index: 6, kind: input, shape index: {}]
  %s7 = inlined_call_operand.vmem [shape: f32[1,128], index: 7, kind: input, shape index: {}]
  %s8 = inlined_call_operand.vmem [shape: f32[32,128], index: 8, kind: input, shape index: {}]
  %s9 = inlined_call_operand.hbm [shape: f32[32,128], index: 9, kind: input, shape index: {}]
  %s10 = inlined_call_operand.hbm [shape: f32[1,128], index: 10, kind: input, shape index: {}]
  %s11 = inlined_call_operand.vmem [shape: f32[32,16], index: 11, kind: input, shape index: {}]
  %s12 = inlined_call_operand.hbm [shape: f32[1,16], index: 12, kind: input, shape index: {}]
  %s13 = inlined_call_operand.hbm [shape: f32[16,32], index: 13, kind: input, shape index: {}]
  %s14 = inlined_call_operand.hbm [shape: f32[1,32], index: 14, kind: input, shape index: {}]
  %s15 = inlined_call_operand.hbm [shape: f32[32,32], index: 15, kind: input, shape index: {}]
  %s16 = inlined_call_operand.hbm [shape: f32[8,32], index: 16, kind: input, shape index: {}]
  %s17 = inlined_call_operand.hbm [shape: f32[1,32], index: 17, kind: input, shape index: {}]
  %s18 = inlined_call_operand.hbm [shape: f32[8,32], index: 18, kind: input, shape index: {}]
  %s19 = inlined_call_operand.hbm [shape: f32[8,32], index: 19, kind: input, shape index: {}]
  %s20 = inlined_call_operand.hbm [shape: f32[1,32], index: 20, kind: input, shape index: {}]
  %s21 = inlined_call_operand.vmem [shape: f32[16,8], index: 21, kind: output, shape index: {0}]
  %s22 = inlined_call_operand.hbm [shape: f32[2,2,32], index: 22, kind: output, shape index: {1}]
  %s23 = inlined_call_operand.hbm [shape: f32[2,2,32], index: 23, kind: output, shape index: {2}]
  %s24 = inlined_call_operand.hbm [shape: f32[2,2,8], index: 24, kind: output, shape index: {3}]
  %s25 = inlined_call_operand.hbm [shape: f32[2,2,8], index: 25, kind: output, shape index: {4}]
  %26 = xla_tuple %s21, %s22, %s23, %s24, %s25
  %s27 = sld [smem:[#allocation0]]
  $region190: #{rnn_model_forward.1} parent=0
    _
  %s29 = ssub.s32 1, %s27
  %s30 = scalar_select 0, %s29, %s27
  $region1: #{rnn_model_forward.1} parent=0
    #allocation4 [shape = 'u8[2048]{0}', space=vmem, size = 0x800, scoped, tag = 'input window, operand 1, single buffered']
    #allocation5 [shape = 's32[1]{0}', space=sflag, size = 0x4, scoped, tag = 'scoped memory for rnn_model_forward.1']
    #allocation6 [shape = 's32[1]{0}', space=sflag, size = 0x4, scoped, tag = 'scoped memory for rnn_model_forward.1']
    #allocation7 [shape = 'u8[2048]{0}', space=vmem, size = 0x800, scoped, tag = 'input window, operand 2, single buffered']
    #allocation8 [shape = 's32[1]{0}', space=sflag, size = 0x4, scoped, tag = 'scoped memory for rnn_model_forward.1']
    #allocation9 [shape = 'u8[2048]{0}', space=vmem, size = 0x800, scoped, tag = 'input window, operand 3, single buffered']
    #allocation10 [shape = 'u8[2048]{0}', space=vmem, size = 0x800, scoped, tag = 'input window, operand 4, single buffered']
    #allocation11 [shape = 's32[1]{0}', space=sflag, size = 0x4, scoped, tag = 'scoped memory for rnn_model_forward.1']
    #allocation12 [shape = 'u8[4096]{0}', space=vmem, size = 0x1000, scoped, tag = 'input window, operand 5, single buffered']
    #allocation13 [shape = 'u8[16384]{0}', space=vmem, size = 0x4000, scoped, tag = 'input window, operand 9, single buffered']
    #allocation14 [shape = 's32[1]{0}', space=sflag, size = 0x4, scoped, tag = 'scoped memory for rnn_model_forward.1']
    #allocation15 [shape = 'u8[512]{0}', space=vmem, size = 0x400, scoped, tag = 'input window, operand 10, single buffered']
    #allocation16 [shape = 'u8[512]{0}', space=vmem, size = 0x400, scoped, tag = 'input window, operand 12, single buffered']
    #allocation17 [shape = 's32[1]{0}', space=sflag, size = 0x4, scoped, tag = 'scoped memory for rnn_model_forward.1']
    #allocation18 [shape = 'u8[8192]{0}', space=vmem, size = 0x2000, scoped, tag = 'input window, operand 13, single buffered']
    #allocation19 [shape = 'u8[512]{0}', space=vmem, size = 0x400, scoped, tag = 'input window, operand 14, single buffered']
    #allocation20 [shape = 's32[1]{0}', space=sflag, size = 0x4, scoped, tag = 'scoped memory for rnn_model_forward.1']
    #allocation21 [shape = 'u8[16384]{0}', space=vmem, size = 0x4000, scoped, tag = 'input window, operand 15, single buffered']
    #allocation22 [shape = 'u8[4096]{0}', space=vmem, size = 0x1000, scoped, tag = 'input window, operand 16, single buffered']
    #allocation23 [shape = 's32[1]{0}', space=sflag, size = 0x4, scoped, tag = 'scoped memory for rnn_model_forward.1']
    #allocation24 [shape = 'u8[512]{0}', space=vmem, size = 0x400, scoped, tag = 'input window, operand 17, single buffered']
    #allocation25 [shape = 'u8[4096]{0}', space=vmem, size = 0x1000, scoped, tag = 'input window, operand 18, single buffered']
    #allocation26 [shape = 's32[1]{0}', space=sflag, size = 0x4, scoped, tag = 'scoped memory for rnn_model_forward.1']
    #allocation27 [shape = 'u8[4096]{0}', space=vmem, size = 0x1000, scoped, tag = 'input window, operand 19, single buffered']
    #allocation28 [shape = 'u8[512]{0}', space=vmem, size = 0x400, scoped, tag = 'input window, operand 20, single buffered']
    #allocation29 [shape = 's32[1]{0}', space=sflag, size = 0x4, scoped, tag = 'scoped memory for rnn_model_forward.1']
    #allocation30 [shape = 'u8[2048]{0}', space=vmem, size = 0x800, scoped, tag = 'output window, operand 1, single buffered']
    #allocation31 [shape = 'u8[2048]{0}', space=vmem, size = 0x800, scoped, tag = 'output window, operand 2, single buffered']
    #allocation32 [shape = 's32[1]{0}', space=sflag, size = 0x4, scoped, tag = 'scoped memory for rnn_model_forward.1']
    #allocation33 [shape = 'u8[2048]{0}', space=vmem, size = 0x800, scoped, tag = 'output window, operand 3, single buffered']
    #allocation34 [shape = 'u8[2048]{0}', space=vmem, size = 0x800, scoped, tag = 'output window, operand 4, single buffered']
    #allocation35 [shape = 's32[1]{0}', space=sflag, size = 0x4, scoped, tag = 'scoped memory for rnn_model_forward.1']
    %31 = vsyncpa [#allocation5], 0
    %32 = vsyncpa [#allocation8], 0
    %33 = vsyncpa [#allocation11], 0
    %34 = vsyncpa [#allocation14], 0
    %35 = vsyncpa [#allocation17], 0
    %36 = vsyncpa [#allocation20], 0
    %37 = vsyncpa [#allocation23], 0
    %38 = vsyncpa [#allocation26], 0
    %39 = vsyncpa [#allocation29], 0
    %40 = vsyncpa [#allocation6], 0
    %41 = vsyncpa [#allocation32], 0
    %42 = vsyncpa [#allocation35], 0
    // Predicated region
    $region2: #{rnn_model_forward.1} parent=1 // pred_check
      _
    $region3: #{rnn_model_forward.1} parent=1 // pred_check_branch
      %44 = sbr.rel (0) target = $region5
    $region4: #{rnn_model_forward.1} parent=1 // pred_region
      _
    $region5: #{rnn_model_forward.1} parent=1 // pred_fallthru
      _
    // Predicated region
    $region6: #{rnn_model_forward.1} parent=1 // pred_check
      _
    $region7: #{rnn_model_forward.1} parent=1 // pred_check_branch
      %46 = sbr.rel (0) target = $region9
    $region8: #{rnn_model_forward.1} parent=1 // pred_region
      %48 = vsyncadd [#allocation5], 0
      %s49 = sshll.u32 %s1, 4
      %s50 = int_to_ptr.hbm [resolvable:$true] %s49
      %s51 = sshll.u32 [#allocation4], 4
      %s52 = int_to_ptr.vmem [resolvable:$true] %s51
      %57 = dma.hbm_to_vmem [thread:$0]  %s50, 64, %s52, [#allocation5], 32, 32, 2
    $region9: #{rnn_model_forward.1} parent=1 // pred_fallthru
      _
    // Predicated region
    $region10: #{rnn_model_forward.1} parent=1 // pred_check
      _
    $region11: #{rnn_model_forward.1} parent=1 // pred_check_branch
      %59 = sbr.rel (0) target = $region13
    $region12: #{rnn_model_forward.1} parent=1 // pred_region
      %61 = vsyncadd [#allocation8], 0
      %s62 = sshll.u32 %s2, 4
      %s63 = int_to_ptr.hbm [resolvable:$true] %s62
      %s64 = sshll.u32 [#allocation7], 4
      %s65 = int_to_ptr.vmem [resolvable:$true] %s64
      %70 = dma.hbm_to_vmem [thread:$0]  %s63, 64, %s65, [#allocation8], 32, 32, 2
    $region13: #{rnn_model_forward.1} parent=1 // pred_fallthru
      _
    // Predicated region
    $region14: #{rnn_model_forward.1} parent=1 // pred_check
      _
    $region15: #{rnn_model_forward.1} parent=1 // pred_check_branch
      %72 = sbr.rel (0) target = $region17
    $region16: #{rnn_model_forward.1} parent=1 // pred_region
      %74 = vsyncadd [#allocation8], 0
      %s75 = sshll.u32 %s3, 4
      %s76 = int_to_ptr.hbm [resolvable:$true] %s75
      %s77 = sshll.u32 [#allocation9], 4
      %s78 = int_to_ptr.vmem [resolvable:$true] %s77
      %83 = dma.hbm_to_vmem [thread:$0]  %s76, 64, %s78, [#allocation8], 32, 32, 2
    $region17: #{rnn_model_forward.1} parent=1 // pred_fallthru
      _
    // Predicated region
    $region18: #{rnn_model_forward.1} parent=1 // pred_check
      _
    $region19: #{rnn_model_forward.1} parent=1 // pred_check_branch
      %85 = sbr.rel (0) target = $region21
    $region20: #{rnn_model_forward.1} parent=1 // pred_region
      %87 = vsyncadd [#allocation11], 0
      %s88 = sshll.u32 %s4, 4
      %s89 = int_to_ptr.hbm [resolvable:$true] %s88
      %s90 = sshll.u32 [#allocation10], 4
      %s91 = int_to_ptr.vmem [resolvable:$true] %s90
      %96 = dma.hbm_to_vmem [thread:$0]  %s89, 64, %s91, [#allocation11], 32, 32, 2
    $region21: #{rnn_model_forward.1} parent=1 // pred_fallthru
      _
    // Predicated region
    $region22: #{rnn_model_forward.1} parent=1 // pred_check
      _
    $region23: #{rnn_model_forward.1} parent=1 // pred_check_branch
      %98 = sbr.rel (0) target = $region25
    $region24: #{rnn_model_forward.1} parent=1 // pred_region
      %100 = vsyncadd [#allocation11], 0
      %s102 = sshll.u32 %s5, 4
      %s103 = int_to_ptr.hbm [resolvable:$true] %s102
      %s104 = sshll.u32 [#allocation12], 4
      %s105 = int_to_ptr.vmem [resolvable:$true] %s104
      %107 = dma.hbm_to_vmem [thread:$0]  %s103, 128, %s105, [#allocation11]
    $region25: #{rnn_model_forward.1} parent=1 // pred_fallthru
      _
    // Predicated region
    $region26: #{rnn_model_forward.1} parent=1 // pred_check
      _
    $region27: #{rnn_model_forward.1} parent=1 // pred_check_branch
      %109 = sbr.rel (0) target = $region29
    $region28: #{rnn_model_forward.1} parent=1 // pred_region
      _
    $region29: #{rnn_model_forward.1} parent=1 // pred_fallthru
      _
    // Predicated region
    $region30: #{rnn_model_forward.1} parent=1 // pred_check
      _
    $region31: #{rnn_model_forward.1} parent=1 // pred_check_branch
      %111 = sbr.rel (0) target = $region33
    $region32: #{rnn_model_forward.1} parent=1 // pred_region
      _
    $region33: #{rnn_model_forward.1} parent=1 // pred_fallthru
      _
    // Predicated region
    $region34: #{rnn_model_forward.1} parent=1 // pred_check
      _
    $region35: #{rnn_model_forward.1} parent=1 // pred_check_branch
      %113 = sbr.rel (0) target = $region37
    $region36: #{rnn_model_forward.1} parent=1 // pred_region
      _
    $region37: #{rnn_model_forward.1} parent=1 // pred_fallthru
      _
    // Predicated region
    $region38: #{rnn_model_forward.1} parent=1 // pred_check
      _
    $region39: #{rnn_model_forward.1} parent=1 // pred_check_branch
      %115 = sbr.rel (0) target = $region41
    $region40: #{rnn_model_forward.1} parent=1 // pred_region
      %117 = vsyncadd [#allocation14], 0
      %s118 = sshll.u32 %s9, 4
      %s119 = int_to_ptr.hbm [resolvable:$true] %s118
      %s120 = sshll.u32 [#allocation13], 4
      %s121 = int_to_ptr.vmem [resolvable:$true] %s120
      %126 = dma.hbm_to_vmem [thread:$0]  %s119, 512, %s121, [#allocation14], 128, 128, 8
    $region41: #{rnn_model_forward.1} parent=1 // pred_fallthru
      _
    // Predicated region
    $region42: #{rnn_model_forward.1} parent=1 // pred_check
      _
    $region43: #{rnn_model_forward.1} parent=1 // pred_check_branch
      %128 = sbr.rel (0) target = $region45
    $region44: #{rnn_model_forward.1} parent=1 // pred_region
      %130 = vsyncadd [#allocation14], 0
      %s132 = sshll.u32 %s10, 4
      %s133 = int_to_ptr.hbm [resolvable:$true] %s132
      %s134 = sshll.u32 [#allocation15], 4
      %s135 = int_to_ptr.vmem [resolvable:$true] %s134
      %137 = dma.hbm_to_vmem [thread:$0]  %s133, 16, %s135, [#allocation14]
    $region45: #{rnn_model_forward.1} parent=1 // pred_fallthru
      _
    // Predicated region
    $region46: #{rnn_model_forward.1} parent=1 // pred_check
      _
    $region47: #{rnn_model_forward.1} parent=1 // pred_check_branch
      %139 = sbr.rel (0) target = $region49
    $region48: #{rnn_model_forward.1} parent=1 // pred_region
      _
    $region49: #{rnn_model_forward.1} parent=1 // pred_fallthru
      _
    // Predicated region
    $region50: #{rnn_model_forward.1} parent=1 // pred_check
      _
    $region51: #{rnn_model_forward.1} parent=1 // pred_check_branch
      %141 = sbr.rel (0) target = $region53
    $region52: #{rnn_model_forward.1} parent=1 // pred_region
      %143 = vsyncadd [#allocation17], 0
      %s145 = sshll.u32 %s12, 4
      %s146 = int_to_ptr.hbm [resolvable:$true] %s145
      %s147 = sshll.u32 [#allocation16], 4
      %s148 = int_to_ptr.vmem [resolvable:$true] %s147
      %150 = dma.hbm_to_vmem [thread:$0]  %s146, 16, %s148, [#allocation17]
    $region53: #{rnn_model_forward.1} parent=1 // pred_fallthru
      _
    // Predicated region
    $region54: #{rnn_model_forward.1} parent=1 // pred_check
      _
    $region55: #{rnn_model_forward.1} parent=1 // pred_check_branch
      %152 = sbr.rel (0) target = $region57
    $region56: #{rnn_model_forward.1} parent=1 // pred_region
      %154 = vsyncadd [#allocation17], 0
      %s155 = sshll.u32 %s13, 4
      %s156 = int_to_ptr.hbm [resolvable:$true] %s155
      %s157 = sshll.u32 [#allocation18], 4
      %s158 = int_to_ptr.vmem [resolvable:$true] %s157
      %163 = dma.hbm_to_vmem [thread:$0]  %s156, 256, %s158, [#allocation17], 128, 128, 8
    $region57: #{rnn_model_forward.1} parent=1 // pred_fallthru
      _
    // Predicated region
    $region58: #{rnn_model_forward.1} parent=1 // pred_check
      _
    $region59: #{rnn_model_forward.1} parent=1 // pred_check_branch
      %165 = sbr.rel (0) target = $region61
    $region60: #{rnn_model_forward.1} parent=1 // pred_region
      %167 = vsyncadd [#allocation20], 0
      %s169 = sshll.u32 %s14, 4
      %s170 = int_to_ptr.hbm [resolvable:$true] %s169
      %s171 = sshll.u32 [#allocation19], 4
      %s172 = int_to_ptr.vmem [resolvable:$true] %s171
      %174 = dma.hbm_to_vmem [thread:$0]  %s170, 16, %s172, [#allocation20]
    $region61: #{rnn_model_forward.1} parent=1 // pred_fallthru
      _
    // Predicated region
    $region62: #{rnn_model_forward.1} parent=1 // pred_check
      _
    $region63: #{rnn_model_forward.1} parent=1 // pred_check_branch
      %176 = sbr.rel (0) target = $region65
    $region64: #{rnn_model_forward.1} parent=1 // pred_region
      %178 = vsyncadd [#allocation20], 0
      %s179 = sshll.u32 %s15, 4
      %s180 = int_to_ptr.hbm [resolvable:$true] %s179
      %s181 = sshll.u32 [#allocation21], 4
      %s182 = int_to_ptr.vmem [resolvable:$true] %s181
      %187 = dma.hbm_to_vmem [thread:$0]  %s180, 512, %s182, [#allocation20], 128, 128, 8
    $region65: #{rnn_model_forward.1} parent=1 // pred_fallthru
      _
    // Predicated region
    $region66: #{rnn_model_forward.1} parent=1 // pred_check
      _
    $region67: #{rnn_model_forward.1} parent=1 // pred_check_branch
      %189 = sbr.rel (0) target = $region69
    $region68: #{rnn_model_forward.1} parent=1 // pred_region
      %191 = vsyncadd [#allocation23], 0
      %s193 = sshll.u32 %s16, 4
      %s194 = int_to_ptr.hbm [resolvable:$true] %s193
      %s195 = sshll.u32 [#allocation22], 4
      %s196 = int_to_ptr.vmem [resolvable:$true] %s195
      %198 = dma.hbm_to_vmem [thread:$0]  %s194, 128, %s196, [#allocation23]
    $region69: #{rnn_model_forward.1} parent=1 // pred_fallthru
      _
    // Predicated region
    $region70: #{rnn_model_forward.1} parent=1 // pred_check
      _
    $region71: #{rnn_model_forward.1} parent=1 // pred_check_branch
      %200 = sbr.rel (0) target = $region73
    $region72: #{rnn_model_forward.1} parent=1 // pred_region
      %202 = vsyncadd [#allocation23], 0
      %s204 = sshll.u32 %s17, 4
      %s205 = int_to_ptr.hbm [resolvable:$true] %s204
      %s206 = sshll.u32 [#allocation24], 4
      %s207 = int_to_ptr.vmem [resolvable:$true] %s206
      %209 = dma.hbm_to_vmem [thread:$0]  %s205, 16, %s207, [#allocation23]
    $region73: #{rnn_model_forward.1} parent=1 // pred_fallthru
      _
    // Predicated region
    $region74: #{rnn_model_forward.1} parent=1 // pred_check
      _
    $region75: #{rnn_model_forward.1} parent=1 // pred_check_branch
      %211 = sbr.rel (0) target = $region77
    $region76: #{rnn_model_forward.1} parent=1 // pred_region
      %213 = vsyncadd [#allocation26], 0
      %s215 = sshll.u32 %s18, 4
      %s216 = int_to_ptr.hbm [resolvable:$true] %s215
      %s217 = sshll.u32 [#allocation25], 4
      %s218 = int_to_ptr.vmem [resolvable:$true] %s217
      %220 = dma.hbm_to_vmem [thread:$0]  %s216, 128, %s218, [#allocation26]
    $region77: #{rnn_model_forward.1} parent=1 // pred_fallthru
      _
    // Predicated region
    $region78: #{rnn_model_forward.1} parent=1 // pred_check
      _
    $region79: #{rnn_model_forward.1} parent=1 // pred_check_branch
      %222 = sbr.rel (0) target = $region81
    $region80: #{rnn_model_forward.1} parent=1 // pred_region
      %224 = vsyncadd [#allocation26], 0
      %s226 = sshll.u32 %s19, 4
      %s227 = int_to_ptr.hbm [resolvable:$true] %s226
      %s228 = sshll.u32 [#allocation27], 4
      %s229 = int_to_ptr.vmem [resolvable:$true] %s228
      %231 = dma.hbm_to_vmem [thread:$0]  %s227, 128, %s229, [#allocation26]
    $region81: #{rnn_model_forward.1} parent=1 // pred_fallthru
      _
    // Predicated region
    $region82: #{rnn_model_forward.1} parent=1 // pred_check
      _
    $region83: #{rnn_model_forward.1} parent=1 // pred_check_branch
      %233 = sbr.rel (0) target = $region85
    $region84: #{rnn_model_forward.1} parent=1 // pred_region
      %235 = vsyncadd [#allocation29], 0
      %s237 = sshll.u32 %s20, 4
      %s238 = int_to_ptr.hbm [resolvable:$true] %s237
      %s239 = sshll.u32 [#allocation28], 4
      %s240 = int_to_ptr.vmem [resolvable:$true] %s239
      %242 = dma.hbm_to_vmem [thread:$0]  %s238, 16, %s240, [#allocation29]
    $region85: #{rnn_model_forward.1} parent=1 // pred_fallthru
      _
    // Predicated region
    $region86: #{rnn_model_forward.1} parent=1 // pred_check
      _
    $region87: #{rnn_model_forward.1} parent=1 // pred_check_branch
      %244 = sbr.rel (0) target = $region89
    $region88: #{rnn_model_forward.1} parent=1 // pred_region
      %246 = dma.done [#allocation5], 64
    $region89: #{rnn_model_forward.1} parent=1 // pred_fallthru
      _
    // Predicated region
    $region90: #{rnn_model_forward.1} parent=1 // pred_check
      _
    $region91: #{rnn_model_forward.1} parent=1 // pred_check_branch
      %248 = sbr.rel (0) target = $region93
    $region92: #{rnn_model_forward.1} parent=1 // pred_region
      %250 = dma.done [#allocation8], 64
    $region93: #{rnn_model_forward.1} parent=1 // pred_fallthru
      _
    // Predicated region
    $region94: #{rnn_model_forward.1} parent=1 // pred_check
      _
    $region95: #{rnn_model_forward.1} parent=1 // pred_check_branch
      %252 = sbr.rel (0) target = $region97
    $region96: #{rnn_model_forward.1} parent=1 // pred_region
      %254 = dma.done [#allocation8], 64
    $region97: #{rnn_model_forward.1} parent=1 // pred_fallthru
      _
    // Predicated region
    $region98: #{rnn_model_forward.1} parent=1 // pred_check
      _
    $region99: #{rnn_model_forward.1} parent=1 // pred_check_branch
      %256 = sbr.rel (0) target = $region101
    $region100: #{rnn_model_forward.1} parent=1 // pred_region
      %258 = dma.done [#allocation11], 64
    $region101: #{rnn_model_forward.1} parent=1 // pred_fallthru
      _
    // Predicated region
    $region102: #{rnn_model_forward.1} parent=1 // pred_check
      _
    $region103: #{rnn_model_forward.1} parent=1 // pred_check_branch
      %260 = sbr.rel (0) target = $region105
    $region104: #{rnn_model_forward.1} parent=1 // pred_region
      %262 = dma.done [#allocation11], 128
    $region105: #{rnn_model_forward.1} parent=1 // pred_fallthru
      _
    // Predicated region
    $region106: #{rnn_model_forward.1} parent=1 // pred_check
      _
    $region107: #{rnn_model_forward.1} parent=1 // pred_check_branch
      %264 = sbr.rel (0) target = $region109
    $region108: #{rnn_model_forward.1} parent=1 // pred_region
      %266 = dma.done [#allocation14], 512
    $region109: #{rnn_model_forward.1} parent=1 // pred_fallthru
      _
    // Predicated region
    $region110: #{rnn_model_forward.1} parent=1 // pred_check
      _
    $region111: #{rnn_model_forward.1} parent=1 // pred_check_branch
      %268 = sbr.rel (0) target = $region113
    $region112: #{rnn_model_forward.1} parent=1 // pred_region
      %270 = dma.done [#allocation14], 16
    $region113: #{rnn_model_forward.1} parent=1 // pred_fallthru
      _
    // Predicated region
    $region114: #{rnn_model_forward.1} parent=1 // pred_check
      _
    $region115: #{rnn_model_forward.1} parent=1 // pred_check_branch
      %272 = sbr.rel (0) target = $region117
    $region116: #{rnn_model_forward.1} parent=1 // pred_region
      %274 = dma.done [#allocation17], 16
    $region117: #{rnn_model_forward.1} parent=1 // pred_fallthru
      _
    // Predicated region
    $region118: #{rnn_model_forward.1} parent=1 // pred_check
      _
    $region119: #{rnn_model_forward.1} parent=1 // pred_check_branch
      %276 = sbr.rel (0) target = $region121
    $region120: #{rnn_model_forward.1} parent=1 // pred_region
      %278 = dma.done [#allocation17], 256
    $region121: #{rnn_model_forward.1} parent=1 // pred_fallthru
      _
    // Predicated region
    $region122: #{rnn_model_forward.1} parent=1 // pred_check
      _
    $region123: #{rnn_model_forward.1} parent=1 // pred_check_branch
      %280 = sbr.rel (0) target = $region125
    $region124: #{rnn_model_forward.1} parent=1 // pred_region
      %282 = dma.done [#allocation20], 16
    $region125: #{rnn_model_forward.1} parent=1 // pred_fallthru
      _
    // Predicated region
    $region126: #{rnn_model_forward.1} parent=1 // pred_check
      _
    $region127: #{rnn_model_forward.1} parent=1 // pred_check_branch
      %284 = sbr.rel (0) target = $region129
    $region128: #{rnn_model_forward.1} parent=1 // pred_region
      %286 = dma.done [#allocation20], 512
    $region129: #{rnn_model_forward.1} parent=1 // pred_fallthru
      _
    // Predicated region
    $region130: #{rnn_model_forward.1} parent=1 // pred_check
      _
    $region131: #{rnn_model_forward.1} parent=1 // pred_check_branch
      %288 = sbr.rel (0) target = $region133
    $region132: #{rnn_model_forward.1} parent=1 // pred_region
      %290 = dma.done [#allocation23], 128
    $region133: #{rnn_model_forward.1} parent=1 // pred_fallthru
      _
    // Predicated region
    $region134: #{rnn_model_forward.1} parent=1 // pred_check
      _
    $region135: #{rnn_model_forward.1} parent=1 // pred_check_branch
      %292 = sbr.rel (0) target = $region137
    $region136: #{rnn_model_forward.1} parent=1 // pred_region
      %294 = dma.done [#allocation23], 16
    $region137: #{rnn_model_forward.1} parent=1 // pred_fallthru
      _
    // Predicated region
    $region138: #{rnn_model_forward.1} parent=1 // pred_check
      _
    $region139: #{rnn_model_forward.1} parent=1 // pred_check_branch
      %296 = sbr.rel (0) target = $region141
    $region140: #{rnn_model_forward.1} parent=1 // pred_region
      %298 = dma.done [#allocation26], 128
    $region141: #{rnn_model_forward.1} parent=1 // pred_fallthru
      _
    // Predicated region
    $region142: #{rnn_model_forward.1} parent=1 // pred_check
      _
    $region143: #{rnn_model_forward.1} parent=1 // pred_check_branch
      %300 = sbr.rel (0) target = $region145
    $region144: #{rnn_model_forward.1} parent=1 // pred_region
      %302 = dma.done [#allocation26], 128
    $region145: #{rnn_model_forward.1} parent=1 // pred_fallthru
      _
    // Predicated region
    $region146: #{rnn_model_forward.1} parent=1 // pred_check
      _
    $region147: #{rnn_model_forward.1} parent=1 // pred_check_branch
      %304 = sbr.rel (0) target = $region149
    $region148: #{rnn_model_forward.1} parent=1 // pred_region
      %306 = dma.done [#allocation29], 16
    $region149: #{rnn_model_forward.1} parent=1 // pred_fallthru
      _
    %v307 = vld [vmem:[%s0] sm:$0xff]
    %v308 = vld [vmem:[%s0 + $0x8] sm:$0xff]
    %v309 = vld [vmem:[#allocation4] sm:$0x3]
    %v310 = vld [vmem:[#allocation7] sm:$0x3]
    %v311 = vld [vmem:[#allocation12] sm:$0xff]
    %v312 = vld [vmem:[%s7] sm:$0x1]
    %v314 = vperm.slane %v312, 0
    %vm316 = vcmask 64512
    %v318 = vsel %vm316, %v307, 0
    %v321 = vsel %vm316, %v308, 0
    %323 = vmatpush.msra.mxu0 0.0
    %324 = vmatpush.msra.mxu0 0.0
    %325 = vmatpush.msra.mxu0 0.0
    %326 = vmatpush.msra.mxu0 0.0
    %327 = vmatpush.msra.mxu0 0.0
    %328 = vmatpush.msra.mxu0 0.0
    %329 = vmatpush.msra.mxu0 0.0
    %330 = vmatpush.msra.mxu0 0.0
    %331 = vmatpush.msra.mxu0 0.0
    %332 = vmatpush.msra.mxu0 0.0
    %333 = vmatpush.msra.mxu0 0.0
    %334 = vmatpush.msra.mxu0 0.0
    %335 = vmatpush.msra.mxu0 0.0
    %336 = vmatpush.msra.mxu0 0.0
    %337 = vmatpush.msra.mxu0 0.0
    %338 = vmatpush.msra.mxu0 %v311
    %339 = vmatmul.f32.gmra.mxu0 %v318
    %v340 = vpop.f32.mrf.mxu0
    %v341 = vadd.f32 %v314, %v340
    %342 = vmatmul.f32.gmra.mxu0 %v321
    %v343 = vpop.f32.mrf.mxu0
    %v344 = vadd.f32 %v314, %v343
    %345 = vdwg.mxu0
    %v346 = vld [vmem:[%s6] sm:$0xff]
    %v347 = vld [vmem:[%s6 + $0x8] sm:$0xff]
    %v348 = vld [vmem:[%s6 + $0x10] sm:$0xff]
    %v349 = vld [vmem:[%s6 + $0x18] sm:$0xff]
    %vm350 = vcmask 261120
    %v352 = vsel %vm350, %v309, 0
    %354 = vmatpush.msra.mxu0 0.0
    %355 = vmatpush.msra.mxu0 0.0
    %356 = vmatpush.msra.mxu0 0.0
    %357 = vmatpush.msra.mxu0 0.0
    %358 = vmatpush.msra.mxu0 0.0
    %359 = vmatpush.msra.mxu0 0.0
    %360 = vmatpush.msra.mxu0 0.0
    %361 = vmatpush.msra.mxu0 0.0
    %362 = vmatpush.msra.mxu0 0.0
    %363 = vmatpush.msra.mxu0 0.0
    %364 = vmatpush.msra.mxu0 0.0
    %365 = vmatpush.msra.mxu0 0.0
    %366 = vmatpush.msra.mxu0 %v349
    %367 = vmatpush.msra.mxu0 %v348
    %368 = vmatpush.msra.mxu0 %v347
    %369 = vmatpush.msra.mxu0 %v346
    %370 = vmatmul.f32.gmra.mxu0 %v352
    %v371 = vpop.f32.mrf.mxu0
    %v372 = vadd.f32 0.0, %v371
    %373 = vdwg.mxu0
    %v374 = vadd.f32 %v341, %v372
    %v375 = vxor.u32 %v374, 2147483648
    %v376 = vmul.f32 %v375, 1.442695
    %v377 = vpow.pop %v376
    %v378 = vadd.f32 %v377, 1.0
    %v379 = vrcp.pop %v378
    %v380 = vmul.f32 %v378, %v379
    %v381 = vsub.f32 1.0, %v380
    %v382 = vmul.f32 %v379, %v381
    %v383 = vadd.f32 %v379, %v382
    %vm384 = vweird.f32 %v378
    %vm385 = vweird.f32 %v379
    %vm386 = vmor %vm384, %vm385
    %v387 = vsel %vm386, %v379, %v383
    %v388 = vand.u32 2147483647, %v378
    %vm389 = vcmp.eq.f32.partialorder %v388, 8.507059e+37
    %v390 = vand.u32 %v378, 2147483648
    %v391 = vor.u32 1.1754944e-38, %v390
    %v392 = vsel %vm389, %v391, %v387
    %v393 = vmul.f32 1.0, %v392
    %v394 = vtanh.pop %v374
    %396 = vrot.lane.b32.xlu0 %v310, 32
    %v397 = vpop.permute.xlu0 %396
    %v399 = vmul.f32 %v393, %v397
    %401 = vrot.lane.b32.xlu0 %v394, 64
    %v402 = vpop.permute.xlu0 %401
    %v404 = vmul.f32 %v393, %v402
    %406 = vrot.lane.b32.xlu0 %v404, 32
    %v407 = vpop.permute.xlu0 %406
    %v409 = vadd.f32 %v399, %v407
    %v410 = vtanh.pop %v409
    %412 = vrot.lane.b32.xlu0 %v410, 64
    %v413 = vpop.permute.xlu0 %412
    %v415 = vmul.f32 %v393, %v413
    %417 = vrot.lane.b32.xlu0 %v415, 32
    %v418 = vpop.permute.xlu0 %417
    %vm420 = vcmask 254976
    %421 = vst.msk [vmem:[#allocation2] sm:$0x3] %vm420, %v418
    %v422 = vsel %vm350, %v418, 0
    %424 = vmatpush.msra.mxu0 0.0
    %425 = vmatpush.msra.mxu0 0.0
    %426 = vmatpush.msra.mxu0 0.0
    %427 = vmatpush.msra.mxu0 0.0
    %428 = vmatpush.msra.mxu0 0.0
    %429 = vmatpush.msra.mxu0 0.0
    %430 = vmatpush.msra.mxu0 0.0
    %431 = vmatpush.msra.mxu0 0.0
    %432 = vmatpush.msra.mxu0 0.0
    %433 = vmatpush.msra.mxu0 0.0
    %434 = vmatpush.msra.mxu0 0.0
    %435 = vmatpush.msra.mxu0 0.0
    %436 = vmatpush.msra.mxu0 %v349
    %437 = vmatpush.msra.mxu0 %v348
    %438 = vmatpush.msra.mxu0 %v347
    %439 = vmatpush.msra.mxu0 %v346
    %440 = vmatmul.f32.gmra.mxu0 %v422
    %v441 = vpop.f32.mrf.mxu0
    %v442 = vadd.f32 0.0, %v441
    %443 = vdwg.mxu0
    %v445 = vrot.slane %v442, 6
    %v447 = vadd.f32 %v341, %v445
    %v448 = vxor.u32 %v447, 2147483648
    %v449 = vmul.f32 %v448, 1.442695
    %v450 = vpow.pop %v449
    %v451 = vadd.f32 %v450, 1.0
    %v452 = vrcp.pop %v451
    %v453 = vmul.f32 %v451, %v452
    %v454 = vsub.f32 1.0, %v453
    %v455 = vmul.f32 %v452, %v454
    %v456 = vadd.f32 %v452, %v455
    %vm457 = vweird.f32 %v451
    %vm458 = vweird.f32 %v452
    %vm459 = vmor %vm457, %vm458
    %v460 = vsel %vm459, %v452, %v456
    %v461 = vand.u32 2147483647, %v451
    %vm462 = vcmp.eq.f32.partialorder %v461, 8.507059e+37
    %v463 = vand.u32 %v451, 2147483648
    %v464 = vor.u32 1.1754944e-38, %v463
    %v465 = vsel %vm462, %v464, %v460
    %v466 = vmul.f32 1.0, %v465
    %v467 = vtanh.pop %v447
    %v469 = vrot.slane %v409, 6
    %v471 = vmul.f32 %v466, %v469
    %473 = vrot.lane.b32.xlu0 %v467, 64
    %v474 = vpop.permute.xlu0 %473
    %v476 = vmul.f32 %v466, %v474
    %478 = vrot.lane.b32.xlu0 %v476, 32
    %v479 = vpop.permute.xlu0 %478
    %v481 = vadd.f32 %v471, %v479
    %v482 = vtanh.pop %v481
    %484 = vrot.lane.b32.xlu0 %v482, 64
    %v485 = vpop.permute.xlu0 %484
    %v487 = vmul.f32 %v466, %v485
    %489 = vrot.lane.b32.xlu0 %v487, 32
    %v490 = vpop.permute.xlu0 %489
    %vm492 = vcmask 257026
    %493 = vst.msk [vmem:[#allocation2] sm:$0xc] %vm492, %v490
    %v494 = vrot.slane %v487, 2
    %495 = vrot.lane.b32.xlu0 %v494, 32
    %v496 = vpop.permute.xlu0 %495
    %v497 = vsel %vm350, %v496, 0
    %499 = vmatpush.msra.mxu0 0.0
    %500 = vmatpush.msra.mxu0 0.0
    %501 = vmatpush.msra.mxu0 0.0
    %502 = vmatpush.msra.mxu0 0.0
    %503 = vmatpush.msra.mxu0 0.0
    %504 = vmatpush.msra.mxu0 0.0
    %505 = vmatpush.msra.mxu0 0.0
    %506 = vmatpush.msra.mxu0 0.0
    %507 = vmatpush.msra.mxu0 0.0
    %508 = vmatpush.msra.mxu0 0.0
    %509 = vmatpush.msra.mxu0 0.0
    %510 = vmatpush.msra.mxu0 0.0
    %511 = vmatpush.msra.mxu0 %v349
    %512 = vmatpush.msra.mxu0 %v348
    %513 = vmatpush.msra.mxu0 %v347
    %514 = vmatpush.msra.mxu0 %v346
    %515 = vmatmul.f32.gmra.mxu0 %v497
    %v516 = vpop.f32.mrf.mxu0
    %v517 = vadd.f32 0.0, %v516
    %518 = vdwg.mxu0
    %v520 = vrot.slane %v517, 4
    %v522 = vadd.f32 %v341, %v520
    %v523 = vxor.u32 %v522, 2147483648
    %v524 = vmul.f32 %v523, 1.442695
    %v525 = vpow.pop %v524
    %v526 = vadd.f32 %v525, 1.0
    %v527 = vrcp.pop %v526
    %v528 = vmul.f32 %v526, %v527
    %v529 = vsub.f32 1.0, %v528
    %v530 = vmul.f32 %v527, %v529
    %v531 = vadd.f32 %v527, %v530
    %vm532 = vweird.f32 %v526
    %vm533 = vweird.f32 %v527
    %vm534 = vmor %vm532, %vm533
    %v535 = vsel %vm534, %v527, %v531
    %v536 = vand.u32 2147483647, %v526
    %vm537 = vcmp.eq.f32.partialorder %v536, 8.507059e+37
    %v538 = vand.u32 %v526, 2147483648
    %v539 = vor.u32 1.1754944e-38, %v538
    %v540 = vsel %vm537, %v539, %v535
    %v541 = vmul.f32 1.0, %v540
    %v542 = vtanh.pop %v522
    %v544 = vrot.slane %v481, 6
    %v546 = vmul.f32 %v541, %v544
    %548 = vrot.lane.b32.xlu0 %v542, 64
    %v549 = vpop.permute.xlu0 %548
    %v551 = vmul.f32 %v541, %v549
    %553 = vrot.lane.b32.xlu0 %v551, 32
    %v554 = vpop.permute.xlu0 %553
    %v556 = vadd.f32 %v546, %v554
    %v557 = vtanh.pop %v556
    %559 = vrot.lane.b32.xlu0 %v557, 64
    %v560 = vpop.permute.xlu0 %559
    %v562 = vmul.f32 %v541, %v560
    %564 = vrot.lane.b32.xlu0 %v562, 32
    %v565 = vpop.permute.xlu0 %564
    %vm567 = vcmask 259076
    %568 = vst.msk [vmem:[#allocation2] sm:$0x30] %vm567, %v565
    %v569 = vrot.slane %v562, 4
    %570 = vrot.lane.b32.xlu0 %v569, 32
    %v571 = vpop.permute.xlu0 %570
    %v572 = vsel %vm350, %v571, 0
    %574 = vmatpush.msra.mxu0 0.0
    %575 = vmatpush.msra.mxu0 0.0
    %576 = vmatpush.msra.mxu0 0.0
    %577 = vmatpush.msra.mxu0 0.0
    %578 = vmatpush.msra.mxu0 0.0
    %579 = vmatpush.msra.mxu0 0.0
    %580 = vmatpush.msra.mxu0 0.0
    %581 = vmatpush.msra.mxu0 0.0
    %582 = vmatpush.msra.mxu0 0.0
    %583 = vmatpush.msra.mxu0 0.0
    %584 = vmatpush.msra.mxu0 0.0
    %585 = vmatpush.msra.mxu0 0.0
    %586 = vmatpush.msra.mxu0 %v349
    %587 = vmatpush.msra.mxu0 %v348
    %588 = vmatpush.msra.mxu0 %v347
    %589 = vmatpush.msra.mxu0 %v346
    %590 = vmatmul.f32.gmra.mxu0 %v572
    %v591 = vpop.f32.mrf.mxu0
    %v592 = vadd.f32 0.0, %v591
    %593 = vdwg.mxu0
    %v595 = vrot.slane %v592, 2
    %v597 = vadd.f32 %v341, %v595
    %v598 = vxor.u32 %v597, 2147483648
    %v599 = vmul.f32 %v598, 1.442695
    %v600 = vpow.pop %v599
    %v601 = vadd.f32 %v600, 1.0
    %v602 = vrcp.pop %v601
    %v603 = vmul.f32 %v601, %v602
    %v604 = vsub.f32 1.0, %v603
    %v605 = vmul.f32 %v602, %v604
    %v606 = vadd.f32 %v602, %v605
    %vm607 = vweird.f32 %v601
    %vm608 = vweird.f32 %v602
    %vm609 = vmor %vm607, %vm608
    %v610 = vsel %vm609, %v602, %v606
    %v611 = vand.u32 2147483647, %v601
    %vm612 = vcmp.eq.f32.partialorder %v611, 8.507059e+37
    %v613 = vand.u32 %v601, 2147483648
    %v614 = vor.u32 1.1754944e-38, %v613
    %v615 = vsel %vm612, %v614, %v610
    %v616 = vmul.f32 1.0, %v615
    %v617 = vtanh.pop %v597
    %v619 = vrot.slane %v556, 6
    %v621 = vmul.f32 %v616, %v619
    %623 = vrot.lane.b32.xlu0 %v617, 64
    %v624 = vpop.permute.xlu0 %623
    %v626 = vmul.f32 %v616, %v624
    %628 = vrot.lane.b32.xlu0 %v626, 32
    %v629 = vpop.permute.xlu0 %628
    %v631 = vadd.f32 %v621, %v629
    %v632 = vtanh.pop %v631
    %634 = vrot.lane.b32.xlu0 %v632, 64
    %v635 = vpop.permute.xlu0 %634
    %v637 = vmul.f32 %v616, %v635
    %639 = vrot.lane.b32.xlu0 %v637, 32
    %v640 = vpop.permute.xlu0 %639
    %vm642 = vcmask 261126
    %643 = vst.msk [vmem:[#allocation2] sm:$0xc0] %vm642, %v640
    %v644 = vrot.slane %v637, 6
    %645 = vrot.lane.b32.xlu0 %v644, 32
    %v646 = vpop.permute.xlu0 %645
    %v647 = vsel %vm350, %v646, 0
    %649 = vmatpush.msra.mxu0 0.0
    %650 = vmatpush.msra.mxu0 0.0
    %651 = vmatpush.msra.mxu0 0.0
    %652 = vmatpush.msra.mxu0 0.0
    %653 = vmatpush.msra.mxu0 0.0
    %654 = vmatpush.msra.mxu0 0.0
    %655 = vmatpush.msra.mxu0 0.0
    %656 = vmatpush.msra.mxu0 0.0
    %657 = vmatpush.msra.mxu0 0.0
    %658 = vmatpush.msra.mxu0 0.0
    %659 = vmatpush.msra.mxu0 0.0
    %660 = vmatpush.msra.mxu0 0.0
    %661 = vmatpush.msra.mxu0 %v349
    %662 = vmatpush.msra.mxu0 %v348
    %663 = vmatpush.msra.mxu0 %v347
    %664 = vmatpush.msra.mxu0 %v346
    %665 = vmatmul.f32.gmra.mxu0 %v647
    %v666 = vpop.f32.mrf.mxu0
    %v667 = vadd.f32 0.0, %v666
    %668 = vdwg.mxu0
    %v669 = vadd.f32 %v344, %v667
    %v670 = vxor.u32 %v669, 2147483648
    %v671 = vmul.f32 %v670, 1.442695
    %v672 = vpow.pop %v671
    %v673 = vadd.f32 %v672, 1.0
    %v674 = vrcp.pop %v673
    %v675 = vmul.f32 %v673, %v674
    %v676 = vsub.f32 1.0, %v675
    %v677 = vmul.f32 %v674, %v676
    %v678 = vadd.f32 %v674, %v677
    %vm679 = vweird.f32 %v673
    %vm680 = vweird.f32 %v674
    %vm681 = vmor %vm679, %vm680
    %v682 = vsel %vm681, %v674, %v678
    %v683 = vand.u32 2147483647, %v673
    %vm684 = vcmp.eq.f32.partialorder %v683, 8.507059e+37
    %v685 = vand.u32 %v673, 2147483648
    %v686 = vor.u32 1.1754944e-38, %v685
    %v687 = vsel %vm684, %v686, %v682
    %v688 = vmul.f32 1.0, %v687
    %v689 = vtanh.pop %v669
    %v691 = vrot.slane %v631, 6
    %v693 = vmul.f32 %v688, %v691
    %695 = vrot.lane.b32.xlu0 %v689, 64
    %v696 = vpop.permute.xlu0 %695
    %v698 = vmul.f32 %v688, %v696
    %700 = vrot.lane.b32.xlu0 %v698, 32
    %v701 = vpop.permute.xlu0 %700
    %v703 = vadd.f32 %v693, %v701
    %v704 = vtanh.pop %v703
    %706 = vrot.lane.b32.xlu0 %v704, 64
    %v707 = vpop.permute.xlu0 %706
    %v709 = vmul.f32 %v688, %v707
    %711 = vrot.lane.b32.xlu0 %v709, 32
    %v712 = vpop.permute.xlu0 %711
    %714 = vst.msk [vmem:[#allocation2 + $0x8] sm:$0x3] %vm420, %v712
    %v715 = vsel %vm350, %v712, 0
    %717 = vmatpush.msra.mxu0 0.0
    %718 = vmatpush.msra.mxu0 0.0
    %719 = vmatpush.msra.mxu0 0.0
    %720 = vmatpush.msra.mxu0 0.0
    %721 = vmatpush.msra.mxu0 0.0
    %722 = vmatpush.msra.mxu0 0.0
    %723 = vmatpush.msra.mxu0 0.0
    %724 = vmatpush.msra.mxu0 0.0
    %725 = vmatpush.msra.mxu0 0.0
    %726 = vmatpush.msra.mxu0 0.0
    %727 = vmatpush.msra.mxu0 0.0
    %728 = vmatpush.msra.mxu0 0.0
    %729 = vmatpush.msra.mxu0 %v349
    %730 = vmatpush.msra.mxu0 %v348
    %731 = vmatpush.msra.mxu0 %v347
    %732 = vmatpush.msra.mxu0 %v346
    %733 = vmatmul.f32.gmra.mxu0 %v715
    %v734 = vpop.f32.mrf.mxu0
    %v735 = vadd.f32 0.0, %v734
    %736 = vdwg.mxu0
    %v738 = vrot.slane %v735, 6
    %v740 = vadd.f32 %v344, %v738
    %v741 = vxor.u32 %v740, 2147483648
    %v742 = vmul.f32 %v741, 1.442695
    %v743 = vpow.pop %v742
    %v744 = vadd.f32 %v743, 1.0
    %v745 = vrcp.pop %v744
    %v746 = vmul.f32 %v744, %v745
    %v747 = vsub.f32 1.0, %v746
    %v748 = vmul.f32 %v745, %v747
    %v749 = vadd.f32 %v745, %v748
    %vm750 = vweird.f32 %v744
    %vm751 = vweird.f32 %v745
    %vm752 = vmor %vm750, %vm751
    %v753 = vsel %vm752, %v745, %v749
    %v754 = vand.u32 2147483647, %v744
    %vm755 = vcmp.eq.f32.partialorder %v754, 8.507059e+37
    %v756 = vand.u32 %v744, 2147483648
    %v757 = vor.u32 1.1754944e-38, %v756
    %v758 = vsel %vm755, %v757, %v753
    %v759 = vmul.f32 1.0, %v758
    %v760 = vtanh.pop %v740
    %v762 = vrot.slane %v703, 6
    %v764 = vmul.f32 %v759, %v762
    %766 = vrot.lane.b32.xlu0 %v760, 64
    %v767 = vpop.permute.xlu0 %766
    %v769 = vmul.f32 %v759, %v767
    %771 = vrot.lane.b32.xlu0 %v769, 32
    %v772 = vpop.permute.xlu0 %771
    %v774 = vadd.f32 %v764, %v772
    %v775 = vtanh.pop %v774
    %777 = vrot.lane.b32.xlu0 %v775, 64
    %v778 = vpop.permute.xlu0 %777
    %v780 = vmul.f32 %v759, %v778
    %782 = vrot.lane.b32.xlu0 %v780, 32
    %v783 = vpop.permute.xlu0 %782
    %785 = vst.msk [vmem:[#allocation2 + $0x8] sm:$0xc] %vm492, %v783
    %v786 = vrot.slane %v780, 2
    %787 = vrot.lane.b32.xlu0 %v786, 32
    %v788 = vpop.permute.xlu0 %787
    %v789 = vsel %vm350, %v788, 0
    %791 = vmatpush.msra.mxu0 0.0
    %792 = vmatpush.msra.mxu0 0.0
    %793 = vmatpush.msra.mxu0 0.0
    %794 = vmatpush.msra.mxu0 0.0
    %795 = vmatpush.msra.mxu0 0.0
    %796 = vmatpush.msra.mxu0 0.0
    %797 = vmatpush.msra.mxu0 0.0
    %798 = vmatpush.msra.mxu0 0.0
    %799 = vmatpush.msra.mxu0 0.0
    %800 = vmatpush.msra.mxu0 0.0
    %801 = vmatpush.msra.mxu0 0.0
    %802 = vmatpush.msra.mxu0 0.0
    %803 = vmatpush.msra.mxu0 %v349
    %804 = vmatpush.msra.mxu0 %v348
    %805 = vmatpush.msra.mxu0 %v347
    %806 = vmatpush.msra.mxu0 %v346
    %807 = vmatmul.f32.gmra.mxu0 %v789
    %v808 = vpop.f32.mrf.mxu0
    %v809 = vadd.f32 0.0, %v808
    %810 = vdwg.mxu0
    %v812 = vrot.slane %v809, 4
    %v814 = vadd.f32 %v344, %v812
    %v815 = vxor.u32 %v814, 2147483648
    %v816 = vmul.f32 %v815, 1.442695
    %v817 = vpow.pop %v816
    %v818 = vadd.f32 %v817, 1.0
    %v819 = vrcp.pop %v818
    %v820 = vmul.f32 %v818, %v819
    %v821 = vsub.f32 1.0, %v820
    %v822 = vmul.f32 %v819, %v821
    %v823 = vadd.f32 %v819, %v822
    %vm824 = vweird.f32 %v818
    %vm825 = vweird.f32 %v819
    %vm826 = vmor %vm824, %vm825
    %v827 = vsel %vm826, %v819, %v823
    %v828 = vand.u32 2147483647, %v818
    %vm829 = vcmp.eq.f32.partialorder %v828, 8.507059e+37
    %v830 = vand.u32 %v818, 2147483648
    %v831 = vor.u32 1.1754944e-38, %v830
    %v832 = vsel %vm829, %v831, %v827
    %v833 = vmul.f32 1.0, %v832
    %v834 = vtanh.pop %v814
    %v836 = vrot.slane %v774, 6
    %v838 = vmul.f32 %v833, %v836
    %840 = vrot.lane.b32.xlu0 %v834, 64
    %v841 = vpop.permute.xlu0 %840
    %v843 = vmul.f32 %v833, %v841
    %845 = vrot.lane.b32.xlu0 %v843, 32
    %v846 = vpop.permute.xlu0 %845
    %v848 = vadd.f32 %v838, %v846
    %v849 = vtanh.pop %v848
    %851 = vrot.lane.b32.xlu0 %v849, 64
    %v852 = vpop.permute.xlu0 %851
    %v854 = vmul.f32 %v833, %v852
    %856 = vrot.lane.b32.xlu0 %v854, 32
    %v857 = vpop.permute.xlu0 %856
    %859 = vst.msk [vmem:[#allocation2 + $0x8] sm:$0x30] %vm567, %v857
    %v860 = vrot.slane %v854, 4
    %861 = vrot.lane.b32.xlu0 %v860, 32
    %v862 = vpop.permute.xlu0 %861
    %v863 = vsel %vm350, %v862, 0
    %865 = vmatpush.msra.mxu0 0.0
    %866 = vmatpush.msra.mxu0 0.0
    %867 = vmatpush.msra.mxu0 0.0
    %868 = vmatpush.msra.mxu0 0.0
    %869 = vmatpush.msra.mxu0 0.0
    %870 = vmatpush.msra.mxu0 0.0
    %871 = vmatpush.msra.mxu0 0.0
    %872 = vmatpush.msra.mxu0 0.0
    %873 = vmatpush.msra.mxu0 0.0
    %874 = vmatpush.msra.mxu0 0.0
    %875 = vmatpush.msra.mxu0 0.0
    %876 = vmatpush.msra.mxu0 0.0
    %877 = vmatpush.msra.mxu0 %v349
    %878 = vmatpush.msra.mxu0 %v348
    %879 = vmatpush.msra.mxu0 %v347
    %880 = vmatpush.msra.mxu0 %v346
    %881 = vmatmul.f32.gmra.mxu0 %v863
    %v882 = vpop.f32.mrf.mxu0
    %v883 = vadd.f32 0.0, %v882
    %884 = vdwg.mxu0
    %v886 = vrot.slane %v883, 2
    %v888 = vadd.f32 %v344, %v886
    %v889 = vxor.u32 %v888, 2147483648
    %v890 = vmul.f32 %v889, 1.442695
    %v891 = vpow.pop %v890
    %v892 = vadd.f32 %v891, 1.0
    %v893 = vrcp.pop %v892
    %v894 = vmul.f32 %v892, %v893
    %v895 = vsub.f32 1.0, %v894
    %v896 = vmul.f32 %v893, %v895
    %v897 = vadd.f32 %v893, %v896
    %vm898 = vweird.f32 %v892
    %vm899 = vweird.f32 %v893
    %vm900 = vmor %vm898, %vm899
    %v901 = vsel %vm900, %v893, %v897
    %v902 = vand.u32 2147483647, %v892
    %vm903 = vcmp.eq.f32.partialorder %v902, 8.507059e+37
    %v904 = vand.u32 %v892, 2147483648
    %v905 = vor.u32 1.1754944e-38, %v904
    %v906 = vsel %vm903, %v905, %v901
    %v907 = vmul.f32 1.0, %v906
    %v908 = vtanh.pop %v888
    %v910 = vrot.slane %v848, 6
    %v912 = vmul.f32 %v907, %v910
    %914 = vrot.lane.b32.xlu0 %v908, 64
    %v915 = vpop.permute.xlu0 %914
    %v917 = vmul.f32 %v907, %v915
    %919 = vrot.lane.b32.xlu0 %v917, 32
    %v920 = vpop.permute.xlu0 %919
    %v922 = vadd.f32 %v912, %v920
    %v923 = vtanh.pop %v922
    %925 = vrot.lane.b32.xlu0 %v923, 64
    %v926 = vpop.permute.xlu0 %925
    %v928 = vmul.f32 %v907, %v926
    %930 = vrot.lane.b32.xlu0 %v928, 32
    %v931 = vpop.permute.xlu0 %930
    %933 = vst.msk [vmem:[#allocation2 + $0x8] sm:$0xc0] %vm642, %v931
    %934 = vst.msk [vmem:[#allocation30 - $0x6] sm:$0xc0] %vm642, %v931
    %936 = vrot.lane.b32.xlu0 %v922, 96
    %v937 = vpop.permute.xlu0 %936
    %939 = vst.msk [vmem:[#allocation31 - $0x6] sm:$0xc0] %vm642, %v937
    %v940 = vld [vmem:[#allocation2] sm:$0xff]
    %v941 = vld [vmem:[#allocation2 + $0x8] sm:$0xff]
    %s942 = scalar_lea.vmem [#allocation4], 2
    %v943 = vld [vmem:[%s942] sm:$0x3]
    %s944 = scalar_lea.vmem [#allocation7], 2
    %v945 = vld [vmem:[%s944] sm:$0x3]
    %v946 = vld [vmem:[%s8] sm:$0xff]
    %v947 = vld [vmem:[%s8 + $0x8] sm:$0xff]
    %v948 = vld [vmem:[%s8 + $0x10] sm:$0xff]
    %v949 = vld [vmem:[%s8 + $0x18] sm:$0xff]
    %v950 = vld [vmem:[#allocation15] sm:$0x1]
    %v952 = vperm.slane %v950, 0
    %v955 = vsel %vm350, %v940, 0
    %v958 = vsel %vm350, %v941, 0
    %960 = vmatpush.msra.mxu0 0.0
    %961 = vmatpush.msra.mxu0 0.0
    %962 = vmatpush.msra.mxu0 0.0
    %963 = vmatpush.msra.mxu0 0.0
    %964 = vmatpush.msra.mxu0 0.0
    %965 = vmatpush.msra.mxu0 0.0
    %966 = vmatpush.msra.mxu0 0.0
    %967 = vmatpush.msra.mxu0 0.0
    %968 = vmatpush.msra.mxu0 0.0
    %969 = vmatpush.msra.mxu0 0.0
    %970 = vmatpush.msra.mxu0 0.0
    %971 = vmatpush.msra.mxu0 0.0
    %972 = vmatpush.msra.mxu0 %v949
    %973 = vmatpush.msra.mxu0 %v948
    %974 = vmatpush.msra.mxu0 %v947
    %975 = vmatpush.msra.mxu0 %v946
    %976 = vmatmul.f32.gmra.mxu0 %v955
    %v977 = vpop.f32.mrf.mxu0
    %v978 = vadd.f32 %v952, %v977
    %979 = vmatmul.f32.gmra.mxu0 %v958
    %v980 = vpop.f32.mrf.mxu0
    %v981 = vadd.f32 %v952, %v980
    %982 = vdwg.mxu0
    %v983 = vld [vmem:[#allocation13] sm:$0xff]
    %v984 = vld [vmem:[#allocation13 + $0x8] sm:$0xff]
    %v985 = vld [vmem:[#allocation13 + $0x10] sm:$0xff]
    %v986 = vld [vmem:[#allocation13 + $0x18] sm:$0xff]
    %v988 = vsel %vm350, %v943, 0
    %990 = vmatpush.msra.mxu0 0.0
    %991 = vmatpush.msra.mxu0 0.0
    %992 = vmatpush.msra.mxu0 0.0
    %993 = vmatpush.msra.mxu0 0.0
    %994 = vmatpush.msra.mxu0 0.0
    %995 = vmatpush.msra.mxu0 0.0
    %996 = vmatpush.msra.mxu0 0.0
    %997 = vmatpush.msra.mxu0 0.0
    %998 = vmatpush.msra.mxu0 0.0
    %999 = vmatpush.msra.mxu0 0.0
    %1000 = vmatpush.msra.mxu0 0.0
    %1001 = vmatpush.msra.mxu0 0.0
    %1002 = vmatpush.msra.mxu0 %v986
    %1003 = vmatpush.msra.mxu0 %v985
    %1004 = vmatpush.msra.mxu0 %v984
    %1005 = vmatpush.msra.mxu0 %v983
    %1006 = vmatmul.f32.gmra.mxu0 %v988
    %v1007 = vpop.f32.mrf.mxu0
    %v1008 = vadd.f32 0.0, %v1007
    %1009 = vdwg.mxu0
    %v1010 = vadd.f32 %v978, %v1008
    %v1011 = vxor.u32 %v1010, 2147483648
    %v1012 = vmul.f32 %v1011, 1.442695
    %v1013 = vpow.pop %v1012
    %v1014 = vadd.f32 %v1013, 1.0
    %v1015 = vrcp.pop %v1014
    %v1016 = vmul.f32 %v1014, %v1015
    %v1017 = vsub.f32 1.0, %v1016
    %v1018 = vmul.f32 %v1015, %v1017
    %v1019 = vadd.f32 %v1015, %v1018
    %vm1020 = vweird.f32 %v1014
    %vm1021 = vweird.f32 %v1015
    %vm1022 = vmor %vm1020, %vm1021
    %v1023 = vsel %vm1022, %v1015, %v1019
    %v1024 = vand.u32 2147483647, %v1014
    %vm1025 = vcmp.eq.f32.partialorder %v1024, 8.507059e+37
    %v1026 = vand.u32 %v1014, 2147483648
    %v1027 = vor.u32 1.1754944e-38, %v1026
    %v1028 = vsel %vm1025, %v1027, %v1023
    %v1029 = vmul.f32 1.0, %v1028
    %v1030 = vtanh.pop %v1010
    %1032 = vrot.lane.b32.xlu0 %v945, 32
    %v1033 = vpop.permute.xlu0 %1032
    %v1035 = vmul.f32 %v1029, %v1033
    %1037 = vrot.lane.b32.xlu0 %v1030, 64
    %v1038 = vpop.permute.xlu0 %1037
    %v1040 = vmul.f32 %v1029, %v1038
    %1042 = vrot.lane.b32.xlu0 %v1040, 32
    %v1043 = vpop.permute.xlu0 %1042
    %v1045 = vadd.f32 %v1035, %v1043
    %v1046 = vtanh.pop %v1045
    %1048 = vrot.lane.b32.xlu0 %v1046, 64
    %v1049 = vpop.permute.xlu0 %1048
    %v1051 = vmul.f32 %v1029, %v1049
    %1053 = vrot.lane.b32.xlu0 %v1051, 32
    %v1054 = vpop.permute.xlu0 %1053
    %1056 = vst.msk [vmem:[#allocation2] sm:$0x3] %vm420, %v1054
    %v1057 = vsel %vm350, %v1054, 0
    %1059 = vmatpush.msra.mxu0 0.0
    %1060 = vmatpush.msra.mxu0 0.0
    %1061 = vmatpush.msra.mxu0 0.0
    %1062 = vmatpush.msra.mxu0 0.0
    %1063 = vmatpush.msra.mxu0 0.0
    %1064 = vmatpush.msra.mxu0 0.0
    %1065 = vmatpush.msra.mxu0 0.0
    %1066 = vmatpush.msra.mxu0 0.0
    %1067 = vmatpush.msra.mxu0 0.0
    %1068 = vmatpush.msra.mxu0 0.0
    %1069 = vmatpush.msra.mxu0 0.0
    %1070 = vmatpush.msra.mxu0 0.0
    %1071 = vmatpush.msra.mxu0 %v986
    %1072 = vmatpush.msra.mxu0 %v985
    %1073 = vmatpush.msra.mxu0 %v984
    %1074 = vmatpush.msra.mxu0 %v983
    %1075 = vmatmul.f32.gmra.mxu0 %v1057
    %v1076 = vpop.f32.mrf.mxu0
    %v1077 = vadd.f32 0.0, %v1076
    %1078 = vdwg.mxu0
    %v1080 = vrot.slane %v1077, 6
    %v1082 = vadd.f32 %v978, %v1080
    %v1083 = vxor.u32 %v1082, 2147483648
    %v1084 = vmul.f32 %v1083, 1.442695
    %v1085 = vpow.pop %v1084
    %v1086 = vadd.f32 %v1085, 1.0
    %v1087 = vrcp.pop %v1086
    %v1088 = vmul.f32 %v1086, %v1087
    %v1089 = vsub.f32 1.0, %v1088
    %v1090 = vmul.f32 %v1087, %v1089
    %v1091 = vadd.f32 %v1087, %v1090
    %vm1092 = vweird.f32 %v1086
    %vm1093 = vweird.f32 %v1087
    %vm1094 = vmor %vm1092, %vm1093
    %v1095 = vsel %vm1094, %v1087, %v1091
    %v1096 = vand.u32 2147483647, %v1086
    %vm1097 = vcmp.eq.f32.partialorder %v1096, 8.507059e+37
    %v1098 = vand.u32 %v1086, 2147483648
    %v1099 = vor.u32 1.1754944e-38, %v1098
    %v1100 = vsel %vm1097, %v1099, %v1095
    %v1101 = vmul.f32 1.0, %v1100
    %v1102 = vtanh.pop %v1082
    %v1104 = vrot.slane %v1045, 6
    %v1106 = vmul.f32 %v1101, %v1104
    %1108 = vrot.lane.b32.xlu0 %v1102, 64
    %v1109 = vpop.permute.xlu0 %1108
    %v1111 = vmul.f32 %v1101, %v1109
    %1113 = vrot.lane.b32.xlu0 %v1111, 32
    %v1114 = vpop.permute.xlu0 %1113
    %v1116 = vadd.f32 %v1106, %v1114
    %v1117 = vtanh.pop %v1116
    %1119 = vrot.lane.b32.xlu0 %v1117, 64
    %v1120 = vpop.permute.xlu0 %1119
    %v1122 = vmul.f32 %v1101, %v1120
    %1124 = vrot.lane.b32.xlu0 %v1122, 32
    %v1125 = vpop.permute.xlu0 %1124
    %1127 = vst.msk [vmem:[#allocation2] sm:$0xc] %vm492, %v1125
    %v1128 = vrot.slane %v1122, 2
    %1129 = vrot.lane.b32.xlu0 %v1128, 32
    %v1130 = vpop.permute.xlu0 %1129
    %v1131 = vsel %vm350, %v1130, 0
    %1133 = vmatpush.msra.mxu0 0.0
    %1134 = vmatpush.msra.mxu0 0.0
    %1135 = vmatpush.msra.mxu0 0.0
    %1136 = vmatpush.msra.mxu0 0.0
    %1137 = vmatpush.msra.mxu0 0.0
    %1138 = vmatpush.msra.mxu0 0.0
    %1139 = vmatpush.msra.mxu0 0.0
    %1140 = vmatpush.msra.mxu0 0.0
    %1141 = vmatpush.msra.mxu0 0.0
    %1142 = vmatpush.msra.mxu0 0.0
    %1143 = vmatpush.msra.mxu0 0.0
    %1144 = vmatpush.msra.mxu0 0.0
    %1145 = vmatpush.msra.mxu0 %v986
    %1146 = vmatpush.msra.mxu0 %v985
    %1147 = vmatpush.msra.mxu0 %v984
    %1148 = vmatpush.msra.mxu0 %v983
    %1149 = vmatmul.f32.gmra.mxu0 %v1131
    %v1150 = vpop.f32.mrf.mxu0
    %v1151 = vadd.f32 0.0, %v1150
    %1152 = vdwg.mxu0
    %v1154 = vrot.slane %v1151, 4
    %v1156 = vadd.f32 %v978, %v1154
    %v1157 = vxor.u32 %v1156, 2147483648
    %v1158 = vmul.f32 %v1157, 1.442695
    %v1159 = vpow.pop %v1158
    %v1160 = vadd.f32 %v1159, 1.0
    %v1161 = vrcp.pop %v1160
    %v1162 = vmul.f32 %v1160, %v1161
    %v1163 = vsub.f32 1.0, %v1162
    %v1164 = vmul.f32 %v1161, %v1163
    %v1165 = vadd.f32 %v1161, %v1164
    %vm1166 = vweird.f32 %v1160
    %vm1167 = vweird.f32 %v1161
    %vm1168 = vmor %vm1166, %vm1167
    %v1169 = vsel %vm1168, %v1161, %v1165
    %v1170 = vand.u32 2147483647, %v1160
    %vm1171 = vcmp.eq.f32.partialorder %v1170, 8.507059e+37
    %v1172 = vand.u32 %v1160, 2147483648
    %v1173 = vor.u32 1.1754944e-38, %v1172
    %v1174 = vsel %vm1171, %v1173, %v1169
    %v1175 = vmul.f32 1.0, %v1174
    %v1176 = vtanh.pop %v1156
    %v1178 = vrot.slane %v1116, 6
    %v1180 = vmul.f32 %v1175, %v1178
    %1182 = vrot.lane.b32.xlu0 %v1176, 64
    %v1183 = vpop.permute.xlu0 %1182
    %v1185 = vmul.f32 %v1175, %v1183
    %1187 = vrot.lane.b32.xlu0 %v1185, 32
    %v1188 = vpop.permute.xlu0 %1187
    %v1190 = vadd.f32 %v1180, %v1188
    %v1191 = vtanh.pop %v1190
    %1193 = vrot.lane.b32.xlu0 %v1191, 64
    %v1194 = vpop.permute.xlu0 %1193
    %v1196 = vmul.f32 %v1175, %v1194
    %1198 = vrot.lane.b32.xlu0 %v1196, 32
    %v1199 = vpop.permute.xlu0 %1198
    %1201 = vst.msk [vmem:[#allocation2] sm:$0x30] %vm567, %v1199
    %v1202 = vrot.slane %v1196, 4
    %1203 = vrot.lane.b32.xlu0 %v1202, 32
    %v1204 = vpop.permute.xlu0 %1203
    %v1205 = vsel %vm350, %v1204, 0
    %1207 = vmatpush.msra.mxu0 0.0
    %1208 = vmatpush.msra.mxu0 0.0
    %1209 = vmatpush.msra.mxu0 0.0
    %1210 = vmatpush.msra.mxu0 0.0
    %1211 = vmatpush.msra.mxu0 0.0
    %1212 = vmatpush.msra.mxu0 0.0
    %1213 = vmatpush.msra.mxu0 0.0
    %1214 = vmatpush.msra.mxu0 0.0
    %1215 = vmatpush.msra.mxu0 0.0
    %1216 = vmatpush.msra.mxu0 0.0
    %1217 = vmatpush.msra.mxu0 0.0
    %1218 = vmatpush.msra.mxu0 0.0
    %1219 = vmatpush.msra.mxu0 %v986
    %1220 = vmatpush.msra.mxu0 %v985
    %1221 = vmatpush.msra.mxu0 %v984
    %1222 = vmatpush.msra.mxu0 %v983
    %1223 = vmatmul.f32.gmra.mxu0 %v1205
    %v1224 = vpop.f32.mrf.mxu0
    %v1225 = vadd.f32 0.0, %v1224
    %1226 = vdwg.mxu0
    %v1228 = vrot.slane %v1225, 2
    %v1230 = vadd.f32 %v978, %v1228
    %v1231 = vxor.u32 %v1230, 2147483648
    %v1232 = vmul.f32 %v1231, 1.442695
    %v1233 = vpow.pop %v1232
    %v1234 = vadd.f32 %v1233, 1.0
    %v1235 = vrcp.pop %v1234
    %v1236 = vmul.f32 %v1234, %v1235
    %v1237 = vsub.f32 1.0, %v1236
    %v1238 = vmul.f32 %v1235, %v1237
    %v1239 = vadd.f32 %v1235, %v1238
    %vm1240 = vweird.f32 %v1234
    %vm1241 = vweird.f32 %v1235
    %vm1242 = vmor %vm1240, %vm1241
    %v1243 = vsel %vm1242, %v1235, %v1239
    %v1244 = vand.u32 2147483647, %v1234
    %vm1245 = vcmp.eq.f32.partialorder %v1244, 8.507059e+37
    %v1246 = vand.u32 %v1234, 2147483648
    %v1247 = vor.u32 1.1754944e-38, %v1246
    %v1248 = vsel %vm1245, %v1247, %v1243
    %v1249 = vmul.f32 1.0, %v1248
    %v1250 = vtanh.pop %v1230
    %v1252 = vrot.slane %v1190, 6
    %v1254 = vmul.f32 %v1249, %v1252
    %1256 = vrot.lane.b32.xlu0 %v1250, 64
    %v1257 = vpop.permute.xlu0 %1256
    %v1259 = vmul.f32 %v1249, %v1257
    %1261 = vrot.lane.b32.xlu0 %v1259, 32
    %v1262 = vpop.permute.xlu0 %1261
    %v1264 = vadd.f32 %v1254, %v1262
    %v1265 = vtanh.pop %v1264
    %1267 = vrot.lane.b32.xlu0 %v1265, 64
    %v1268 = vpop.permute.xlu0 %1267
    %v1270 = vmul.f32 %v1249, %v1268
    %1272 = vrot.lane.b32.xlu0 %v1270, 32
    %v1273 = vpop.permute.xlu0 %1272
    %1275 = vst.msk [vmem:[#allocation2] sm:$0xc0] %vm642, %v1273
    %v1276 = vrot.slane %v1270, 6
    %1277 = vrot.lane.b32.xlu0 %v1276, 32
    %v1278 = vpop.permute.xlu0 %1277
    %v1279 = vsel %vm350, %v1278, 0
    %1281 = vmatpush.msra.mxu0 0.0
    %1282 = vmatpush.msra.mxu0 0.0
    %1283 = vmatpush.msra.mxu0 0.0
    %1284 = vmatpush.msra.mxu0 0.0
    %1285 = vmatpush.msra.mxu0 0.0
    %1286 = vmatpush.msra.mxu0 0.0
    %1287 = vmatpush.msra.mxu0 0.0
    %1288 = vmatpush.msra.mxu0 0.0
    %1289 = vmatpush.msra.mxu0 0.0
    %1290 = vmatpush.msra.mxu0 0.0
    %1291 = vmatpush.msra.mxu0 0.0
    %1292 = vmatpush.msra.mxu0 0.0
    %1293 = vmatpush.msra.mxu0 %v986
    %1294 = vmatpush.msra.mxu0 %v985
    %1295 = vmatpush.msra.mxu0 %v984
    %1296 = vmatpush.msra.mxu0 %v983
    %1297 = vmatmul.f32.gmra.mxu0 %v1279
    %v1298 = vpop.f32.mrf.mxu0
    %v1299 = vadd.f32 0.0, %v1298
    %1300 = vdwg.mxu0
    %v1301 = vadd.f32 %v981, %v1299
    %v1302 = vxor.u32 %v1301, 2147483648
    %v1303 = vmul.f32 %v1302, 1.442695
    %v1304 = vpow.pop %v1303
    %v1305 = vadd.f32 %v1304, 1.0
    %v1306 = vrcp.pop %v1305
    %v1307 = vmul.f32 %v1305, %v1306
    %v1308 = vsub.f32 1.0, %v1307
    %v1309 = vmul.f32 %v1306, %v1308
    %v1310 = vadd.f32 %v1306, %v1309
    %vm1311 = vweird.f32 %v1305
    %vm1312 = vweird.f32 %v1306
    %vm1313 = vmor %vm1311, %vm1312
    %v1314 = vsel %vm1313, %v1306, %v1310
    %v1315 = vand.u32 2147483647, %v1305
    %vm1316 = vcmp.eq.f32.partialorder %v1315, 8.507059e+37
    %v1317 = vand.u32 %v1305, 2147483648
    %v1318 = vor.u32 1.1754944e-38, %v1317
    %v1319 = vsel %vm1316, %v1318, %v1314
    %v1320 = vmul.f32 1.0, %v1319
    %v1321 = vtanh.pop %v1301
    %v1323 = vrot.slane %v1264, 6
    %v1325 = vmul.f32 %v1320, %v1323
    %1327 = vrot.lane.b32.xlu0 %v1321, 64
    %v1328 = vpop.permute.xlu0 %1327
    %v1330 = vmul.f32 %v1320, %v1328
    %1332 = vrot.lane.b32.xlu0 %v1330, 32
    %v1333 = vpop.permute.xlu0 %1332
    %v1335 = vadd.f32 %v1325, %v1333
    %v1336 = vtanh.pop %v1335
    %1338 = vrot.lane.b32.xlu0 %v1336, 64
    %v1339 = vpop.permute.xlu0 %1338
    %v1341 = vmul.f32 %v1320, %v1339
    %1343 = vrot.lane.b32.xlu0 %v1341, 32
    %v1344 = vpop.permute.xlu0 %1343
    %1346 = vst.msk [vmem:[#allocation2 + $0x8] sm:$0x3] %vm420, %v1344
    %v1347 = vsel %vm350, %v1344, 0
    %1349 = vmatpush.msra.mxu0 0.0
    %1350 = vmatpush.msra.mxu0 0.0
    %1351 = vmatpush.msra.mxu0 0.0
    %1352 = vmatpush.msra.mxu0 0.0
    %1353 = vmatpush.msra.mxu0 0.0
    %1354 = vmatpush.msra.mxu0 0.0
    %1355 = vmatpush.msra.mxu0 0.0
    %1356 = vmatpush.msra.mxu0 0.0
    %1357 = vmatpush.msra.mxu0 0.0
    %1358 = vmatpush.msra.mxu0 0.0
    %1359 = vmatpush.msra.mxu0 0.0
    %1360 = vmatpush.msra.mxu0 0.0
    %1361 = vmatpush.msra.mxu0 %v986
    %1362 = vmatpush.msra.mxu0 %v985
    %1363 = vmatpush.msra.mxu0 %v984
    %1364 = vmatpush.msra.mxu0 %v983
    %1365 = vmatmul.f32.gmra.mxu0 %v1347
    %v1366 = vpop.f32.mrf.mxu0
    %v1367 = vadd.f32 0.0, %v1366
    %1368 = vdwg.mxu0
    %v1370 = vrot.slane %v1367, 6
    %v1372 = vadd.f32 %v981, %v1370
    %v1373 = vxor.u32 %v1372, 2147483648
    %v1374 = vmul.f32 %v1373, 1.442695
    %v1375 = vpow.pop %v1374
    %v1376 = vadd.f32 %v1375, 1.0
    %v1377 = vrcp.pop %v1376
    %v1378 = vmul.f32 %v1376, %v1377
    %v1379 = vsub.f32 1.0, %v1378
    %v1380 = vmul.f32 %v1377, %v1379
    %v1381 = vadd.f32 %v1377, %v1380
    %vm1382 = vweird.f32 %v1376
    %vm1383 = vweird.f32 %v1377
    %vm1384 = vmor %vm1382, %vm1383
    %v1385 = vsel %vm1384, %v1377, %v1381
    %v1386 = vand.u32 2147483647, %v1376
    %vm1387 = vcmp.eq.f32.partialorder %v1386, 8.507059e+37
    %v1388 = vand.u32 %v1376, 2147483648
    %v1389 = vor.u32 1.1754944e-38, %v1388
    %v1390 = vsel %vm1387, %v1389, %v1385
    %v1391 = vmul.f32 1.0, %v1390
    %v1392 = vtanh.pop %v1372
    %v1394 = vrot.slane %v1335, 6
    %v1396 = vmul.f32 %v1391, %v1394
    %1398 = vrot.lane.b32.xlu0 %v1392, 64
    %v1399 = vpop.permute.xlu0 %1398
    %v1401 = vmul.f32 %v1391, %v1399
    %1403 = vrot.lane.b32.xlu0 %v1401, 32
    %v1404 = vpop.permute.xlu0 %1403
    %v1406 = vadd.f32 %v1396, %v1404
    %v1407 = vtanh.pop %v1406
    %1409 = vrot.lane.b32.xlu0 %v1407, 64
    %v1410 = vpop.permute.xlu0 %1409
    %v1412 = vmul.f32 %v1391, %v1410
    %1414 = vrot.lane.b32.xlu0 %v1412, 32
    %v1415 = vpop.permute.xlu0 %1414
    %1417 = vst.msk [vmem:[#allocation2 + $0x8] sm:$0xc] %vm492, %v1415
    %v1418 = vrot.slane %v1412, 2
    %1419 = vrot.lane.b32.xlu0 %v1418, 32
    %v1420 = vpop.permute.xlu0 %1419
    %v1421 = vsel %vm350, %v1420, 0
    %1423 = vmatpush.msra.mxu0 0.0
    %1424 = vmatpush.msra.mxu0 0.0
    %1425 = vmatpush.msra.mxu0 0.0
    %1426 = vmatpush.msra.mxu0 0.0
    %1427 = vmatpush.msra.mxu0 0.0
    %1428 = vmatpush.msra.mxu0 0.0
    %1429 = vmatpush.msra.mxu0 0.0
    %1430 = vmatpush.msra.mxu0 0.0
    %1431 = vmatpush.msra.mxu0 0.0
    %1432 = vmatpush.msra.mxu0 0.0
    %1433 = vmatpush.msra.mxu0 0.0
    %1434 = vmatpush.msra.mxu0 0.0
    %1435 = vmatpush.msra.mxu0 %v986
    %1436 = vmatpush.msra.mxu0 %v985
    %1437 = vmatpush.msra.mxu0 %v984
    %1438 = vmatpush.msra.mxu0 %v983
    %1439 = vmatmul.f32.gmra.mxu0 %v1421
    %v1440 = vpop.f32.mrf.mxu0
    %v1441 = vadd.f32 0.0, %v1440
    %1442 = vdwg.mxu0
    %v1444 = vrot.slane %v1441, 4
    %v1446 = vadd.f32 %v981, %v1444
    %v1447 = vxor.u32 %v1446, 2147483648
    %v1448 = vmul.f32 %v1447, 1.442695
    %v1449 = vpow.pop %v1448
    %v1450 = vadd.f32 %v1449, 1.0
    %v1451 = vrcp.pop %v1450
    %v1452 = vmul.f32 %v1450, %v1451
    %v1453 = vsub.f32 1.0, %v1452
    %v1454 = vmul.f32 %v1451, %v1453
    %v1455 = vadd.f32 %v1451, %v1454
    %vm1456 = vweird.f32 %v1450
    %vm1457 = vweird.f32 %v1451
    %vm1458 = vmor %vm1456, %vm1457
    %v1459 = vsel %vm1458, %v1451, %v1455
    %v1460 = vand.u32 2147483647, %v1450
    %vm1461 = vcmp.eq.f32.partialorder %v1460, 8.507059e+37
    %v1462 = vand.u32 %v1450, 2147483648
    %v1463 = vor.u32 1.1754944e-38, %v1462
    %v1464 = vsel %vm1461, %v1463, %v1459
    %v1465 = vmul.f32 1.0, %v1464
    %v1466 = vtanh.pop %v1446
    %v1468 = vrot.slane %v1406, 6
    %v1470 = vmul.f32 %v1465, %v1468
    %1472 = vrot.lane.b32.xlu0 %v1466, 64
    %v1473 = vpop.permute.xlu0 %1472
    %v1475 = vmul.f32 %v1465, %v1473
    %1477 = vrot.lane.b32.xlu0 %v1475, 32
    %v1478 = vpop.permute.xlu0 %1477
    %v1480 = vadd.f32 %v1470, %v1478
    %v1481 = vtanh.pop %v1480
    %1483 = vrot.lane.b32.xlu0 %v1481, 64
    %v1484 = vpop.permute.xlu0 %1483
    %v1486 = vmul.f32 %v1465, %v1484
    %1488 = vrot.lane.b32.xlu0 %v1486, 32
    %v1489 = vpop.permute.xlu0 %1488
    %1491 = vst.msk [vmem:[#allocation2 + $0x8] sm:$0x30] %vm567, %v1489
    %v1492 = vrot.slane %v1486, 4
    %1493 = vrot.lane.b32.xlu0 %v1492, 32
    %v1494 = vpop.permute.xlu0 %1493
    %v1495 = vsel %vm350, %v1494, 0
    %1497 = vmatpush.msra.mxu0 0.0
    %1498 = vmatpush.msra.mxu0 0.0
    %1499 = vmatpush.msra.mxu0 0.0
    %1500 = vmatpush.msra.mxu0 0.0
    %1501 = vmatpush.msra.mxu0 0.0
    %1502 = vmatpush.msra.mxu0 0.0
    %1503 = vmatpush.msra.mxu0 0.0
    %1504 = vmatpush.msra.mxu0 0.0
    %1505 = vmatpush.msra.mxu0 0.0
    %1506 = vmatpush.msra.mxu0 0.0
    %1507 = vmatpush.msra.mxu0 0.0
    %1508 = vmatpush.msra.mxu0 0.0
    %1509 = vmatpush.msra.mxu0 %v986
    %1510 = vmatpush.msra.mxu0 %v985
    %1511 = vmatpush.msra.mxu0 %v984
    %1512 = vmatpush.msra.mxu0 %v983
    %1513 = vmatmul.f32.gmra.mxu0 %v1495
    %v1514 = vpop.f32.mrf.mxu0
    %v1515 = vadd.f32 0.0, %v1514
    %1516 = vdwg.mxu0
    %v1518 = vrot.slane %v1515, 2
    %v1520 = vadd.f32 %v981, %v1518
    %v1521 = vxor.u32 %v1520, 2147483648
    %v1522 = vmul.f32 %v1521, 1.442695
    %v1523 = vpow.pop %v1522
    %v1524 = vadd.f32 %v1523, 1.0
    %v1525 = vrcp.pop %v1524
    %v1526 = vmul.f32 %v1524, %v1525
    %v1527 = vsub.f32 1.0, %v1526
    %v1528 = vmul.f32 %v1525, %v1527
    %v1529 = vadd.f32 %v1525, %v1528
    %vm1530 = vweird.f32 %v1524
    %vm1531 = vweird.f32 %v1525
    %vm1532 = vmor %vm1530, %vm1531
    %v1533 = vsel %vm1532, %v1525, %v1529
    %v1534 = vand.u32 2147483647, %v1524
    %vm1535 = vcmp.eq.f32.partialorder %v1534, 8.507059e+37
    %v1536 = vand.u32 %v1524, 2147483648
    %v1537 = vor.u32 1.1754944e-38, %v1536
    %v1538 = vsel %vm1535, %v1537, %v1533
    %v1539 = vmul.f32 1.0, %v1538
    %v1540 = vtanh.pop %v1520
    %v1542 = vrot.slane %v1480, 6
    %v1544 = vmul.f32 %v1539, %v1542
    %1546 = vrot.lane.b32.xlu0 %v1540, 64
    %v1547 = vpop.permute.xlu0 %1546
    %v1549 = vmul.f32 %v1539, %v1547
    %1551 = vrot.lane.b32.xlu0 %v1549, 32
    %v1552 = vpop.permute.xlu0 %1551
    %v1554 = vadd.f32 %v1544, %v1552
    %v1555 = vtanh.pop %v1554
    %1557 = vrot.lane.b32.xlu0 %v1555, 64
    %v1558 = vpop.permute.xlu0 %1557
    %v1560 = vmul.f32 %v1539, %v1558
    %1562 = vrot.lane.b32.xlu0 %v1560, 32
    %v1563 = vpop.permute.xlu0 %1562
    %1565 = vst.msk [vmem:[#allocation2 + $0x8] sm:$0xc0] %vm642, %v1563
    %s1566 = scalar_lea.vmem [#allocation30], 2
    %1567 = vst.msk [vmem:[%s1566 - $0x6] sm:$0xc0] %vm642, %v1563
    %1569 = vrot.lane.b32.xlu0 %v1554, 96
    %v1570 = vpop.permute.xlu0 %1569
    %s1572 = scalar_lea.vmem [#allocation31], 2
    %1573 = vst.msk [vmem:[%s1572 - $0x6] sm:$0xc0] %vm642, %v1570
    %v1574 = vld [vmem:[#allocation2] sm:$0xff]
    %v1575 = vld [vmem:[#allocation2 + $0x8] sm:$0xff]
    %v1576 = vld [vmem:[%s11] sm:$0xff]
    %v1577 = vld [vmem:[%s11 + $0x8] sm:$0xff]
    %v1578 = vld [vmem:[%s11 + $0x10] sm:$0xff]
    %v1579 = vld [vmem:[%s11 + $0x18] sm:$0xff]
    %v1580 = vld [vmem:[#allocation16] sm:$0x1]
    %v1582 = vperm.slane %v1580, 0
    %v1585 = vsel %vm350, %v1574, 0
    %v1588 = vsel %vm350, %v1575, 0
    %1590 = vmatpush.msra.mxu0 0.0
    %1591 = vmatpush.msra.mxu0 0.0
    %1592 = vmatpush.msra.mxu0 0.0
    %1593 = vmatpush.msra.mxu0 0.0
    %1594 = vmatpush.msra.mxu0 0.0
    %1595 = vmatpush.msra.mxu0 0.0
    %1596 = vmatpush.msra.mxu0 0.0
    %1597 = vmatpush.msra.mxu0 0.0
    %1598 = vmatpush.msra.mxu0 0.0
    %1599 = vmatpush.msra.mxu0 0.0
    %1600 = vmatpush.msra.mxu0 0.0
    %1601 = vmatpush.msra.mxu0 0.0
    %1602 = vmatpush.msra.mxu0 %v1579
    %1603 = vmatpush.msra.mxu0 %v1578
    %1604 = vmatpush.msra.mxu0 %v1577
    %1605 = vmatpush.msra.mxu0 %v1576
    %1606 = vmatmul.f32.gmra.mxu0 %v1585
    %v1607 = vpop.f32.mrf.mxu0
    %v1608 = vadd.f32 %v1582, %v1607
    %1609 = vmatmul.f32.gmra.mxu0 %v1588
    %v1610 = vpop.f32.mrf.mxu0
    %v1611 = vadd.f32 %v1582, %v1610
    %1612 = vdwg.mxu0
    %v1613 = vmax.f32 %v1608, 0.0
    %v1614 = vmax.f32 %v1611, 0.0
    %v1615 = vld [vmem:[#allocation18] sm:$0xff]
    %v1616 = vld [vmem:[#allocation18 + $0x8] sm:$0xff]
    %v1617 = vld [vmem:[#allocation19] sm:$0x1]
    %v1619 = vperm.slane %v1617, 0
    %vm1621 = vcmask 130048
    %v1623 = vsel %vm1621, %v1613, 0
    %v1626 = vsel %vm1621, %v1614, 0
    %1628 = vmatpush.msra.mxu0 0.0
    %1629 = vmatpush.msra.mxu0 0.0
    %1630 = vmatpush.msra.mxu0 0.0
    %1631 = vmatpush.msra.mxu0 0.0
    %1632 = vmatpush.msra.mxu0 0.0
    %1633 = vmatpush.msra.mxu0 0.0
    %1634 = vmatpush.msra.mxu0 0.0
    %1635 = vmatpush.msra.mxu0 0.0
    %1636 = vmatpush.msra.mxu0 0.0
    %1637 = vmatpush.msra.mxu0 0.0
    %1638 = vmatpush.msra.mxu0 0.0
    %1639 = vmatpush.msra.mxu0 0.0
    %1640 = vmatpush.msra.mxu0 0.0
    %1641 = vmatpush.msra.mxu0 0.0
    %1642 = vmatpush.msra.mxu0 %v1616
    %1643 = vmatpush.msra.mxu0 %v1615
    %1644 = vmatmul.f32.gmra.mxu0 %v1623
    %v1645 = vpop.f32.mrf.mxu0
    %v1646 = vadd.f32 %v1619, %v1645
    %1647 = vmatmul.f32.gmra.mxu0 %v1626
    %v1648 = vpop.f32.mrf.mxu0
    %v1649 = vadd.f32 %v1619, %v1648
    %1650 = vdwg.mxu0
    %v1651 = vmax.f32 %v1646, 0.0
    %v1652 = vmax.f32 %v1649, 0.0
    %v1653 = vld [vmem:[#allocation9] sm:$0x3]
    %v1654 = vld [vmem:[#allocation10] sm:$0x3]
    %v1655 = vld [vmem:[#allocation21] sm:$0xff]
    %v1656 = vld [vmem:[#allocation21 + $0x8] sm:$0xff]
    %v1657 = vld [vmem:[#allocation21 + $0x10] sm:$0xff]
    %v1658 = vld [vmem:[#allocation21 + $0x18] sm:$0xff]
    %v1659 = vld [vmem:[#allocation24] sm:$0x1]
    %v1661 = vperm.slane %v1659, 0
    %v1664 = vsel %vm350, %v1651, 0
    %v1667 = vsel %vm350, %v1652, 0
    %1669 = vmatpush.msra.mxu0 0.0
    %1670 = vmatpush.msra.mxu0 0.0
    %1671 = vmatpush.msra.mxu0 0.0
    %1672 = vmatpush.msra.mxu0 0.0
    %1673 = vmatpush.msra.mxu0 0.0
    %1674 = vmatpush.msra.mxu0 0.0
    %1675 = vmatpush.msra.mxu0 0.0
    %1676 = vmatpush.msra.mxu0 0.0
    %1677 = vmatpush.msra.mxu0 0.0
    %1678 = vmatpush.msra.mxu0 0.0
    %1679 = vmatpush.msra.mxu0 0.0
    %1680 = vmatpush.msra.mxu0 0.0
    %1681 = vmatpush.msra.mxu0 %v1658
    %1682 = vmatpush.msra.mxu0 %v1657
    %1683 = vmatpush.msra.mxu0 %v1656
    %1684 = vmatpush.msra.mxu0 %v1655
    %1685 = vmatmul.f32.gmra.mxu0 %v1664
    %v1686 = vpop.f32.mrf.mxu0
    %v1687 = vadd.f32 %v1661, %v1686
    %1688 = vmatmul.f32.gmra.mxu0 %v1667
    %v1689 = vpop.f32.mrf.mxu0
    %v1690 = vadd.f32 %v1661, %v1689
    %1691 = vdwg.mxu0
    %v1692 = vld [vmem:[#allocation22] sm:$0xff]
    %v1694 = vsel %vm316, %v1653, 0
    %1696 = vmatpush.msra.mxu0 0.0
    %1697 = vmatpush.msra.mxu0 0.0
    %1698 = vmatpush.msra.mxu0 0.0
    %1699 = vmatpush.msra.mxu0 0.0
    %1700 = vmatpush.msra.mxu0 0.0
    %1701 = vmatpush.msra.mxu0 0.0
    %1702 = vmatpush.msra.mxu0 0.0
    %1703 = vmatpush.msra.mxu0 0.0
    %1704 = vmatpush.msra.mxu0 0.0
    %1705 = vmatpush.msra.mxu0 0.0
    %1706 = vmatpush.msra.mxu0 0.0
    %1707 = vmatpush.msra.mxu0 0.0
    %1708 = vmatpush.msra.mxu0 0.0
    %1709 = vmatpush.msra.mxu0 0.0
    %1710 = vmatpush.msra.mxu0 0.0
    %1711 = vmatpush.msra.mxu0 %v1692
    %1712 = vmatmul.f32.gmra.mxu0 %v1694
    %v1713 = vpop.f32.mrf.mxu0
    %v1714 = vadd.f32 0.0, %v1713
    %1715 = vdwg.mxu0
    %v1716 = vadd.f32 %v1687, %v1714
    %v1717 = vxor.u32 %v1716, 2147483648
    %v1718 = vmul.f32 %v1717, 1.442695
    %v1719 = vpow.pop %v1718
    %v1720 = vadd.f32 %v1719, 1.0
    %v1721 = vrcp.pop %v1720
    %v1722 = vmul.f32 %v1720, %v1721
    %v1723 = vsub.f32 1.0, %v1722
    %v1724 = vmul.f32 %v1721, %v1723
    %v1725 = vadd.f32 %v1721, %v1724
    %vm1726 = vweird.f32 %v1720
    %vm1727 = vweird.f32 %v1721
    %vm1728 = vmor %vm1726, %vm1727
    %v1729 = vsel %vm1728, %v1721, %v1725
    %v1730 = vand.u32 2147483647, %v1720
    %vm1731 = vcmp.eq.f32.partialorder %v1730, 8.507059e+37
    %v1732 = vand.u32 %v1720, 2147483648
    %v1733 = vor.u32 1.1754944e-38, %v1732
    %v1734 = vsel %vm1731, %v1733, %v1729
    %v1735 = vmul.f32 1.0, %v1734
    %v1736 = vtanh.pop %v1716
    %1738 = vrot.lane.b32.xlu0 %v1654, 8
    %v1739 = vpop.permute.xlu0 %1738
    %v1741 = vmul.f32 %v1735, %v1739
    %1743 = vrot.lane.b32.xlu0 %v1736, 112
    %v1744 = vpop.permute.xlu0 %1743
    %v1746 = vmul.f32 %v1735, %v1744
    %1748 = vrot.lane.b32.xlu0 %v1746, 8
    %v1749 = vpop.permute.xlu0 %1748
    %v1751 = vadd.f32 %v1741, %v1749
    %v1752 = vtanh.pop %v1751
    %1754 = vrot.lane.b32.xlu0 %v1752, 16
    %v1755 = vpop.permute.xlu0 %1754
    %v1757 = vmul.f32 %v1735, %v1755
    %1759 = vrot.lane.b32.xlu0 %v1757, 104
    %v1760 = vpop.permute.xlu0 %1759
    %vm1762 = vcmask 58368
    %1763 = vst.msk [vmem:[#allocation3] sm:$0x3] %vm1762, %v1760
    %v1764 = vsel %vm316, %v1760, 0
    %1766 = vmatpush.msra.mxu0 0.0
    %1767 = vmatpush.msra.mxu0 0.0
    %1768 = vmatpush.msra.mxu0 0.0
    %1769 = vmatpush.msra.mxu0 0.0
    %1770 = vmatpush.msra.mxu0 0.0
    %1771 = vmatpush.msra.mxu0 0.0
    %1772 = vmatpush.msra.mxu0 0.0
    %1773 = vmatpush.msra.mxu0 0.0
    %1774 = vmatpush.msra.mxu0 0.0
    %1775 = vmatpush.msra.mxu0 0.0
    %1776 = vmatpush.msra.mxu0 0.0
    %1777 = vmatpush.msra.mxu0 0.0
    %1778 = vmatpush.msra.mxu0 0.0
    %1779 = vmatpush.msra.mxu0 0.0
    %1780 = vmatpush.msra.mxu0 0.0
    %1781 = vmatpush.msra.mxu0 %v1692
    %1782 = vmatmul.f32.gmra.mxu0 %v1764
    %v1783 = vpop.f32.mrf.mxu0
    %v1784 = vadd.f32 0.0, %v1783
    %1785 = vdwg.mxu0
    %v1787 = vrot.slane %v1784, 6
    %v1789 = vadd.f32 %v1687, %v1787
    %v1790 = vxor.u32 %v1789, 2147483648
    %v1791 = vmul.f32 %v1790, 1.442695
    %v1792 = vpow.pop %v1791
    %v1793 = vadd.f32 %v1792, 1.0
    %v1794 = vrcp.pop %v1793
    %v1795 = vmul.f32 %v1793, %v1794
    %v1796 = vsub.f32 1.0, %v1795
    %v1797 = vmul.f32 %v1794, %v1796
    %v1798 = vadd.f32 %v1794, %v1797
    %vm1799 = vweird.f32 %v1793
    %vm1800 = vweird.f32 %v1794
    %vm1801 = vmor %vm1799, %vm1800
    %v1802 = vsel %vm1801, %v1794, %v1798
    %v1803 = vand.u32 2147483647, %v1793
    %vm1804 = vcmp.eq.f32.partialorder %v1803, 8.507059e+37
    %v1805 = vand.u32 %v1793, 2147483648
    %v1806 = vor.u32 1.1754944e-38, %v1805
    %v1807 = vsel %vm1804, %v1806, %v1802
    %v1808 = vmul.f32 1.0, %v1807
    %v1809 = vtanh.pop %v1789
    %v1811 = vrot.slane %v1751, 6
    %v1813 = vmul.f32 %v1808, %v1811
    %1815 = vrot.lane.b32.xlu0 %v1809, 112
    %v1816 = vpop.permute.xlu0 %1815
    %v1818 = vmul.f32 %v1808, %v1816
    %1820 = vrot.lane.b32.xlu0 %v1818, 8
    %v1821 = vpop.permute.xlu0 %1820
    %v1823 = vadd.f32 %v1813, %v1821
    %v1824 = vtanh.pop %v1823
    %1826 = vrot.lane.b32.xlu0 %v1824, 16
    %v1827 = vpop.permute.xlu0 %1826
    %v1829 = vmul.f32 %v1808, %v1827
    %1831 = vrot.lane.b32.xlu0 %v1829, 104
    %v1832 = vpop.permute.xlu0 %1831
    %vm1834 = vcmask 60418
    %1835 = vst.msk [vmem:[#allocation3] sm:$0xc] %vm1834, %v1832
    %v1836 = vrot.slane %v1829, 2
    %1837 = vrot.lane.b32.xlu0 %v1836, 104
    %v1838 = vpop.permute.xlu0 %1837
    %v1839 = vsel %vm316, %v1838, 0
    %1841 = vmatpush.msra.mxu0 0.0
    %1842 = vmatpush.msra.mxu0 0.0
    %1843 = vmatpush.msra.mxu0 0.0
    %1844 = vmatpush.msra.mxu0 0.0
    %1845 = vmatpush.msra.mxu0 0.0
    %1846 = vmatpush.msra.mxu0 0.0
    %1847 = vmatpush.msra.mxu0 0.0
    %1848 = vmatpush.msra.mxu0 0.0
    %1849 = vmatpush.msra.mxu0 0.0
    %1850 = vmatpush.msra.mxu0 0.0
    %1851 = vmatpush.msra.mxu0 0.0
    %1852 = vmatpush.msra.mxu0 0.0
    %1853 = vmatpush.msra.mxu0 0.0
    %1854 = vmatpush.msra.mxu0 0.0
    %1855 = vmatpush.msra.mxu0 0.0
    %1856 = vmatpush.msra.mxu0 %v1692
    %1857 = vmatmul.f32.gmra.mxu0 %v1839
    %v1858 = vpop.f32.mrf.mxu0
    %v1859 = vadd.f32 0.0, %v1858
    %1860 = vdwg.mxu0
    %v1862 = vrot.slane %v1859, 4
    %v1864 = vadd.f32 %v1687, %v1862
    %v1865 = vxor.u32 %v1864, 2147483648
    %v1866 = vmul.f32 %v1865, 1.442695
    %v1867 = vpow.pop %v1866
    %v1868 = vadd.f32 %v1867, 1.0
    %v1869 = vrcp.pop %v1868
    %v1870 = vmul.f32 %v1868, %v1869
    %v1871 = vsub.f32 1.0, %v1870
    %v1872 = vmul.f32 %v1869, %v1871
    %v1873 = vadd.f32 %v1869, %v1872
    %vm1874 = vweird.f32 %v1868
    %vm1875 = vweird.f32 %v1869
    %vm1876 = vmor %vm1874, %vm1875
    %v1877 = vsel %vm1876, %v1869, %v1873
    %v1878 = vand.u32 2147483647, %v1868
    %vm1879 = vcmp.eq.f32.partialorder %v1878, 8.507059e+37
    %v1880 = vand.u32 %v1868, 2147483648
    %v1881 = vor.u32 1.1754944e-38, %v1880
    %v1882 = vsel %vm1879, %v1881, %v1877
    %v1883 = vmul.f32 1.0, %v1882
    %v1884 = vtanh.pop %v1864
    %v1886 = vrot.slane %v1823, 6
    %v1888 = vmul.f32 %v1883, %v1886
    %1890 = vrot.lane.b32.xlu0 %v1884, 112
    %v1891 = vpop.permute.xlu0 %1890
    %v1893 = vmul.f32 %v1883, %v1891
    %1895 = vrot.lane.b32.xlu0 %v1893, 8
    %v1896 = vpop.permute.xlu0 %1895
    %v1898 = vadd.f32 %v1888, %v1896
    %v1899 = vtanh.pop %v1898
    %1901 = vrot.lane.b32.xlu0 %v1899, 16
    %v1902 = vpop.permute.xlu0 %1901
    %v1904 = vmul.f32 %v1883, %v1902
    %1906 = vrot.lane.b32.xlu0 %v1904, 104
    %v1907 = vpop.permute.xlu0 %1906
    %vm1909 = vcmask 62468
    %1910 = vst.msk [vmem:[#allocation3] sm:$0x30] %vm1909, %v1907
    %v1911 = vrot.slane %v1904, 4
    %1912 = vrot.lane.b32.xlu0 %v1911, 104
    %v1913 = vpop.permute.xlu0 %1912
    %v1914 = vsel %vm316, %v1913, 0
    %1916 = vmatpush.msra.mxu0 0.0
    %1917 = vmatpush.msra.mxu0 0.0
    %1918 = vmatpush.msra.mxu0 0.0
    %1919 = vmatpush.msra.mxu0 0.0
    %1920 = vmatpush.msra.mxu0 0.0
    %1921 = vmatpush.msra.mxu0 0.0
    %1922 = vmatpush.msra.mxu0 0.0
    %1923 = vmatpush.msra.mxu0 0.0
    %1924 = vmatpush.msra.mxu0 0.0
    %1925 = vmatpush.msra.mxu0 0.0
    %1926 = vmatpush.msra.mxu0 0.0
    %1927 = vmatpush.msra.mxu0 0.0
    %1928 = vmatpush.msra.mxu0 0.0
    %1929 = vmatpush.msra.mxu0 0.0
    %1930 = vmatpush.msra.mxu0 0.0
    %1931 = vmatpush.msra.mxu0 %v1692
    %1932 = vmatmul.f32.gmra.mxu0 %v1914
    %v1933 = vpop.f32.mrf.mxu0
    %v1934 = vadd.f32 0.0, %v1933
    %1935 = vdwg.mxu0
    %v1937 = vrot.slane %v1934, 2
    %v1939 = vadd.f32 %v1687, %v1937
    %v1940 = vxor.u32 %v1939, 2147483648
    %v1941 = vmul.f32 %v1940, 1.442695
    %v1942 = vpow.pop %v1941
    %v1943 = vadd.f32 %v1942, 1.0
    %v1944 = vrcp.pop %v1943
    %v1945 = vmul.f32 %v1943, %v1944
    %v1946 = vsub.f32 1.0, %v1945
    %v1947 = vmul.f32 %v1944, %v1946
    %v1948 = vadd.f32 %v1944, %v1947
    %vm1949 = vweird.f32 %v1943
    %vm1950 = vweird.f32 %v1944
    %vm1951 = vmor %vm1949, %vm1950
    %v1952 = vsel %vm1951, %v1944, %v1948
    %v1953 = vand.u32 2147483647, %v1943
    %vm1954 = vcmp.eq.f32.partialorder %v1953, 8.507059e+37
    %v1955 = vand.u32 %v1943, 2147483648
    %v1956 = vor.u32 1.1754944e-38, %v1955
    %v1957 = vsel %vm1954, %v1956, %v1952
    %v1958 = vmul.f32 1.0, %v1957
    %v1959 = vtanh.pop %v1939
    %v1961 = vrot.slane %v1898, 6
    %v1963 = vmul.f32 %v1958, %v1961
    %1965 = vrot.lane.b32.xlu0 %v1959, 112
    %v1966 = vpop.permute.xlu0 %1965
    %v1968 = vmul.f32 %v1958, %v1966
    %1970 = vrot.lane.b32.xlu0 %v1968, 8
    %v1971 = vpop.permute.xlu0 %1970
    %v1973 = vadd.f32 %v1963, %v1971
    %v1974 = vtanh.pop %v1973
    %1976 = vrot.lane.b32.xlu0 %v1974, 16
    %v1977 = vpop.permute.xlu0 %1976
    %v1979 = vmul.f32 %v1958, %v1977
    %1981 = vrot.lane.b32.xlu0 %v1979, 104
    %v1982 = vpop.permute.xlu0 %1981
    %vm1984 = vcmask 64518
    %1985 = vst.msk [vmem:[#allocation3] sm:$0xc0] %vm1984, %v1982
    %v1986 = vrot.slane %v1979, 6
    %1987 = vrot.lane.b32.xlu0 %v1986, 104
    %v1988 = vpop.permute.xlu0 %1987
    %v1989 = vsel %vm316, %v1988, 0
    %1991 = vmatpush.msra.mxu0 0.0
    %1992 = vmatpush.msra.mxu0 0.0
    %1993 = vmatpush.msra.mxu0 0.0
    %1994 = vmatpush.msra.mxu0 0.0
    %1995 = vmatpush.msra.mxu0 0.0
    %1996 = vmatpush.msra.mxu0 0.0
    %1997 = vmatpush.msra.mxu0 0.0
    %1998 = vmatpush.msra.mxu0 0.0
    %1999 = vmatpush.msra.mxu0 0.0
    %2000 = vmatpush.msra.mxu0 0.0
    %2001 = vmatpush.msra.mxu0 0.0
    %2002 = vmatpush.msra.mxu0 0.0
    %2003 = vmatpush.msra.mxu0 0.0
    %2004 = vmatpush.msra.mxu0 0.0
    %2005 = vmatpush.msra.mxu0 0.0
    %2006 = vmatpush.msra.mxu0 %v1692
    %2007 = vmatmul.f32.gmra.mxu0 %v1989
    %v2008 = vpop.f32.mrf.mxu0
    %v2009 = vadd.f32 0.0, %v2008
    %2010 = vdwg.mxu0
    %v2011 = vadd.f32 %v1690, %v2009
    %v2012 = vxor.u32 %v2011, 2147483648
    %v2013 = vmul.f32 %v2012, 1.442695
    %v2014 = vpow.pop %v2013
    %v2015 = vadd.f32 %v2014, 1.0
    %v2016 = vrcp.pop %v2015
    %v2017 = vmul.f32 %v2015, %v2016
    %v2018 = vsub.f32 1.0, %v2017
    %v2019 = vmul.f32 %v2016, %v2018
    %v2020 = vadd.f32 %v2016, %v2019
    %vm2021 = vweird.f32 %v2015
    %vm2022 = vweird.f32 %v2016
    %vm2023 = vmor %vm2021, %vm2022
    %v2024 = vsel %vm2023, %v2016, %v2020
    %v2025 = vand.u32 2147483647, %v2015
    %vm2026 = vcmp.eq.f32.partialorder %v2025, 8.507059e+37
    %v2027 = vand.u32 %v2015, 2147483648
    %v2028 = vor.u32 1.1754944e-38, %v2027
    %v2029 = vsel %vm2026, %v2028, %v2024
    %v2030 = vmul.f32 1.0, %v2029
    %v2031 = vtanh.pop %v2011
    %v2033 = vrot.slane %v1973, 6
    %v2035 = vmul.f32 %v2030, %v2033
    %2037 = vrot.lane.b32.xlu0 %v2031, 112
    %v2038 = vpop.permute.xlu0 %2037
    %v2040 = vmul.f32 %v2030, %v2038
    %2042 = vrot.lane.b32.xlu0 %v2040, 8
    %v2043 = vpop.permute.xlu0 %2042
    %v2045 = vadd.f32 %v2035, %v2043
    %v2046 = vtanh.pop %v2045
    %2048 = vrot.lane.b32.xlu0 %v2046, 16
    %v2049 = vpop.permute.xlu0 %2048
    %v2051 = vmul.f32 %v2030, %v2049
    %2053 = vrot.lane.b32.xlu0 %v2051, 104
    %v2054 = vpop.permute.xlu0 %2053
    %2056 = vst.msk [vmem:[#allocation3 + $0x8] sm:$0x3] %vm1762, %v2054
    %v2057 = vsel %vm316, %v2054, 0
    %2059 = vmatpush.msra.mxu0 0.0
    %2060 = vmatpush.msra.mxu0 0.0
    %2061 = vmatpush.msra.mxu0 0.0
    %2062 = vmatpush.msra.mxu0 0.0
    %2063 = vmatpush.msra.mxu0 0.0
    %2064 = vmatpush.msra.mxu0 0.0
    %2065 = vmatpush.msra.mxu0 0.0
    %2066 = vmatpush.msra.mxu0 0.0
    %2067 = vmatpush.msra.mxu0 0.0
    %2068 = vmatpush.msra.mxu0 0.0
    %2069 = vmatpush.msra.mxu0 0.0
    %2070 = vmatpush.msra.mxu0 0.0
    %2071 = vmatpush.msra.mxu0 0.0
    %2072 = vmatpush.msra.mxu0 0.0
    %2073 = vmatpush.msra.mxu0 0.0
    %2074 = vmatpush.msra.mxu0 %v1692
    %2075 = vmatmul.f32.gmra.mxu0 %v2057
    %v2076 = vpop.f32.mrf.mxu0
    %v2077 = vadd.f32 0.0, %v2076
    %2078 = vdwg.mxu0
    %v2080 = vrot.slane %v2077, 6
    %v2082 = vadd.f32 %v1690, %v2080
    %v2083 = vxor.u32 %v2082, 2147483648
    %v2084 = vmul.f32 %v2083, 1.442695
    %v2085 = vpow.pop %v2084
    %v2086 = vadd.f32 %v2085, 1.0
    %v2087 = vrcp.pop %v2086
    %v2088 = vmul.f32 %v2086, %v2087
    %v2089 = vsub.f32 1.0, %v2088
    %v2090 = vmul.f32 %v2087, %v2089
    %v2091 = vadd.f32 %v2087, %v2090
    %vm2092 = vweird.f32 %v2086
    %vm2093 = vweird.f32 %v2087
    %vm2094 = vmor %vm2092, %vm2093
    %v2095 = vsel %vm2094, %v2087, %v2091
    %v2096 = vand.u32 2147483647, %v2086
    %vm2097 = vcmp.eq.f32.partialorder %v2096, 8.507059e+37
    %v2098 = vand.u32 %v2086, 2147483648
    %v2099 = vor.u32 1.1754944e-38, %v2098
    %v2100 = vsel %vm2097, %v2099, %v2095
    %v2101 = vmul.f32 1.0, %v2100
    %v2102 = vtanh.pop %v2082
    %v2104 = vrot.slane %v2045, 6
    %v2106 = vmul.f32 %v2101, %v2104
    %2108 = vrot.lane.b32.xlu0 %v2102, 112
    %v2109 = vpop.permute.xlu0 %2108
    %v2111 = vmul.f32 %v2101, %v2109
    %2113 = vrot.lane.b32.xlu0 %v2111, 8
    %v2114 = vpop.permute.xlu0 %2113
    %v2116 = vadd.f32 %v2106, %v2114
    %v2117 = vtanh.pop %v2116
    %2119 = vrot.lane.b32.xlu0 %v2117, 16
    %v2120 = vpop.permute.xlu0 %2119
    %v2122 = vmul.f32 %v2101, %v2120
    %2124 = vrot.lane.b32.xlu0 %v2122, 104
    %v2125 = vpop.permute.xlu0 %2124
    %2127 = vst.msk [vmem:[#allocation3 + $0x8] sm:$0xc] %vm1834, %v2125
    %v2128 = vrot.slane %v2122, 2
    %2129 = vrot.lane.b32.xlu0 %v2128, 104
    %v2130 = vpop.permute.xlu0 %2129
    %v2131 = vsel %vm316, %v2130, 0
    %2133 = vmatpush.msra.mxu0 0.0
    %2134 = vmatpush.msra.mxu0 0.0
    %2135 = vmatpush.msra.mxu0 0.0
    %2136 = vmatpush.msra.mxu0 0.0
    %2137 = vmatpush.msra.mxu0 0.0
    %2138 = vmatpush.msra.mxu0 0.0
    %2139 = vmatpush.msra.mxu0 0.0
    %2140 = vmatpush.msra.mxu0 0.0
    %2141 = vmatpush.msra.mxu0 0.0
    %2142 = vmatpush.msra.mxu0 0.0
    %2143 = vmatpush.msra.mxu0 0.0
    %2144 = vmatpush.msra.mxu0 0.0
    %2145 = vmatpush.msra.mxu0 0.0
    %2146 = vmatpush.msra.mxu0 0.0
    %2147 = vmatpush.msra.mxu0 0.0
    %2148 = vmatpush.msra.mxu0 %v1692
    %2149 = vmatmul.f32.gmra.mxu0 %v2131
    %v2150 = vpop.f32.mrf.mxu0
    %v2151 = vadd.f32 0.0, %v2150
    %2152 = vdwg.mxu0
    %v2154 = vrot.slane %v2151, 4
    %v2156 = vadd.f32 %v1690, %v2154
    %v2157 = vxor.u32 %v2156, 2147483648
    %v2158 = vmul.f32 %v2157, 1.442695
    %v2159 = vpow.pop %v2158
    %v2160 = vadd.f32 %v2159, 1.0
    %v2161 = vrcp.pop %v2160
    %v2162 = vmul.f32 %v2160, %v2161
    %v2163 = vsub.f32 1.0, %v2162
    %v2164 = vmul.f32 %v2161, %v2163
    %v2165 = vadd.f32 %v2161, %v2164
    %vm2166 = vweird.f32 %v2160
    %vm2167 = vweird.f32 %v2161
    %vm2168 = vmor %vm2166, %vm2167
    %v2169 = vsel %vm2168, %v2161, %v2165
    %v2170 = vand.u32 2147483647, %v2160
    %vm2171 = vcmp.eq.f32.partialorder %v2170, 8.507059e+37
    %v2172 = vand.u32 %v2160, 2147483648
    %v2173 = vor.u32 1.1754944e-38, %v2172
    %v2174 = vsel %vm2171, %v2173, %v2169
    %v2175 = vmul.f32 1.0, %v2174
    %v2176 = vtanh.pop %v2156
    %v2178 = vrot.slane %v2116, 6
    %v2180 = vmul.f32 %v2175, %v2178
    %2182 = vrot.lane.b32.xlu0 %v2176, 112
    %v2183 = vpop.permute.xlu0 %2182
    %v2185 = vmul.f32 %v2175, %v2183
    %2187 = vrot.lane.b32.xlu0 %v2185, 8
    %v2188 = vpop.permute.xlu0 %2187
    %v2190 = vadd.f32 %v2180, %v2188
    %v2191 = vtanh.pop %v2190
    %2193 = vrot.lane.b32.xlu0 %v2191, 16
    %v2194 = vpop.permute.xlu0 %2193
    %v2196 = vmul.f32 %v2175, %v2194
    %2198 = vrot.lane.b32.xlu0 %v2196, 104
    %v2199 = vpop.permute.xlu0 %2198
    %2201 = vst.msk [vmem:[#allocation3 + $0x8] sm:$0x30] %vm1909, %v2199
    %v2202 = vrot.slane %v2196, 4
    %2203 = vrot.lane.b32.xlu0 %v2202, 104
    %v2204 = vpop.permute.xlu0 %2203
    %v2205 = vsel %vm316, %v2204, 0
    %2207 = vmatpush.msra.mxu0 0.0
    %2208 = vmatpush.msra.mxu0 0.0
    %2209 = vmatpush.msra.mxu0 0.0
    %2210 = vmatpush.msra.mxu0 0.0
    %2211 = vmatpush.msra.mxu0 0.0
    %2212 = vmatpush.msra.mxu0 0.0
    %2213 = vmatpush.msra.mxu0 0.0
    %2214 = vmatpush.msra.mxu0 0.0
    %2215 = vmatpush.msra.mxu0 0.0
    %2216 = vmatpush.msra.mxu0 0.0
    %2217 = vmatpush.msra.mxu0 0.0
    %2218 = vmatpush.msra.mxu0 0.0
    %2219 = vmatpush.msra.mxu0 0.0
    %2220 = vmatpush.msra.mxu0 0.0
    %2221 = vmatpush.msra.mxu0 0.0
    %2222 = vmatpush.msra.mxu0 %v1692
    %2223 = vmatmul.f32.gmra.mxu0 %v2205
    %v2224 = vpop.f32.mrf.mxu0
    %v2225 = vadd.f32 0.0, %v2224
    %2226 = vdwg.mxu0
    %v2228 = vrot.slane %v2225, 2
    %v2230 = vadd.f32 %v1690, %v2228
    %v2231 = vxor.u32 %v2230, 2147483648
    %v2232 = vmul.f32 %v2231, 1.442695
    %v2233 = vpow.pop %v2232
    %v2234 = vadd.f32 %v2233, 1.0
    %v2235 = vrcp.pop %v2234
    %v2236 = vmul.f32 %v2234, %v2235
    %v2237 = vsub.f32 1.0, %v2236
    %v2238 = vmul.f32 %v2235, %v2237
    %v2239 = vadd.f32 %v2235, %v2238
    %vm2240 = vweird.f32 %v2234
    %vm2241 = vweird.f32 %v2235
    %vm2242 = vmor %vm2240, %vm2241
    %v2243 = vsel %vm2242, %v2235, %v2239
    %v2244 = vand.u32 2147483647, %v2234
    %vm2245 = vcmp.eq.f32.partialorder %v2244, 8.507059e+37
    %v2246 = vand.u32 %v2234, 2147483648
    %v2247 = vor.u32 1.1754944e-38, %v2246
    %v2248 = vsel %vm2245, %v2247, %v2243
    %v2249 = vmul.f32 1.0, %v2248
    %v2250 = vtanh.pop %v2230
    %v2252 = vrot.slane %v2190, 6
    %v2254 = vmul.f32 %v2249, %v2252
    %2256 = vrot.lane.b32.xlu0 %v2250, 112
    %v2257 = vpop.permute.xlu0 %2256
    %v2259 = vmul.f32 %v2249, %v2257
    %2261 = vrot.lane.b32.xlu0 %v2259, 8
    %v2262 = vpop.permute.xlu0 %2261
    %v2264 = vadd.f32 %v2254, %v2262
    %v2265 = vtanh.pop %v2264
    %2267 = vrot.lane.b32.xlu0 %v2265, 16
    %v2268 = vpop.permute.xlu0 %2267
    %v2270 = vmul.f32 %v2249, %v2268
    %2272 = vrot.lane.b32.xlu0 %v2270, 104
    %v2273 = vpop.permute.xlu0 %2272
    %2275 = vst.msk [vmem:[#allocation3 + $0x8] sm:$0xc0] %vm1984, %v2273
    %2276 = vst.msk [vmem:[#allocation33 - $0x6] sm:$0xc0] %vm1984, %v2273
    %2278 = vrot.lane.b32.xlu0 %v2264, 120
    %v2279 = vpop.permute.xlu0 %2278
    %2281 = vst.msk [vmem:[#allocation34 - $0x6] sm:$0xc0] %vm1984, %v2279
    %v2282 = vld [vmem:[#allocation3] sm:$0xff]
    %v2283 = vld [vmem:[#allocation3 + $0x8] sm:$0xff]
    %s2284 = scalar_lea.vmem [#allocation9], 2
    %v2285 = vld [vmem:[%s2284] sm:$0x3]
    %s2286 = scalar_lea.vmem [#allocation10], 2
    %v2287 = vld [vmem:[%s2286] sm:$0x3]
    %v2288 = vld [vmem:[#allocation25] sm:$0xff]
    %v2289 = vld [vmem:[#allocation28] sm:$0x1]
    %v2291 = vperm.slane %v2289, 0
    %v2294 = vsel %vm316, %v2282, 0
    %v2297 = vsel %vm316, %v2283, 0
    %2299 = vmatpush.msra.mxu0 0.0
    %2300 = vmatpush.msra.mxu0 0.0
    %2301 = vmatpush.msra.mxu0 0.0
    %2302 = vmatpush.msra.mxu0 0.0
    %2303 = vmatpush.msra.mxu0 0.0
    %2304 = vmatpush.msra.mxu0 0.0
    %2305 = vmatpush.msra.mxu0 0.0
    %2306 = vmatpush.msra.mxu0 0.0
    %2307 = vmatpush.msra.mxu0 0.0
    %2308 = vmatpush.msra.mxu0 0.0
    %2309 = vmatpush.msra.mxu0 0.0
    %2310 = vmatpush.msra.mxu0 0.0
    %2311 = vmatpush.msra.mxu0 0.0
    %2312 = vmatpush.msra.mxu0 0.0
    %2313 = vmatpush.msra.mxu0 0.0
    %2314 = vmatpush.msra.mxu0 %v2288
    %2315 = vmatmul.f32.gmra.mxu0 %v2294
    %v2316 = vpop.f32.mrf.mxu0
    %v2317 = vadd.f32 %v2291, %v2316
    %2318 = vmatmul.f32.gmra.mxu0 %v2297
    %v2319 = vpop.f32.mrf.mxu0
    %v2320 = vadd.f32 %v2291, %v2319
    %2321 = vdwg.mxu0
    %v2322 = vld [vmem:[#allocation27] sm:$0xff]
    %v2324 = vsel %vm316, %v2285, 0
    %2326 = vmatpush.msra.mxu0 0.0
    %2327 = vmatpush.msra.mxu0 0.0
    %2328 = vmatpush.msra.mxu0 0.0
    %2329 = vmatpush.msra.mxu0 0.0
    %2330 = vmatpush.msra.mxu0 0.0
    %2331 = vmatpush.msra.mxu0 0.0
    %2332 = vmatpush.msra.mxu0 0.0
    %2333 = vmatpush.msra.mxu0 0.0
    %2334 = vmatpush.msra.mxu0 0.0
    %2335 = vmatpush.msra.mxu0 0.0
    %2336 = vmatpush.msra.mxu0 0.0
    %2337 = vmatpush.msra.mxu0 0.0
    %2338 = vmatpush.msra.mxu0 0.0
    %2339 = vmatpush.msra.mxu0 0.0
    %2340 = vmatpush.msra.mxu0 0.0
    %2341 = vmatpush.msra.mxu0 %v2322
    %2342 = vmatmul.f32.gmra.mxu0 %v2324
    %v2343 = vpop.f32.mrf.mxu0
    %v2344 = vadd.f32 0.0, %v2343
    %2345 = vdwg.mxu0
    %v2346 = vadd.f32 %v2317, %v2344
    %v2347 = vxor.u32 %v2346, 2147483648
    %v2348 = vmul.f32 %v2347, 1.442695
    %v2349 = vpow.pop %v2348
    %v2350 = vadd.f32 %v2349, 1.0
    %v2351 = vrcp.pop %v2350
    %v2352 = vmul.f32 %v2350, %v2351
    %v2353 = vsub.f32 1.0, %v2352
    %v2354 = vmul.f32 %v2351, %v2353
    %v2355 = vadd.f32 %v2351, %v2354
    %vm2356 = vweird.f32 %v2350
    %vm2357 = vweird.f32 %v2351
    %vm2358 = vmor %vm2356, %vm2357
    %v2359 = vsel %vm2358, %v2351, %v2355
    %v2360 = vand.u32 2147483647, %v2350
    %vm2361 = vcmp.eq.f32.partialorder %v2360, 8.507059e+37
    %v2362 = vand.u32 %v2350, 2147483648
    %v2363 = vor.u32 1.1754944e-38, %v2362
    %v2364 = vsel %vm2361, %v2363, %v2359
    %v2365 = vmul.f32 1.0, %v2364
    %v2366 = vtanh.pop %v2346
    %2368 = vrot.lane.b32.xlu0 %v2287, 8
    %v2369 = vpop.permute.xlu0 %2368
    %v2371 = vmul.f32 %v2365, %v2369
    %2373 = vrot.lane.b32.xlu0 %v2366, 112
    %v2374 = vpop.permute.xlu0 %2373
    %v2376 = vmul.f32 %v2365, %v2374
    %2378 = vrot.lane.b32.xlu0 %v2376, 8
    %v2379 = vpop.permute.xlu0 %2378
    %v2381 = vadd.f32 %v2371, %v2379
    %v2382 = vtanh.pop %v2381
    %2384 = vrot.lane.b32.xlu0 %v2382, 16
    %v2385 = vpop.permute.xlu0 %2384
    %v2387 = vmul.f32 %v2365, %v2385
    %2389 = vrot.lane.b32.xlu0 %v2387, 104
    %v2390 = vpop.permute.xlu0 %2389
    %2392 = vst.msk [vmem:[%s21] sm:$0x3] %vm1762, %v2390
    %v2393 = vsel %vm316, %v2390, 0
    %2395 = vmatpush.msra.mxu0 0.0
    %2396 = vmatpush.msra.mxu0 0.0
    %2397 = vmatpush.msra.mxu0 0.0
    %2398 = vmatpush.msra.mxu0 0.0
    %2399 = vmatpush.msra.mxu0 0.0
    %2400 = vmatpush.msra.mxu0 0.0
    %2401 = vmatpush.msra.mxu0 0.0
    %2402 = vmatpush.msra.mxu0 0.0
    %2403 = vmatpush.msra.mxu0 0.0
    %2404 = vmatpush.msra.mxu0 0.0
    %2405 = vmatpush.msra.mxu0 0.0
    %2406 = vmatpush.msra.mxu0 0.0
    %2407 = vmatpush.msra.mxu0 0.0
    %2408 = vmatpush.msra.mxu0 0.0
    %2409 = vmatpush.msra.mxu0 0.0
    %2410 = vmatpush.msra.mxu0 %v2322
    %2411 = vmatmul.f32.gmra.mxu0 %v2393
    %v2412 = vpop.f32.mrf.mxu0
    %v2413 = vadd.f32 0.0, %v2412
    %2414 = vdwg.mxu0
    %v2416 = vrot.slane %v2413, 6
    %v2418 = vadd.f32 %v2317, %v2416
    %v2419 = vxor.u32 %v2418, 2147483648
    %v2420 = vmul.f32 %v2419, 1.442695
    %v2421 = vpow.pop %v2420
    %v2422 = vadd.f32 %v2421, 1.0
    %v2423 = vrcp.pop %v2422
    %v2424 = vmul.f32 %v2422, %v2423
    %v2425 = vsub.f32 1.0, %v2424
    %v2426 = vmul.f32 %v2423, %v2425
    %v2427 = vadd.f32 %v2423, %v2426
    %vm2428 = vweird.f32 %v2422
    %vm2429 = vweird.f32 %v2423
    %vm2430 = vmor %vm2428, %vm2429
    %v2431 = vsel %vm2430, %v2423, %v2427
    %v2432 = vand.u32 2147483647, %v2422
    %vm2433 = vcmp.eq.f32.partialorder %v2432, 8.507059e+37
    %v2434 = vand.u32 %v2422, 2147483648
    %v2435 = vor.u32 1.1754944e-38, %v2434
    %v2436 = vsel %vm2433, %v2435, %v2431
    %v2437 = vmul.f32 1.0, %v2436
    %v2438 = vtanh.pop %v2418
    %v2440 = vrot.slane %v2381, 6
    %v2442 = vmul.f32 %v2437, %v2440
    %2444 = vrot.lane.b32.xlu0 %v2438, 112
    %v2445 = vpop.permute.xlu0 %2444
    %v2447 = vmul.f32 %v2437, %v2445
    %2449 = vrot.lane.b32.xlu0 %v2447, 8
    %v2450 = vpop.permute.xlu0 %2449
    %v2452 = vadd.f32 %v2442, %v2450
    %v2453 = vtanh.pop %v2452
    %2455 = vrot.lane.b32.xlu0 %v2453, 16
    %v2456 = vpop.permute.xlu0 %2455
    %v2458 = vmul.f32 %v2437, %v2456
    %2460 = vrot.lane.b32.xlu0 %v2458, 104
    %v2461 = vpop.permute.xlu0 %2460
    %2463 = vst.msk [vmem:[%s21] sm:$0xc] %vm1834, %v2461
    %v2464 = vrot.slane %v2458, 2
    %2465 = vrot.lane.b32.xlu0 %v2464, 104
    %v2466 = vpop.permute.xlu0 %2465
    %v2467 = vsel %vm316, %v2466, 0
    %2469 = vmatpush.msra.mxu0 0.0
    %2470 = vmatpush.msra.mxu0 0.0
    %2471 = vmatpush.msra.mxu0 0.0
    %2472 = vmatpush.msra.mxu0 0.0
    %2473 = vmatpush.msra.mxu0 0.0
    %2474 = vmatpush.msra.mxu0 0.0
    %2475 = vmatpush.msra.mxu0 0.0
    %2476 = vmatpush.msra.mxu0 0.0
    %2477 = vmatpush.msra.mxu0 0.0
    %2478 = vmatpush.msra.mxu0 0.0
    %2479 = vmatpush.msra.mxu0 0.0
    %2480 = vmatpush.msra.mxu0 0.0
    %2481 = vmatpush.msra.mxu0 0.0
    %2482 = vmatpush.msra.mxu0 0.0
    %2483 = vmatpush.msra.mxu0 0.0
    %2484 = vmatpush.msra.mxu0 %v2322
    %2485 = vmatmul.f32.gmra.mxu0 %v2467
    %v2486 = vpop.f32.mrf.mxu0
    %v2487 = vadd.f32 0.0, %v2486
    %2488 = vdwg.mxu0
    %v2490 = vrot.slane %v2487, 4
    %v2492 = vadd.f32 %v2317, %v2490
    %v2493 = vxor.u32 %v2492, 2147483648
    %v2494 = vmul.f32 %v2493, 1.442695
    %v2495 = vpow.pop %v2494
    %v2496 = vadd.f32 %v2495, 1.0
    %v2497 = vrcp.pop %v2496
    %v2498 = vmul.f32 %v2496, %v2497
    %v2499 = vsub.f32 1.0, %v2498
    %v2500 = vmul.f32 %v2497, %v2499
    %v2501 = vadd.f32 %v2497, %v2500
    %vm2502 = vweird.f32 %v2496
    %vm2503 = vweird.f32 %v2497
    %vm2504 = vmor %vm2502, %vm2503
    %v2505 = vsel %vm2504, %v2497, %v2501
    %v2506 = vand.u32 2147483647, %v2496
    %vm2507 = vcmp.eq.f32.partialorder %v2506, 8.507059e+37
    %v2508 = vand.u32 %v2496, 2147483648
    %v2509 = vor.u32 1.1754944e-38, %v2508
    %v2510 = vsel %vm2507, %v2509, %v2505
    %v2511 = vmul.f32 1.0, %v2510
    %v2512 = vtanh.pop %v2492
    %v2514 = vrot.slane %v2452, 6
    %v2516 = vmul.f32 %v2511, %v2514
    %2518 = vrot.lane.b32.xlu0 %v2512, 112
    %v2519 = vpop.permute.xlu0 %2518
    %v2521 = vmul.f32 %v2511, %v2519
    %2523 = vrot.lane.b32.xlu0 %v2521, 8
    %v2524 = vpop.permute.xlu0 %2523
    %v2526 = vadd.f32 %v2516, %v2524
    %v2527 = vtanh.pop %v2526
    %2529 = vrot.lane.b32.xlu0 %v2527, 16
    %v2530 = vpop.permute.xlu0 %2529
    %v2532 = vmul.f32 %v2511, %v2530
    %2534 = vrot.lane.b32.xlu0 %v2532, 104
    %v2535 = vpop.permute.xlu0 %2534
    %2537 = vst.msk [vmem:[%s21] sm:$0x30] %vm1909, %v2535
    %v2538 = vrot.slane %v2532, 4
    %2539 = vrot.lane.b32.xlu0 %v2538, 104
    %v2540 = vpop.permute.xlu0 %2539
    %v2541 = vsel %vm316, %v2540, 0
    %2543 = vmatpush.msra.mxu0 0.0
    %2544 = vmatpush.msra.mxu0 0.0
    %2545 = vmatpush.msra.mxu0 0.0
    %2546 = vmatpush.msra.mxu0 0.0
    %2547 = vmatpush.msra.mxu0 0.0
    %2548 = vmatpush.msra.mxu0 0.0
    %2549 = vmatpush.msra.mxu0 0.0
    %2550 = vmatpush.msra.mxu0 0.0
    %2551 = vmatpush.msra.mxu0 0.0
    %2552 = vmatpush.msra.mxu0 0.0
    %2553 = vmatpush.msra.mxu0 0.0
    %2554 = vmatpush.msra.mxu0 0.0
    %2555 = vmatpush.msra.mxu0 0.0
    %2556 = vmatpush.msra.mxu0 0.0
    %2557 = vmatpush.msra.mxu0 0.0
    %2558 = vmatpush.msra.mxu0 %v2322
    %2559 = vmatmul.f32.gmra.mxu0 %v2541
    %v2560 = vpop.f32.mrf.mxu0
    %v2561 = vadd.f32 0.0, %v2560
    %2562 = vdwg.mxu0
    %v2564 = vrot.slane %v2561, 2
    %v2566 = vadd.f32 %v2317, %v2564
    %v2567 = vxor.u32 %v2566, 2147483648
    %v2568 = vmul.f32 %v2567, 1.442695
    %v2569 = vpow.pop %v2568
    %v2570 = vadd.f32 %v2569, 1.0
    %v2571 = vrcp.pop %v2570
    %v2572 = vmul.f32 %v2570, %v2571
    %v2573 = vsub.f32 1.0, %v2572
    %v2574 = vmul.f32 %v2571, %v2573
    %v2575 = vadd.f32 %v2571, %v2574
    %vm2576 = vweird.f32 %v2570
    %vm2577 = vweird.f32 %v2571
    %vm2578 = vmor %vm2576, %vm2577
    %v2579 = vsel %vm2578, %v2571, %v2575
    %v2580 = vand.u32 2147483647, %v2570
    %vm2581 = vcmp.eq.f32.partialorder %v2580, 8.507059e+37
    %v2582 = vand.u32 %v2570, 2147483648
    %v2583 = vor.u32 1.1754944e-38, %v2582
    %v2584 = vsel %vm2581, %v2583, %v2579
    %v2585 = vmul.f32 1.0, %v2584
    %v2586 = vtanh.pop %v2566
    %v2588 = vrot.slane %v2526, 6
    %v2590 = vmul.f32 %v2585, %v2588
    %2592 = vrot.lane.b32.xlu0 %v2586, 112
    %v2593 = vpop.permute.xlu0 %2592
    %v2595 = vmul.f32 %v2585, %v2593
    %2597 = vrot.lane.b32.xlu0 %v2595, 8
    %v2598 = vpop.permute.xlu0 %2597
    %v2600 = vadd.f32 %v2590, %v2598
    %v2601 = vtanh.pop %v2600
    %2603 = vrot.lane.b32.xlu0 %v2601, 16
    %v2604 = vpop.permute.xlu0 %2603
    %v2606 = vmul.f32 %v2585, %v2604
    %2608 = vrot.lane.b32.xlu0 %v2606, 104
    %v2609 = vpop.permute.xlu0 %2608
    %2611 = vst.msk [vmem:[%s21] sm:$0xc0] %vm1984, %v2609
    %v2612 = vrot.slane %v2606, 6
    %2613 = vrot.lane.b32.xlu0 %v2612, 104
    %v2614 = vpop.permute.xlu0 %2613
    %v2615 = vsel %vm316, %v2614, 0
    %2617 = vmatpush.msra.mxu0 0.0
    %2618 = vmatpush.msra.mxu0 0.0
    %2619 = vmatpush.msra.mxu0 0.0
    %2620 = vmatpush.msra.mxu0 0.0
    %2621 = vmatpush.msra.mxu0 0.0
    %2622 = vmatpush.msra.mxu0 0.0
    %2623 = vmatpush.msra.mxu0 0.0
    %2624 = vmatpush.msra.mxu0 0.0
    %2625 = vmatpush.msra.mxu0 0.0
    %2626 = vmatpush.msra.mxu0 0.0
    %2627 = vmatpush.msra.mxu0 0.0
    %2628 = vmatpush.msra.mxu0 0.0
    %2629 = vmatpush.msra.mxu0 0.0
    %2630 = vmatpush.msra.mxu0 0.0
    %2631 = vmatpush.msra.mxu0 0.0
    %2632 = vmatpush.msra.mxu0 %v2322
    %2633 = vmatmul.f32.gmra.mxu0 %v2615
    %v2634 = vpop.f32.mrf.mxu0
    %v2635 = vadd.f32 0.0, %v2634
    %2636 = vdwg.mxu0
    %v2637 = vadd.f32 %v2320, %v2635
    %v2638 = vxor.u32 %v2637, 2147483648
    %v2639 = vmul.f32 %v2638, 1.442695
    %v2640 = vpow.pop %v2639
    %v2641 = vadd.f32 %v2640, 1.0
    %v2642 = vrcp.pop %v2641
    %v2643 = vmul.f32 %v2641, %v2642
    %v2644 = vsub.f32 1.0, %v2643
    %v2645 = vmul.f32 %v2642, %v2644
    %v2646 = vadd.f32 %v2642, %v2645
    %vm2647 = vweird.f32 %v2641
    %vm2648 = vweird.f32 %v2642
    %vm2649 = vmor %vm2647, %vm2648
    %v2650 = vsel %vm2649, %v2642, %v2646
    %v2651 = vand.u32 2147483647, %v2641
    %vm2652 = vcmp.eq.f32.partialorder %v2651, 8.507059e+37
    %v2653 = vand.u32 %v2641, 2147483648
    %v2654 = vor.u32 1.1754944e-38, %v2653
    %v2655 = vsel %vm2652, %v2654, %v2650
    %v2656 = vmul.f32 1.0, %v2655
    %v2657 = vtanh.pop %v2637
    %v2659 = vrot.slane %v2600, 6
    %v2661 = vmul.f32 %v2656, %v2659
    %2663 = vrot.lane.b32.xlu0 %v2657, 112
    %v2664 = vpop.permute.xlu0 %2663
    %v2666 = vmul.f32 %v2656, %v2664
    %2668 = vrot.lane.b32.xlu0 %v2666, 8
    %v2669 = vpop.permute.xlu0 %2668
    %v2671 = vadd.f32 %v2661, %v2669
    %v2672 = vtanh.pop %v2671
    %2674 = vrot.lane.b32.xlu0 %v2672, 16
    %v2675 = vpop.permute.xlu0 %2674
    %v2677 = vmul.f32 %v2656, %v2675
    %2679 = vrot.lane.b32.xlu0 %v2677, 104
    %v2680 = vpop.permute.xlu0 %2679
    %2682 = vst.msk [vmem:[%s21 + $0x8] sm:$0x3] %vm1762, %v2680
    %v2683 = vsel %vm316, %v2680, 0
    %2685 = vmatpush.msra.mxu0 0.0
    %2686 = vmatpush.msra.mxu0 0.0
    %2687 = vmatpush.msra.mxu0 0.0
    %2688 = vmatpush.msra.mxu0 0.0
    %2689 = vmatpush.msra.mxu0 0.0
    %2690 = vmatpush.msra.mxu0 0.0
    %2691 = vmatpush.msra.mxu0 0.0
    %2692 = vmatpush.msra.mxu0 0.0
    %2693 = vmatpush.msra.mxu0 0.0
    %2694 = vmatpush.msra.mxu0 0.0
    %2695 = vmatpush.msra.mxu0 0.0
    %2696 = vmatpush.msra.mxu0 0.0
    %2697 = vmatpush.msra.mxu0 0.0
    %2698 = vmatpush.msra.mxu0 0.0
    %2699 = vmatpush.msra.mxu0 0.0
    %2700 = vmatpush.msra.mxu0 %v2322
    %2701 = vmatmul.f32.gmra.mxu0 %v2683
    %v2702 = vpop.f32.mrf.mxu0
    %v2703 = vadd.f32 0.0, %v2702
    %2704 = vdwg.mxu0
    %v2706 = vrot.slane %v2703, 6
    %v2708 = vadd.f32 %v2320, %v2706
    %v2709 = vxor.u32 %v2708, 2147483648
    %v2710 = vmul.f32 %v2709, 1.442695
    %v2711 = vpow.pop %v2710
    %v2712 = vadd.f32 %v2711, 1.0
    %v2713 = vrcp.pop %v2712
    %v2714 = vmul.f32 %v2712, %v2713
    %v2715 = vsub.f32 1.0, %v2714
    %v2716 = vmul.f32 %v2713, %v2715
    %v2717 = vadd.f32 %v2713, %v2716
    %vm2718 = vweird.f32 %v2712
    %vm2719 = vweird.f32 %v2713
    %vm2720 = vmor %vm2718, %vm2719
    %v2721 = vsel %vm2720, %v2713, %v2717
    %v2722 = vand.u32 2147483647, %v2712
    %vm2723 = vcmp.eq.f32.partialorder %v2722, 8.507059e+37
    %v2724 = vand.u32 %v2712, 2147483648
    %v2725 = vor.u32 1.1754944e-38, %v2724
    %v2726 = vsel %vm2723, %v2725, %v2721
    %v2727 = vmul.f32 1.0, %v2726
    %v2728 = vtanh.pop %v2708
    %v2730 = vrot.slane %v2671, 6
    %v2732 = vmul.f32 %v2727, %v2730
    %2734 = vrot.lane.b32.xlu0 %v2728, 112
    %v2735 = vpop.permute.xlu0 %2734
    %v2737 = vmul.f32 %v2727, %v2735
    %2739 = vrot.lane.b32.xlu0 %v2737, 8
    %v2740 = vpop.permute.xlu0 %2739
    %v2742 = vadd.f32 %v2732, %v2740
    %v2743 = vtanh.pop %v2742
    %2745 = vrot.lane.b32.xlu0 %v2743, 16
    %v2746 = vpop.permute.xlu0 %2745
    %v2748 = vmul.f32 %v2727, %v2746
    %2750 = vrot.lane.b32.xlu0 %v2748, 104
    %v2751 = vpop.permute.xlu0 %2750
    %2753 = vst.msk [vmem:[%s21 + $0x8] sm:$0xc] %vm1834, %v2751
    %v2754 = vrot.slane %v2748, 2
    %2755 = vrot.lane.b32.xlu0 %v2754, 104
    %v2756 = vpop.permute.xlu0 %2755
    %v2757 = vsel %vm316, %v2756, 0
    %2759 = vmatpush.msra.mxu0 0.0
    %2760 = vmatpush.msra.mxu0 0.0
    %2761 = vmatpush.msra.mxu0 0.0
    %2762 = vmatpush.msra.mxu0 0.0
    %2763 = vmatpush.msra.mxu0 0.0
    %2764 = vmatpush.msra.mxu0 0.0
    %2765 = vmatpush.msra.mxu0 0.0
    %2766 = vmatpush.msra.mxu0 0.0
    %2767 = vmatpush.msra.mxu0 0.0
    %2768 = vmatpush.msra.mxu0 0.0
    %2769 = vmatpush.msra.mxu0 0.0
    %2770 = vmatpush.msra.mxu0 0.0
    %2771 = vmatpush.msra.mxu0 0.0
    %2772 = vmatpush.msra.mxu0 0.0
    %2773 = vmatpush.msra.mxu0 0.0
    %2774 = vmatpush.msra.mxu0 %v2322
    %2775 = vmatmul.f32.gmra.mxu0 %v2757
    %v2776 = vpop.f32.mrf.mxu0
    %v2777 = vadd.f32 0.0, %v2776
    %2778 = vdwg.mxu0
    %v2780 = vrot.slane %v2777, 4
    %v2782 = vadd.f32 %v2320, %v2780
    %v2783 = vxor.u32 %v2782, 2147483648
    %v2784 = vmul.f32 %v2783, 1.442695
    %v2785 = vpow.pop %v2784
    %v2786 = vadd.f32 %v2785, 1.0
    %v2787 = vrcp.pop %v2786
    %v2788 = vmul.f32 %v2786, %v2787
    %v2789 = vsub.f32 1.0, %v2788
    %v2790 = vmul.f32 %v2787, %v2789
    %v2791 = vadd.f32 %v2787, %v2790
    %vm2792 = vweird.f32 %v2786
    %vm2793 = vweird.f32 %v2787
    %vm2794 = vmor %vm2792, %vm2793
    %v2795 = vsel %vm2794, %v2787, %v2791
    %v2796 = vand.u32 2147483647, %v2786
    %vm2797 = vcmp.eq.f32.partialorder %v2796, 8.507059e+37
    %v2798 = vand.u32 %v2786, 2147483648
    %v2799 = vor.u32 1.1754944e-38, %v2798
    %v2800 = vsel %vm2797, %v2799, %v2795
    %v2801 = vmul.f32 1.0, %v2800
    %v2802 = vtanh.pop %v2782
    %v2804 = vrot.slane %v2742, 6
    %v2806 = vmul.f32 %v2801, %v2804
    %2808 = vrot.lane.b32.xlu0 %v2802, 112
    %v2809 = vpop.permute.xlu0 %2808
    %v2811 = vmul.f32 %v2801, %v2809
    %2813 = vrot.lane.b32.xlu0 %v2811, 8
    %v2814 = vpop.permute.xlu0 %2813
    %v2816 = vadd.f32 %v2806, %v2814
    %v2817 = vtanh.pop %v2816
    %2819 = vrot.lane.b32.xlu0 %v2817, 16
    %v2820 = vpop.permute.xlu0 %2819
    %v2822 = vmul.f32 %v2801, %v2820
    %2824 = vrot.lane.b32.xlu0 %v2822, 104
    %v2825 = vpop.permute.xlu0 %2824
    %2827 = vst.msk [vmem:[%s21 + $0x8] sm:$0x30] %vm1909, %v2825
    %v2828 = vrot.slane %v2822, 4
    %2829 = vrot.lane.b32.xlu0 %v2828, 104
    %v2830 = vpop.permute.xlu0 %2829
    %v2831 = vsel %vm316, %v2830, 0
    %2833 = vmatpush.msra.mxu0 0.0
    %2834 = vmatpush.msra.mxu0 0.0
    %2835 = vmatpush.msra.mxu0 0.0
    %2836 = vmatpush.msra.mxu0 0.0
    %2837 = vmatpush.msra.mxu0 0.0
    %2838 = vmatpush.msra.mxu0 0.0
    %2839 = vmatpush.msra.mxu0 0.0
    %2840 = vmatpush.msra.mxu0 0.0
    %2841 = vmatpush.msra.mxu0 0.0
    %2842 = vmatpush.msra.mxu0 0.0
    %2843 = vmatpush.msra.mxu0 0.0
    %2844 = vmatpush.msra.mxu0 0.0
    %2845 = vmatpush.msra.mxu0 0.0
    %2846 = vmatpush.msra.mxu0 0.0
    %2847 = vmatpush.msra.mxu0 0.0
    %2848 = vmatpush.msra.mxu0 %v2322
    %2849 = vmatmul.f32.gmra.mxu0 %v2831
    %v2850 = vpop.f32.mrf.mxu0
    %v2851 = vadd.f32 0.0, %v2850
    %2852 = vdwg.mxu0
    %v2854 = vrot.slane %v2851, 2
    %v2856 = vadd.f32 %v2320, %v2854
    %v2857 = vxor.u32 %v2856, 2147483648
    %v2858 = vmul.f32 %v2857, 1.442695
    %v2859 = vpow.pop %v2858
    %v2860 = vadd.f32 %v2859, 1.0
    %v2861 = vrcp.pop %v2860
    %v2862 = vmul.f32 %v2860, %v2861
    %v2863 = vsub.f32 1.0, %v2862
    %v2864 = vmul.f32 %v2861, %v2863
    %v2865 = vadd.f32 %v2861, %v2864
    %vm2866 = vweird.f32 %v2860
    %vm2867 = vweird.f32 %v2861
    %vm2868 = vmor %vm2866, %vm2867
    %v2869 = vsel %vm2868, %v2861, %v2865
    %v2870 = vand.u32 2147483647, %v2860
    %vm2871 = vcmp.eq.f32.partialorder %v2870, 8.507059e+37
    %v2872 = vand.u32 %v2860, 2147483648
    %v2873 = vor.u32 1.1754944e-38, %v2872
    %v2874 = vsel %vm2871, %v2873, %v2869
    %v2875 = vmul.f32 1.0, %v2874
    %v2876 = vtanh.pop %v2856
    %v2878 = vrot.slane %v2816, 6
    %v2880 = vmul.f32 %v2875, %v2878
    %2882 = vrot.lane.b32.xlu0 %v2876, 112
    %v2883 = vpop.permute.xlu0 %2882
    %v2885 = vmul.f32 %v2875, %v2883
    %2887 = vrot.lane.b32.xlu0 %v2885, 8
    %v2888 = vpop.permute.xlu0 %2887
    %v2890 = vadd.f32 %v2880, %v2888
    %v2891 = vtanh.pop %v2890
    %2893 = vrot.lane.b32.xlu0 %v2891, 16
    %v2894 = vpop.permute.xlu0 %2893
    %v2896 = vmul.f32 %v2875, %v2894
    %2898 = vrot.lane.b32.xlu0 %v2896, 104
    %v2899 = vpop.permute.xlu0 %2898
    %2901 = vst.msk [vmem:[%s21 + $0x8] sm:$0xc0] %vm1984, %v2899
    %s2902 = scalar_lea.vmem [#allocation33], 2
    %2903 = vst.msk [vmem:[%s2902 - $0x6] sm:$0xc0] %vm1984, %v2899
    %2905 = vrot.lane.b32.xlu0 %v2890, 120
    %v2906 = vpop.permute.xlu0 %2905
    %s2908 = scalar_lea.vmem [#allocation34], 2
    %2909 = vst.msk [vmem:[%s2908 - $0x6] sm:$0xc0] %vm1984, %v2906
    // Predicated region
    $region150: #{rnn_model_forward.1} parent=1 // pred_check
      _
    $region151: #{rnn_model_forward.1} parent=1 // pred_check_branch
      %2911 = sbr.rel (0) target = $region153
    $region152: #{rnn_model_forward.1} parent=1 // pred_region
      _
    $region153: #{rnn_model_forward.1} parent=1 // pred_fallthru
      _
    // Predicated region
    $region154: #{rnn_model_forward.1} parent=1 // pred_check
      _
    $region155: #{rnn_model_forward.1} parent=1 // pred_check_branch
      %2913 = sbr.rel (0) target = $region157
    $region156: #{rnn_model_forward.1} parent=1 // pred_region
      %2915 = vsyncadd [#allocation6], 0
      %s2916 = sshll.u32 [#allocation30], 4
      %s2917 = int_to_ptr.vmem [resolvable:$true] %s2916
      %s2918 = sshll.u32 %s22, 4
      %s2919 = int_to_ptr.hbm [resolvable:$true] %s2918
      %2924 = dma.vmem_to_hbm [thread:$0]  %s2917, 64, %s2919, [#allocation6], 32, 32, 2
    $region157: #{rnn_model_forward.1} parent=1 // pred_fallthru
      _
    // Predicated region
    $region158: #{rnn_model_forward.1} parent=1 // pred_check
      _
    $region159: #{rnn_model_forward.1} parent=1 // pred_check_branch
      %2926 = sbr.rel (0) target = $region161
    $region160: #{rnn_model_forward.1} parent=1 // pred_region
      %2928 = vsyncadd [#allocation32], 0
      %s2929 = sshll.u32 [#allocation31], 4
      %s2930 = int_to_ptr.vmem [resolvable:$true] %s2929
      %s2931 = sshll.u32 %s23, 4
      %s2932 = int_to_ptr.hbm [resolvable:$true] %s2931
      %2937 = dma.vmem_to_hbm [thread:$0]  %s2930, 64, %s2932, [#allocation32], 32, 32, 2
    $region161: #{rnn_model_forward.1} parent=1 // pred_fallthru
      _
    // Predicated region
    $region162: #{rnn_model_forward.1} parent=1 // pred_check
      _
    $region163: #{rnn_model_forward.1} parent=1 // pred_check_branch
      %2939 = sbr.rel (0) target = $region165
    $region164: #{rnn_model_forward.1} parent=1 // pred_region
      %2941 = vsyncadd [#allocation32], 0
      %s2942 = sshll.u32 [#allocation33], 4
      %s2943 = int_to_ptr.vmem [resolvable:$true] %s2942
      %s2944 = sshll.u32 %s24, 4
      %s2945 = int_to_ptr.hbm [resolvable:$true] %s2944
      %2950 = dma.vmem_to_hbm [thread:$0]  %s2943, 64, %s2945, [#allocation32], 32, 32, 2
    $region165: #{rnn_model_forward.1} parent=1 // pred_fallthru
      _
    // Predicated region
    $region166: #{rnn_model_forward.1} parent=1 // pred_check
      _
    $region167: #{rnn_model_forward.1} parent=1 // pred_check_branch
      %2952 = sbr.rel (0) target = $region169
    $region168: #{rnn_model_forward.1} parent=1 // pred_region
      %2954 = vsyncadd [#allocation35], 0
      %s2955 = sshll.u32 [#allocation34], 4
      %s2956 = int_to_ptr.vmem [resolvable:$true] %s2955
      %s2957 = sshll.u32 %s25, 4
      %s2958 = int_to_ptr.hbm [resolvable:$true] %s2957
      %2963 = dma.vmem_to_hbm [thread:$0]  %s2956, 64, %s2958, [#allocation35], 32, 32, 2
    $region169: #{rnn_model_forward.1} parent=1 // pred_fallthru
      _
    // Predicated region
    $region170: #{rnn_model_forward.1} parent=1 // pred_check
      _
    $region171: #{rnn_model_forward.1} parent=1 // pred_check_branch
      %2965 = sbr.rel (0) target = $region173
    $region172: #{rnn_model_forward.1} parent=1 // pred_region
      _
    $region173: #{rnn_model_forward.1} parent=1 // pred_fallthru
      _
    // Predicated region
    $region174: #{rnn_model_forward.1} parent=1 // pred_check
      _
    $region175: #{rnn_model_forward.1} parent=1 // pred_check_branch
      %2967 = sbr.rel (0) target = $region177
    $region176: #{rnn_model_forward.1} parent=1 // pred_region
      %2969 = dma.done [#allocation6], 64
    $region177: #{rnn_model_forward.1} parent=1 // pred_fallthru
      _
    // Predicated region
    $region178: #{rnn_model_forward.1} parent=1 // pred_check
      _
    $region179: #{rnn_model_forward.1} parent=1 // pred_check_branch
      %2971 = sbr.rel (0) target = $region181
    $region180: #{rnn_model_forward.1} parent=1 // pred_region
      %2973 = dma.done [#allocation32], 64
    $region181: #{rnn_model_forward.1} parent=1 // pred_fallthru
      _
    // Predicated region
    $region182: #{rnn_model_forward.1} parent=1 // pred_check
      _
    $region183: #{rnn_model_forward.1} parent=1 // pred_check_branch
      %2975 = sbr.rel (0) target = $region185
    $region184: #{rnn_model_forward.1} parent=1 // pred_region
      %2977 = dma.done [#allocation32], 64
    $region185: #{rnn_model_forward.1} parent=1 // pred_fallthru
      _
    // Predicated region
    $region186: #{rnn_model_forward.1} parent=1 // pred_check
      _
    $region187: #{rnn_model_forward.1} parent=1 // pred_check_branch
      %2979 = sbr.rel (0) target = $region189
    $region188: #{rnn_model_forward.1} parent=1 // pred_region
      %2981 = dma.done [#allocation35], 64
    $region189: #{rnn_model_forward.1} parent=1 // pred_fallthru
      _
    %2982 = vsyncpa [#allocation5], 1
    %2983 = vsyncpa [#allocation8], 1
    %2984 = vsyncpa [#allocation11], 1
    %2985 = vsyncpa [#allocation14], 1
    %2986 = vsyncpa [#allocation17], 1
    %2987 = vsyncpa [#allocation20], 1
    %2988 = vsyncpa [#allocation23], 1
    %2989 = vsyncpa [#allocation26], 1
    %2990 = vsyncpa [#allocation29], 1
    %2991 = vsyncpa [#allocation6], 1
    %2992 = vsyncpa [#allocation32], 1
    %2993 = vsyncpa [#allocation35], 1

</llo_original>
